<compile_context>
chip_gen: v7x
topology: tpu7x:2x2x1
jax: 0.10.0
libtpu: 0.0.40
codegen_flags: <defaults>
</compile_context>

<pallas_src>
import functools

import jax
import jax.numpy as jnp
from jax.experimental import pallas as pl
from jax.experimental.pallas import tpu as pltpu

# True (PyTorch) layer sizes and the lane-padded sizes used on-chip.
LS = [28 * 28, 64, 64, 64, 10]
IN_DIM = LS[0]          # 784 (full-array block dim, no padding needed)
HID = 128               # hidden 64 -> padded to 128 lanes
OUT_PAD = 128           # logits 10 -> padded to 128 lanes
NUM_CLASSES = LS[4]     # 10


def mlp_kernel(x_ref, w1_ref, b1_ref, w2_ref, b2_ref, w3_ref, b3_ref,
               w4_ref, b4_ref, o_ref):
    # Cast f32 input to bf16 in-kernel (VPU cast is free in this mem-bound
    # regime; avoids a full extra HBM pass in the wrapper).
    x = x_ref[...].astype(jnp.bfloat16)
    # fc1 + relu  (bf16 operands, f32 accumulation on the MXU)
    h = jnp.dot(x, w1_ref[...], preferred_element_type=jnp.float32)
    h = jnp.maximum(h + b1_ref[...], 0.0).astype(jnp.bfloat16)
    # fc2 + relu
    h = jnp.dot(h, w2_ref[...], preferred_element_type=jnp.float32)
    h = jnp.maximum(h + b2_ref[...], 0.0).astype(jnp.bfloat16)
    # fc3 + relu
    h = jnp.dot(h, w3_ref[...], preferred_element_type=jnp.float32)
    h = jnp.maximum(h + b3_ref[...], 0.0).astype(jnp.bfloat16)
    # fc4 (no activation); logits padded to 128 lanes, only first 10 are real.
    logits = jnp.dot(h, w4_ref[...], preferred_element_type=jnp.float32)
    logits = logits + b4_ref[...]

    # log_softmax over the 10 real classes only (mask the padded lanes).
    col = jax.lax.broadcasted_iota(jnp.int32, logits.shape, 1)
    valid = col < NUM_CLASSES
    masked = jnp.where(valid, logits, jnp.float32(-1e30))
    m = jnp.max(masked, axis=1, keepdims=True)            # XLU reduction
    shifted = masked - m
    lse = jnp.log(jnp.sum(jnp.exp(shifted), axis=1, keepdims=True))  # EUP
    out = shifted - lse
    o_ref[...] = jnp.where(valid, out, 0.0).astype(o_ref.dtype)


def _round8(n):
    return max(8, (int(n) + 7) // 8 * 8)


@functools.partial(jax.jit, static_argnames=("batch_tile",))
def net_forward(x, params, *, batch_tile=2048):
    """x: (B, 784) float (f32 or bf16). params: padded bf16 weights w1..w4,
    f32 biases b1..b4.  Returns (B, 10) f32 log-probabilities."""
    B = x.shape[0]

    # Large tiles amortize per-grid-step overhead; keep a multiple of 8,
    # cap at 4096 rows, and ensure >= 2 grid steps so v7x's two TensorCores
    # both get work on the "parallel" batch axis.
    tile = _round8(min(max(int(batch_tile), 8), 4096))
    tile = min(tile, _round8(pl.cdiv(B, 2)))
    n_tiles = pl.cdiv(B, tile)

    w1, b1 = params["w1"], params["b1"]
    w2, b2 = params["w2"], params["b2"]
    w3, b3 = params["w3"], params["b3"]
    w4, b4 = params["w4"], params["b4"]

    # Explicit scoped-VMEM budget: double-buffered x + out tiles, resident
    # weights, plus headroom.  Floor at 32 MiB (raises v5e's 16 MiB default),
    # cap at 56 MiB (stays under v7x's 64 MiB physical VMEM).
    x_tile_bytes = tile * IN_DIM * jnp.dtype(x.dtype).itemsize
    out_tile_bytes = tile * OUT_PAD * 4
    w_bytes = 2 * 2 * (IN_DIM * HID + 2 * HID * HID + HID * OUT_PAD)
    vmem_limit = int(2 * x_tile_bytes + 2 * out_tile_bytes + w_bytes) + (8 << 20)
    vmem_limit = max(32 << 20, min(vmem_limit, 56 << 20))

    # Weights / biases: whole-array blocks, constant index_map (VMEM resident).
    full = lambda shape: pl.BlockSpec(shape, lambda i: (0, 0))

    out = pl.pallas_call(
        mlp_kernel,
        out_shape=jax.ShapeDtypeStruct((B, OUT_PAD), jnp.float32),
        grid_spec=pltpu.PrefetchScalarGridSpec(
            num_scalar_prefetch=0,
            grid=(n_tiles,),
            in_specs=[
                pl.BlockSpec((tile, IN_DIM), lambda i: (i, 0)),  # x tile
                full(w1.shape), full(b1.shape),
                full(w2.shape), full(b2.shape),
                full(w3.shape), full(b3.shape),
                full(w4.shape), full(b4.shape),
            ],
            out_specs=pl.BlockSpec((tile, OUT_PAD), lambda i: (i, 0)),
        ),
        compiler_params=pltpu.CompilerParams(
            dimension_semantics=("parallel",),
            vmem_limit_bytes=vmem_limit),
    )(x, w1, b1, w2, b2, w3, b3, w4, b4)

    # Only the class-dim slice remains (lane-dense 128-wide store in-kernel).
    return out[:, :NUM_CLASSES]


def init_params(key):
    """nn.Linear-style uniform(-1/sqrt(in), 1/sqrt(in)) init, then pad to the
    lane-dense on-chip shapes and cast weights to bf16 (biases stay f32)."""
    true_in = [IN_DIM, LS[1], LS[2], LS[3]]
    true_out = [LS[1], LS[2], LS[3], LS[4]]
    pad_in = [IN_DIM, HID, HID, HID]
    pad_out = [HID, HID, HID, OUT_PAD]

    params = {}
    for idx in range(4):
        fi, fo = true_in[idx], true_out[idx]
        key, kw, kb = jax.random.split(key, 3)
        bound = 1.0 / jnp.sqrt(jnp.float32(fi))
        w = jax.random.uniform(kw, (fi, fo), jnp.float32, -bound, bound)
        b = jax.random.uniform(kb, (1, fo), jnp.float32, -bound, bound)
        # Zero-pad to lane-dense shapes; padded rows/cols contribute nothing.
        w = jnp.pad(w, ((0, pad_in[idx] - fi), (0, pad_out[idx] - fo)))
        b = jnp.pad(b, ((0, 0), (0, pad_out[idx] - fo)))
        params[f"w{idx + 1}"] = w.astype(jnp.bfloat16)
        params[f"b{idx + 1}"] = b.astype(jnp.float32)
    return params


def reference_forward(x, params):
    """Pure-JAX reference with the same bf16/f32 numerics as the kernel."""
    h = x.astype(jnp.bfloat16)
    for idx in (1, 2, 3):
        h = jnp.dot(h, params[f"w{idx}"], preferred_element_type=jnp.float32)
        h = jnp.maximum(h + params[f"b{idx}"], 0.0).astype(jnp.bfloat16)
    logits = jnp.dot(h, params["w4"], preferred_element_type=jnp.float32)
    logits = logits + params["b4"]
    return jax.nn.log_softmax(logits[:, :NUM_CLASSES], axis=1)


if __name__ == "__main__":
    key = jax.random.PRNGKey(0)
    kp, kx = jax.random.split(key)
    params = init_params(kp)

    # B deliberately NOT a tile multiple: exercises the no-padding cdiv grid
    # (masked final partial block) and still gives a 2-step grid so both v7x
    # TensorCores are exercised by the "parallel" batch axis.
    B = 500
    x = jax.random.normal(kx, (B, IN_DIM), jnp.float32)

    out = net_forward(x, params)
    out = jax.block_until_ready(out)

    ref = reference_forward(x, params)
    assert out.shape == (B, NUM_CLASSES)
    assert jnp.all(jnp.isfinite(out)), "non-finite output"
    assert jnp.allclose(out, ref, atol=1e-3, rtol=1e-3), "mismatch vs reference"
    print("KERNEL_OK")
</pallas_src>

<mosaic_0001>
module attributes {stable_mosaic.version = 11 : i64} {
  func.func @mlp_kernel(%arg0: i32, %arg1: memref<256x784xf32, #tpu.memory_space<vmem>>, %arg2: memref<784x128xbf16, #tpu.memory_space<vmem>>, %arg3: memref<1x128xf32, #tpu.memory_space<vmem>>, %arg4: memref<128x128xbf16, #tpu.memory_space<vmem>>, %arg5: memref<1x128xf32, #tpu.memory_space<vmem>>, %arg6: memref<128x128xbf16, #tpu.memory_space<vmem>>, %arg7: memref<1x128xf32, #tpu.memory_space<vmem>>, %arg8: memref<128x128xbf16, #tpu.memory_space<vmem>>, %arg9: memref<1x128xf32, #tpu.memory_space<vmem>>, %arg10: memref<256x128xf32, #tpu.memory_space<vmem>>) attributes {dimension_semantics = [#tpu.dimension_semantics<parallel>], iteration_bounds = array<i64: 2>, scalar_prefetch = 0 : i64, scratch_operands = 0 : i64, tpu.core_type = #tpu.core_type<tc>, window_params = [{transform_indices = @transform_0, window_bounds = array<i64: 256, 784>}, {pipeline_mode = #tpu.pipeline_mode<synchronous>, transform_indices = @transform_1, window_bounds = array<i64: 784, 128>}, {pipeline_mode = #tpu.pipeline_mode<synchronous>, transform_indices = @transform_2, window_bounds = array<i64: 1, 128>}, {pipeline_mode = #tpu.pipeline_mode<synchronous>, transform_indices = @transform_3, window_bounds = array<i64: 128, 128>}, {pipeline_mode = #tpu.pipeline_mode<synchronous>, transform_indices = @transform_4, window_bounds = array<i64: 1, 128>}, {pipeline_mode = #tpu.pipeline_mode<synchronous>, transform_indices = @transform_5, window_bounds = array<i64: 128, 128>}, {pipeline_mode = #tpu.pipeline_mode<synchronous>, transform_indices = @transform_6, window_bounds = array<i64: 1, 128>}, {pipeline_mode = #tpu.pipeline_mode<synchronous>, transform_indices = @transform_7, window_bounds = array<i64: 128, 128>}, {pipeline_mode = #tpu.pipeline_mode<synchronous>, transform_indices = @transform_8, window_bounds = array<i64: 1, 128>}, {transform_indices = @transform_9, window_bounds = array<i64: 256, 128>}]} {
    %c0 = arith.constant 0 : index
    %c0_0 = arith.constant 0 : index
    %0 = vector.load %arg1[%c0, %c0_0] : memref<256x784xf32, #tpu.memory_space<vmem>>, vector<256x784xf32>
    %1 = arith.truncf %0 : vector<256x784xf32> to vector<256x784xbf16>
    %c0_1 = arith.constant 0 : index
    %c0_2 = arith.constant 0 : index
    %2 = vector.load %arg2[%c0_1, %c0_2] : memref<784x128xbf16, #tpu.memory_space<vmem>>, vector<784x128xbf16>
    %cst = arith.constant dense<0.000000e+00> : vector<256x128xf32>
    %3 = tpu.matmul %1, %2, %cst {dimension_numbers = #tpu.dot_dimension_numbers<[1], [0], [0], [1], [0, 0, 1, 1], [], []>} : vector<256x784xbf16>, vector<784x128xbf16>, vector<256x128xf32> -> vector<256x128xf32>
    %c0_3 = arith.constant 0 : index
    %c0_4 = arith.constant 0 : index
    %4 = vector.load %arg3[%c0_3, %c0_4] : memref<1x128xf32, #tpu.memory_space<vmem>>, vector<1x128xf32>
    %5 = vector.broadcast %4 : vector<1x128xf32> to vector<256x128xf32>
    %6 = arith.addf %3, %5 : vector<256x128xf32>
    %cst_5 = arith.constant 0.000000e+00 : f32
    %7 = vector.broadcast %cst_5 : f32 to vector<256x128xf32>
    %8 = arith.maximumf %6, %7 : vector<256x128xf32>
    %9 = arith.truncf %8 : vector<256x128xf32> to vector<256x128xbf16>
    %c0_6 = arith.constant 0 : index
    %c0_7 = arith.constant 0 : index
    %10 = vector.load %arg4[%c0_6, %c0_7] : memref<128x128xbf16, #tpu.memory_space<vmem>>, vector<128x128xbf16>
    %cst_8 = arith.constant dense<0.000000e+00> : vector<256x128xf32>
    %11 = tpu.matmul %9, %10, %cst_8 {dimension_numbers = #tpu.dot_dimension_numbers<[1], [0], [0], [1], [0, 0, 1, 1], [], []>} : vector<256x128xbf16>, vector<128x128xbf16>, vector<256x128xf32> -> vector<256x128xf32>
    %c0_9 = arith.constant 0 : index
    %c0_10 = arith.constant 0 : index
    %12 = vector.load %arg5[%c0_9, %c0_10] : memref<1x128xf32, #tpu.memory_space<vmem>>, vector<1x128xf32>
    %13 = vector.broadcast %12 : vector<1x128xf32> to vector<256x128xf32>
    %14 = arith.addf %11, %13 : vector<256x128xf32>
    %cst_11 = arith.constant 0.000000e+00 : f32
    %15 = vector.broadcast %cst_11 : f32 to vector<256x128xf32>
    %16 = arith.maximumf %14, %15 : vector<256x128xf32>
    %17 = arith.truncf %16 : vector<256x128xf32> to vector<256x128xbf16>
    %c0_12 = arith.constant 0 : index
    %c0_13 = arith.constant 0 : index
    %18 = vector.load %arg6[%c0_12, %c0_13] : memref<128x128xbf16, #tpu.memory_space<vmem>>, vector<128x128xbf16>
    %cst_14 = arith.constant dense<0.000000e+00> : vector<256x128xf32>
    %19 = tpu.matmul %17, %18, %cst_14 {dimension_numbers = #tpu.dot_dimension_numbers<[1], [0], [0], [1], [0, 0, 1, 1], [], []>} : vector<256x128xbf16>, vector<128x128xbf16>, vector<256x128xf32> -> vector<256x128xf32>
    %c0_15 = arith.constant 0 : index
    %c0_16 = arith.constant 0 : index
    %20 = vector.load %arg7[%c0_15, %c0_16] : memref<1x128xf32, #tpu.memory_space<vmem>>, vector<1x128xf32>
    %21 = vector.broadcast %20 : vector<1x128xf32> to vector<256x128xf32>
    %22 = arith.addf %19, %21 : vector<256x128xf32>
    %cst_17 = arith.constant 0.000000e+00 : f32
    %23 = vector.broadcast %cst_17 : f32 to vector<256x128xf32>
    %24 = arith.maximumf %22, %23 : vector<256x128xf32>
    %25 = arith.truncf %24 : vector<256x128xf32> to vector<256x128xbf16>
    %c0_18 = arith.constant 0 : index
    %c0_19 = arith.constant 0 : index
    %26 = vector.load %arg8[%c0_18, %c0_19] : memref<128x128xbf16, #tpu.memory_space<vmem>>, vector<128x128xbf16>
    %cst_20 = arith.constant dense<0.000000e+00> : vector<256x128xf32>
    %27 = tpu.matmul %25, %26, %cst_20 {dimension_numbers = #tpu.dot_dimension_numbers<[1], [0], [0], [1], [0, 0, 1, 1], [], []>} : vector<256x128xbf16>, vector<128x128xbf16>, vector<256x128xf32> -> vector<256x128xf32>
    %c0_21 = arith.constant 0 : index
    %c0_22 = arith.constant 0 : index
    %28 = vector.load %arg9[%c0_21, %c0_22] : memref<1x128xf32, #tpu.memory_space<vmem>>, vector<1x128xf32>
    %29 = vector.broadcast %28 : vector<1x128xf32> to vector<256x128xf32>
    %30 = arith.addf %27, %29 : vector<256x128xf32>
    %31 = tpu.iota {dimensions = array<i32: 1>} : vector<256x128xi32>
    %c10_i32 = arith.constant 10 : i32
    %32 = vector.broadcast %c10_i32 : i32 to vector<256x128xi32>
    %33 = arith.cmpi slt, %31, %32 : vector<256x128xi32>
    %cst_23 = arith.constant -1.000000e+30 : f32
    %34 = vector.broadcast %cst_23 : f32 to vector<256x128xf32>
    %35 = arith.select %33, %30, %34 : vector<256x128xi1>, vector<256x128xf32>
    %cst_24 = arith.constant dense<0xFF800000> : vector<256xf32>
    %36 = vector.multi_reduction <maximumf>, %35, %cst_24 [1] : vector<256x128xf32> to vector<256xf32>
    %37 = vector.shape_cast %36 : vector<256xf32> to vector<256x1xf32>
    %38 = vector.broadcast %37 : vector<256x1xf32> to vector<256x128xf32>
    %39 = arith.subf %35, %38 : vector<256x128xf32>
    %40 = math.exp %39 : vector<256x128xf32>
    %cst_25 = arith.constant dense<0.000000e+00> : vector<256xf32>
    %41 = vector.multi_reduction <add>, %40, %cst_25 [1] : vector<256x128xf32> to vector<256xf32>
    %42 = vector.shape_cast %41 : vector<256xf32> to vector<256x1xf32>
    %43 = math.log %42 : vector<256x1xf32>
    %44 = vector.broadcast %43 : vector<256x1xf32> to vector<256x128xf32>
    %45 = arith.subf %39, %44 : vector<256x128xf32>
    %cst_26 = arith.constant 0.000000e+00 : f32
    %46 = vector.broadcast %cst_26 : f32 to vector<256x128xf32>
    %47 = arith.select %33, %45, %46 : vector<256x128xi1>, vector<256x128xf32>
    %c0_27 = arith.constant 0 : index
    %c0_28 = arith.constant 0 : index
    %48 = vector.load %arg10[%c0_27, %c0_28] : memref<256x128xf32, #tpu.memory_space<vmem>>, vector<256x128xf32>
    tpu.vector_store %arg10[%c0_27, %c0_28], %47 {strides = array<i32>} : memref<256x128xf32, #tpu.memory_space<vmem>>, vector<256x128xf32>,
    return
  }
  func.func @transform_0(%arg0: i32) -> (i32, i32) {
    %c0_i32 = arith.constant 0 : i32
    %c0_i32_0 = arith.constant 0 : i32
    return %arg0, %c0_i32 : i32, i32
  }
  func.func @transform_1(%arg0: i32) -> (i32, i32) {
    %c0_i32 = arith.constant 0 : i32
    %c0_i32_0 = arith.constant 0 : i32
    %c0_i32_1 = arith.constant 0 : i32
    return %c0_i32, %c0_i32_0 : i32, i32
  }
  func.func @transform_2(%arg0: i32) -> (i32, i32) {
    %c0_i32 = arith.constant 0 : i32
    %c0_i32_0 = arith.constant 0 : i32
    %c0_i32_1 = arith.constant 0 : i32
    return %c0_i32, %c0_i32_0 : i32, i32
  }
  func.func @transform_3(%arg0: i32) -> (i32, i32) {
    %c0_i32 = arith.constant 0 : i32
    %c0_i32_0 = arith.constant 0 : i32
    %c0_i32_1 = arith.constant 0 : i32
    return %c0_i32, %c0_i32_0 : i32, i32
  }
  func.func @transform_4(%arg0: i32) -> (i32, i32) {
    %c0_i32 = arith.constant 0 : i32
    %c0_i32_0 = arith.constant 0 : i32
    %c0_i32_1 = arith.constant 0 : i32
    return %c0_i32, %c0_i32_0 : i32, i32
  }
  func.func @transform_5(%arg0: i32) -> (i32, i32) {
    %c0_i32 = arith.constant 0 : i32
    %c0_i32_0 = arith.constant 0 : i32
    %c0_i32_1 = arith.constant 0 : i32
    return %c0_i32, %c0_i32_0 : i32, i32
  }
  func.func @transform_6(%arg0: i32) -> (i32, i32) {
    %c0_i32 = arith.constant 0 : i32
    %c0_i32_0 = arith.constant 0 : i32
    %c0_i32_1 = arith.constant 0 : i32
    return %c0_i32, %c0_i32_0 : i32, i32
  }
  func.func @transform_7(%arg0: i32) -> (i32, i32) {
    %c0_i32 = arith.constant 0 : i32
    %c0_i32_0 = arith.constant 0 : i32
    %c0_i32_1 = arith.constant 0 : i32
    return %c0_i32, %c0_i32_0 : i32, i32
  }
  func.func @transform_8(%arg0: i32) -> (i32, i32) {
    %c0_i32 = arith.constant 0 : i32
    %c0_i32_0 = arith.constant 0 : i32
    %c0_i32_1 = arith.constant 0 : i32
    return %c0_i32, %c0_i32_0 : i32, i32
  }
  func.func @transform_9(%arg0: i32) -> (i32, i32) {
    %c0_i32 = arith.constant 0 : i32
    %c0_i32_0 = arith.constant 0 : i32
    return %arg0, %c0_i32 : i32, i32
  }
}

</mosaic_0001>

<llo_original>
// kernel: net_forward.1
$region0: #{net_forward.1}
  #allocation0 [shape = 'u32[]', space=smem, size = 0x4, offset = 0x4, fixed_abs, tag = 'smem constant byte address 0x4 - core index']
  #allocation1 [shape = 'u32[144,128]{1,0:T(1,128)}', space=vmem, size = 0x12000, scoped, tag = 'internal scratch']
  %s0 = inlined_call_operand.vmem [shape: f32[500,784], index: 0, kind: input, shape index: {}]
  %s1 = inlined_call_operand.vmem [shape: bf16[784,128], index: 1, kind: input, shape index: {}]
  %s2 = inlined_call_operand.vmem [shape: f32[1,128], index: 2, kind: input, shape index: {}]
  %s3 = inlined_call_operand.vmem [shape: bf16[128,128], index: 3, kind: input, shape index: {}]
  %s4 = inlined_call_operand.vmem [shape: f32[1,128], index: 4, kind: input, shape index: {}]
  %s5 = inlined_call_operand.vmem [shape: bf16[128,128], index: 5, kind: input, shape index: {}]
  %s6 = inlined_call_operand.vmem [shape: f32[1,128], index: 6, kind: input, shape index: {}]
  %s7 = inlined_call_operand.vmem [shape: bf16[128,128], index: 7, kind: input, shape index: {}]
  %s8 = inlined_call_operand.vmem [shape: f32[1,128], index: 8, kind: input, shape index: {}]
  %s9 = inlined_call_operand.vmem [shape: f32[500,128], index: 9, kind: output, shape index: {}]
  %s10 = sld [smem:[#allocation0]]
  $region117: #{net_forward.1} parent=0
    _
  %s12 = ssub.s32 1, %s10
  %s13 = scalar_select 0, %s12, %s10
  $region1: #{net_forward.1} parent=0
    #allocation2 [shape = 'u8[262144]{0}', space=vmem, size = 0x40000, scoped, tag = 'output window, operand 0']
    loop: start=0, step=1, limit=4
    $region2: #{net_forward.1} parent=1 // loop_pre_header
      _
    $region3: #{net_forward.1} parent=1 // loop_header
      %s15 = sphi 0, %s19
      %p16 = scmp.ge.s32.totalorder %s15, 4
      %s25 = sphi 0, %s27
      %s28 = sphi 0, %s25
      %s29 = sphi 0, %s28
      %s45 = sphi 0, %s29
      %s49 = sphi 0, %s49
      %s51 = sphi 0, %s49
      %s52 = sphi 0, %s51
      %s66 = sphi 0, %s52
      %s70 = sphi 0, %s70
      %s72 = sphi 0, %s70
      %s73 = sphi 0, %s72
      %s87 = sphi 0, %s73
      %s91 = sphi 0, %s91
      %s93 = sphi 0, %s91
      %s94 = sphi 0, %s93
      %s108 = sphi 0, %s94
      %s112 = sphi 0, %s112
      %s114 = sphi 0, %s112
      %s115 = sphi 0, %s114
      %s129 = sphi 0, %s115
      %s133 = sphi 0, %s133
      %s135 = sphi 0, %s133
      %s136 = sphi 0, %s135
      %s150 = sphi 0, %s136
      %s154 = sphi 0, %s154
      %s156 = sphi 0, %s154
      %s157 = sphi 0, %s156
      %s171 = sphi 0, %s157
      %s175 = sphi 0, %s175
      %s177 = sphi 0, %s175
      %s178 = sphi 0, %s177
      %s192 = sphi 0, %s178
      %s196 = sphi 0, %s196
      %s198 = sphi 0, %s196
      %s199 = sphi 0, %s198
      %s213 = sphi 0, %s199
      %s219 = sphi 0, %s221
      %s222 = sphi 0, %s219
      %s223 = sphi 0, %s222
      %s239 = sphi 0, %s223
    $region4: #{net_forward.1} parent=1 // loop_header_branch
      %18 = sbr.rel (%p16) target = $region8
    $region5: #{net_forward.1} parent=1 // loop_body
      %s20 = ssub.s32 %s15, 1
      %s21 = ssub.s32 %s15, 2
      %s22 = sadd.s32 %s15, 1
      %s23 = ssub.s32 %s15, %s22
      %p24 = scmp.eq.s32.totalorder %s23, 0
      %s26 = sadd.s32 %s25, 1
      %s27 = scalar_select %p24, %s25, %s26
      %p30 = pneg %p24
      %p31 = scmp.eq.s32.totalorder %s15, 1
      %p32 = por %p30, %p31
      %p33 = scmp.ne.s32.totalorder %s25, %s28
      %p34 = scmp.eq.s32.totalorder %s15, 0
      %p35 = por %p33, %p34
      %p36 = scmp.ne.s32.totalorder %s25, %s28
      %p37 = scmp.eq.s32.totalorder %s20, 1
      %p38 = por %p36, %p37
      %p39 = scmp.ne.s32.totalorder %s28, %s29
      %p40 = scmp.eq.s32.totalorder %s20, 0
      %p41 = por %p39, %p40
      %p42 = scmp.ne.s32.totalorder %s28, %s29
      %p43 = scmp.eq.s32.totalorder %s21, 1
      %p44 = por %p42, %p43
      %p46 = scmp.ne.s32.totalorder %s29, %s45
      %p47 = scmp.eq.s32.totalorder %s21, 0
      %p48 = por %p46, %p47
      %s50 = sadd.s32 %s49, 1
      %p53 = scmp.eq.s32.totalorder %s15, 1
      %p54 = scmp.ne.s32.totalorder %s49, %s51
      %p55 = scmp.eq.s32.totalorder %s15, 0
      %p56 = por %p54, %p55
      %p57 = scmp.ne.s32.totalorder %s49, %s51
      %p58 = scmp.eq.s32.totalorder %s20, 1
      %p59 = por %p57, %p58
      %p60 = scmp.ne.s32.totalorder %s51, %s52
      %p61 = scmp.eq.s32.totalorder %s20, 0
      %p62 = por %p60, %p61
      %p63 = scmp.ne.s32.totalorder %s51, %s52
      %p64 = scmp.eq.s32.totalorder %s21, 1
      %p65 = por %p63, %p64
      %p67 = scmp.ne.s32.totalorder %s52, %s66
      %p68 = scmp.eq.s32.totalorder %s21, 0
      %p69 = por %p67, %p68
      %s71 = sadd.s32 %s70, 1
      %p74 = scmp.eq.s32.totalorder %s15, 1
      %p75 = scmp.ne.s32.totalorder %s70, %s72
      %p76 = scmp.eq.s32.totalorder %s15, 0
      %p77 = por %p75, %p76
      %p78 = scmp.ne.s32.totalorder %s70, %s72
      %p79 = scmp.eq.s32.totalorder %s20, 1
      %p80 = por %p78, %p79
      %p81 = scmp.ne.s32.totalorder %s72, %s73
      %p82 = scmp.eq.s32.totalorder %s20, 0
      %p83 = por %p81, %p82
      %p84 = scmp.ne.s32.totalorder %s72, %s73
      %p85 = scmp.eq.s32.totalorder %s21, 1
      %p86 = por %p84, %p85
      %p88 = scmp.ne.s32.totalorder %s73, %s87
      %p89 = scmp.eq.s32.totalorder %s21, 0
      %p90 = por %p88, %p89
      %s92 = sadd.s32 %s91, 1
      %p95 = scmp.eq.s32.totalorder %s15, 1
      %p96 = scmp.ne.s32.totalorder %s91, %s93
      %p97 = scmp.eq.s32.totalorder %s15, 0
      %p98 = por %p96, %p97
      %p99 = scmp.ne.s32.totalorder %s91, %s93
      %p100 = scmp.eq.s32.totalorder %s20, 1
      %p101 = por %p99, %p100
      %p102 = scmp.ne.s32.totalorder %s93, %s94
      %p103 = scmp.eq.s32.totalorder %s20, 0
      %p104 = por %p102, %p103
      %p105 = scmp.ne.s32.totalorder %s93, %s94
      %p106 = scmp.eq.s32.totalorder %s21, 1
      %p107 = por %p105, %p106
      %p109 = scmp.ne.s32.totalorder %s94, %s108
      %p110 = scmp.eq.s32.totalorder %s21, 0
      %p111 = por %p109, %p110
      %s113 = sadd.s32 %s112, 1
      %p116 = scmp.eq.s32.totalorder %s15, 1
      %p117 = scmp.ne.s32.totalorder %s112, %s114
      %p118 = scmp.eq.s32.totalorder %s15, 0
      %p119 = por %p117, %p118
      %p120 = scmp.ne.s32.totalorder %s112, %s114
      %p121 = scmp.eq.s32.totalorder %s20, 1
      %p122 = por %p120, %p121
      %p123 = scmp.ne.s32.totalorder %s114, %s115
      %p124 = scmp.eq.s32.totalorder %s20, 0
      %p125 = por %p123, %p124
      %p126 = scmp.ne.s32.totalorder %s114, %s115
      %p127 = scmp.eq.s32.totalorder %s21, 1
      %p128 = por %p126, %p127
      %p130 = scmp.ne.s32.totalorder %s115, %s129
      %p131 = scmp.eq.s32.totalorder %s21, 0
      %p132 = por %p130, %p131
      %s134 = sadd.s32 %s133, 1
      %p137 = scmp.eq.s32.totalorder %s15, 1
      %p138 = scmp.ne.s32.totalorder %s133, %s135
      %p139 = scmp.eq.s32.totalorder %s15, 0
      %p140 = por %p138, %p139
      %p141 = scmp.ne.s32.totalorder %s133, %s135
      %p142 = scmp.eq.s32.totalorder %s20, 1
      %p143 = por %p141, %p142
      %p144 = scmp.ne.s32.totalorder %s135, %s136
      %p145 = scmp.eq.s32.totalorder %s20, 0
      %p146 = por %p144, %p145
      %p147 = scmp.ne.s32.totalorder %s135, %s136
      %p148 = scmp.eq.s32.totalorder %s21, 1
      %p149 = por %p147, %p148
      %p151 = scmp.ne.s32.totalorder %s136, %s150
      %p152 = scmp.eq.s32.totalorder %s21, 0
      %p153 = por %p151, %p152
      %s155 = sadd.s32 %s154, 1
      %p158 = scmp.eq.s32.totalorder %s15, 1
      %p159 = scmp.ne.s32.totalorder %s154, %s156
      %p160 = scmp.eq.s32.totalorder %s15, 0
      %p161 = por %p159, %p160
      %p162 = scmp.ne.s32.totalorder %s154, %s156
      %p163 = scmp.eq.s32.totalorder %s20, 1
      %p164 = por %p162, %p163
      %p165 = scmp.ne.s32.totalorder %s156, %s157
      %p166 = scmp.eq.s32.totalorder %s20, 0
      %p167 = por %p165, %p166
      %p168 = scmp.ne.s32.totalorder %s156, %s157
      %p169 = scmp.eq.s32.totalorder %s21, 1
      %p170 = por %p168, %p169
      %p172 = scmp.ne.s32.totalorder %s157, %s171
      %p173 = scmp.eq.s32.totalorder %s21, 0
      %p174 = por %p172, %p173
      %s176 = sadd.s32 %s175, 1
      %p179 = scmp.eq.s32.totalorder %s15, 1
      %p180 = scmp.ne.s32.totalorder %s175, %s177
      %p181 = scmp.eq.s32.totalorder %s15, 0
      %p182 = por %p180, %p181
      %p183 = scmp.ne.s32.totalorder %s175, %s177
      %p184 = scmp.eq.s32.totalorder %s20, 1
      %p185 = por %p183, %p184
      %p186 = scmp.ne.s32.totalorder %s177, %s178
      %p187 = scmp.eq.s32.totalorder %s20, 0
      %p188 = por %p186, %p187
      %p189 = scmp.ne.s32.totalorder %s177, %s178
      %p190 = scmp.eq.s32.totalorder %s21, 1
      %p191 = por %p189, %p190
      %p193 = scmp.ne.s32.totalorder %s178, %s192
      %p194 = scmp.eq.s32.totalorder %s21, 0
      %p195 = por %p193, %p194
      %s197 = sadd.s32 %s196, 1
      %p200 = scmp.eq.s32.totalorder %s15, 1
      %p201 = scmp.ne.s32.totalorder %s196, %s198
      %p202 = scmp.eq.s32.totalorder %s15, 0
      %p203 = por %p201, %p202
      %p204 = scmp.ne.s32.totalorder %s196, %s198
      %p205 = scmp.eq.s32.totalorder %s20, 1
      %p206 = por %p204, %p205
      %p207 = scmp.ne.s32.totalorder %s198, %s199
      %p208 = scmp.eq.s32.totalorder %s20, 0
      %p209 = por %p207, %p208
      %p210 = scmp.ne.s32.totalorder %s198, %s199
      %p211 = scmp.eq.s32.totalorder %s21, 1
      %p212 = por %p210, %p211
      %p214 = scmp.ne.s32.totalorder %s199, %s213
      %p215 = scmp.eq.s32.totalorder %s21, 0
      %p216 = por %p214, %p215
      %s217 = ssub.s32 %s15, %s22
      %p218 = scmp.eq.s32.totalorder %s217, 0
      %s220 = sadd.s32 %s219, 1
      %s221 = scalar_select %p218, %s219, %s220
      %p224 = pneg %p218
      %p225 = scmp.eq.s32.totalorder %s15, 1
      %p226 = por %p224, %p225
      %p227 = scmp.ne.s32.totalorder %s219, %s222
      %p228 = scmp.eq.s32.totalorder %s15, 0
      %p229 = por %p227, %p228
      %p230 = scmp.ne.s32.totalorder %s219, %s222
      %p231 = scmp.eq.s32.totalorder %s20, 1
      %p232 = por %p230, %p231
      %p233 = scmp.ne.s32.totalorder %s222, %s223
      %p234 = scmp.eq.s32.totalorder %s20, 0
      %p235 = por %p233, %p234
      %p236 = scmp.ne.s32.totalorder %s222, %s223
      %p237 = scmp.eq.s32.totalorder %s21, 1
      %p238 = por %p236, %p237
      %p240 = scmp.ne.s32.totalorder %s223, %s239
      %p241 = scmp.eq.s32.totalorder %s21, 0
      %p242 = por %p240, %p241
      %p243 = scmp.le.s32.totalorder 1, %s15
      %p244 = scmp.lt.s32.totalorder %s15, 3
      %p245 = pnand %p243, %p244
      %p246 = pneg %p245
      // Predicated region
      $region9: #{net_forward.1} parent=5 // pred_check
        _
      $region10: #{net_forward.1} parent=5 // pred_check_branch
        %248 = sbr.rel (%p245) target = $region12
      $region11: #{net_forward.1} parent=5 // pred_region
        %s249 = ssub.s32 %s15, 1
        // Predicated region
        $region13: #{net_forward.1} parent=11 // pred_check
          %p250 = pneg %p62
        $region14: #{net_forward.1} parent=11 // pred_check_branch
          %252 = sbr.rel (%p250) target = $region16
        $region15: #{net_forward.1} parent=11 // pred_region
          _
        $region16: #{net_forward.1} parent=11 // pred_fallthru
          _
        // Predicated region
        $region17: #{net_forward.1} parent=11 // pred_check
          %p253 = pneg %p83
        $region18: #{net_forward.1} parent=11 // pred_check_branch
          %255 = sbr.rel (%p253) target = $region20
        $region19: #{net_forward.1} parent=11 // pred_region
          _
        $region20: #{net_forward.1} parent=11 // pred_fallthru
          _
        // Predicated region
        $region21: #{net_forward.1} parent=11 // pred_check
          %p256 = pneg %p104
        $region22: #{net_forward.1} parent=11 // pred_check_branch
          %258 = sbr.rel (%p256) target = $region24
        $region23: #{net_forward.1} parent=11 // pred_region
          _
        $region24: #{net_forward.1} parent=11 // pred_fallthru
          _
        // Predicated region
        $region25: #{net_forward.1} parent=11 // pred_check
          %p259 = pneg %p125
        $region26: #{net_forward.1} parent=11 // pred_check_branch
          %261 = sbr.rel (%p259) target = $region28
        $region27: #{net_forward.1} parent=11 // pred_region
          _
        $region28: #{net_forward.1} parent=11 // pred_fallthru
          _
        // Predicated region
        $region29: #{net_forward.1} parent=11 // pred_check
          %p262 = pneg %p146
        $region30: #{net_forward.1} parent=11 // pred_check_branch
          %264 = sbr.rel (%p262) target = $region32
        $region31: #{net_forward.1} parent=11 // pred_region
          _
        $region32: #{net_forward.1} parent=11 // pred_fallthru
          _
        // Predicated region
        $region33: #{net_forward.1} parent=11 // pred_check
          %p265 = pneg %p167
        $region34: #{net_forward.1} parent=11 // pred_check_branch
          %267 = sbr.rel (%p265) target = $region36
        $region35: #{net_forward.1} parent=11 // pred_region
          _
        $region36: #{net_forward.1} parent=11 // pred_fallthru
          _
        // Predicated region
        $region37: #{net_forward.1} parent=11 // pred_check
          %p268 = pneg %p188
        $region38: #{net_forward.1} parent=11 // pred_check_branch
          %270 = sbr.rel (%p268) target = $region40
        $region39: #{net_forward.1} parent=11 // pred_region
          _
        $region40: #{net_forward.1} parent=11 // pred_fallthru
          _
        // Predicated region
        $region41: #{net_forward.1} parent=11 // pred_check
          %p271 = pneg %p209
        $region42: #{net_forward.1} parent=11 // pred_check_branch
          %273 = sbr.rel (%p271) target = $region44
        $region43: #{net_forward.1} parent=11 // pred_region
          _
        $region44: #{net_forward.1} parent=11 // pred_fallthru
          _
      $region12: #{net_forward.1} parent=5 // pred_fallthru
        _
      %p274 = scmp.lt.s32.totalorder %s15, 2
      // Predicated region
      $region45: #{net_forward.1} parent=5 // pred_check
        %p275 = pneg %p274
      $region46: #{net_forward.1} parent=5 // pred_check_branch
        %277 = sbr.rel (%p275) target = $region48
      $region47: #{net_forward.1} parent=5 // pred_region
        // Predicated region
        $region49: #{net_forward.1} parent=47 // pred_check
          %p278 = pneg %p35
        $region50: #{net_forward.1} parent=47 // pred_check_branch
          %280 = sbr.rel (%p278) target = $region52
        $region51: #{net_forward.1} parent=47 // pred_region
          %s281 = smul.u32 32, %s15
          %s282 = ssub.s32 63, %s281
          %p283 = scmp.lt.s32.totalorder %s282, 32
          %s284 = scalar_select %p283, %s282, 32
          %s285 = smul.u32 128, %s284
          %s286 = smul.u32 %s285, 7
          %p287 = scmp.lt.s32.totalorder %s281, 62
          %s288 = scalar_select %p287, %s281, 62
          %s289 = smul.addr %s288, 7
          %s290 = smul.addr %s289, 8
          %s291 = scalar_lea.vmem %s0, %s290
          %s292 = smul.u32 32, %s15
          %s293 = ssub.s32 63, %s292
          %p294 = scmp.lt.s32.totalorder %s293, 32
          %s295 = scalar_select %p294, %s293, 32
          %s296 = smul.u32 128, %s295
          %s297 = smul.u32 %s296, 7
        $region52: #{net_forward.1} parent=47 // pred_fallthru
          _
      $region48: #{net_forward.1} parent=5 // pred_fallthru
        _
      %p298 = scmp.le.s32.totalorder 1, %s15
      %p299 = scmp.lt.s32.totalorder %s15, 3
      %p300 = pnand %p298, %p299
      %p301 = pneg %p300
      // Predicated region
      $region53: #{net_forward.1} parent=5 // pred_check
        _
      $region54: #{net_forward.1} parent=5 // pred_check_branch
        %303 = sbr.rel (%p300) target = $region56
      $region55: #{net_forward.1} parent=5 // pred_region
        %s304 = ssub.s32 %s15, 1
        %s305 = smul.u32 32, %s20
        %s306 = ssub.s32 63, %s305
        %p307 = scmp.lt.s32.totalorder %s306, 32
        %s308 = scalar_select %p307, %s306, 32
        %s309 = smul.u32 128, %s308
        %s310 = smul.u32 %s309, 7
        %p311 = scmp.lt.s32.totalorder %s305, 62
        %s312 = scalar_select %p311, %s305, 62
        %s313 = smul.addr %s312, 7
        %s314 = smul.addr %s313, 8
        %s315 = scalar_lea.vmem %s0, %s314
        %p316 = pneg %p41
        %p317 = pneg %p38
        %p318 = pneg %p62
        %p319 = pneg %p59
        %p320 = pneg %p83
        %p321 = pneg %p80
        %p322 = pneg %p104
        %p323 = pneg %p101
        %p324 = pneg %p125
        %p325 = pneg %p122
        %p326 = pneg %p146
        %p327 = pneg %p143
        %p328 = pneg %p167
        %p329 = pneg %p164
        %p330 = pneg %p188
        %p331 = pneg %p185
        %p332 = pneg %p209
        %p333 = pneg %p206
        %p334 = pneg %p235
        %p335 = pneg %p232
        %s336 = sand.u32 %s222, 1
        %s337 = sand.u32 %s222, 1
        %s338 = smul.addr %s337, 256
        %s339 = scalar_lea.vmem [#allocation2], %s338
        %s340 = smul.u32 32, %s20
        %s341 = ssub.s32 63, %s340
        %p342 = scmp.lt.s32.totalorder %s341, 32
        %s343 = scalar_select %p342, %s341, 32
        %s344 = smul.u32 128, %s343
        %s345 = smul.u32 %s344, 7
        %p346 = scmp.lt.s32.totalorder %s340, 62
        %s347 = scalar_select %p346, %s340, 62
        %s348 = smul.addr %s347, 7
        %s349 = smul.addr %s348, 8
        %s350 = scalar_lea.vmem %s0, %s349
        %s351 = smul.u32 32, %s20
        %s352 = ssub.s32 63, %s351
        %p353 = scmp.lt.s32.totalorder %s352, 32
        %s354 = scalar_select %p353, %s352, 32
        %s355 = smul.u32 128, %s354
        %s356 = smul.u32 %s355, 7
        %s357 = smul.u32 32, %s20
        %s358 = ssub.s32 63, %s357
        %p359 = scmp.lt.s32.totalorder %s358, 32
        %s360 = scalar_select %p359, %s358, 32
        %s361 = smul.u32 128, %s360
        %v363 = vld [vmem:[%s350] sm:$0xff]
        %v364 = vld [vmem:[%s350 + $0x8] sm:$0xff]
        %v365 = vld [vmem:[%s350 + $0x10] sm:$0xff]
        %v366 = vld [vmem:[%s350 + $0x18] sm:$0xff]
        %v367 = vld [vmem:[%s350 + $0x20] sm:$0xff]
        %v368 = vld [vmem:[%s350 + $0x28] sm:$0xff]
        %v369 = vld [vmem:[%s350 + $0x30] sm:$0xff]
        %v370 = vld [vmem:[%s350 + $0x38] sm:$0xff]
        %v371 = vld [vmem:[%s350 + $0x40] sm:$0xff]
        %v372 = vld [vmem:[%s350 + $0x48] sm:$0xff]
        %v373 = vld [vmem:[%s350 + $0x50] sm:$0xff]
        %v374 = vld [vmem:[%s350 + $0x58] sm:$0xff]
        %v375 = vld [vmem:[%s350 + $0x60] sm:$0xff]
        %v376 = vld [vmem:[%s350 + $0x68] sm:$0xff]
        %v377 = vld [vmem:[%s350 + $0x70] sm:$0xff]
        %v378 = vld [vmem:[%s350 + $0x78] sm:$0xff]
        %v379 = vld [vmem:[%s350 + $0x80] sm:$0xff]
        %v380 = vld [vmem:[%s350 + $0x88] sm:$0xff]
        %v381 = vld [vmem:[%s350 + $0x90] sm:$0xff]
        %v382 = vld [vmem:[%s350 + $0x98] sm:$0xff]
        %v383 = vld [vmem:[%s350 + $0xa0] sm:$0xff]
        %v384 = vld [vmem:[%s350 + $0xa8] sm:$0xff]
        %v385 = vld [vmem:[%s350 + $0xb0] sm:$0xff]
        %v386 = vld [vmem:[%s350 + $0xb8] sm:$0xff]
        %v387 = vld [vmem:[%s350 + $0xc0] sm:$0xff]
        %v388 = vld [vmem:[%s350 + $0xc8] sm:$0xff]
        %v389 = vld [vmem:[%s350 + $0xd0] sm:$0xff]
        %v390 = vld [vmem:[%s350 + $0xd8] sm:$0xff]
        %v391 = vld [vmem:[%s350 + $0xe0] sm:$0xff]
        %v392 = vld [vmem:[%s350 + $0xe8] sm:$0xff]
        %v393 = vld [vmem:[%s350 + $0xf0] sm:$0xff]
        %v394 = vld [vmem:[%s350 + $0xf8] sm:$0xff]
        %v395 = vld [vmem:[%s350 + $0x100] sm:$0xff]
        %v396 = vld [vmem:[%s350 + $0x108] sm:$0xff]
        %v397 = vld [vmem:[%s350 + $0x110] sm:$0xff]
        %v398 = vld [vmem:[%s350 + $0x118] sm:$0xff]
        %v399 = vld [vmem:[%s350 + $0x120] sm:$0xff]
        %v400 = vld [vmem:[%s350 + $0x128] sm:$0xff]
        %v401 = vld [vmem:[%s350 + $0x130] sm:$0xff]
        %v402 = vld [vmem:[%s350 + $0x138] sm:$0xff]
        %v403 = vld [vmem:[%s350 + $0x140] sm:$0xff]
        %v404 = vld [vmem:[%s350 + $0x148] sm:$0xff]
        %v405 = vld [vmem:[%s350 + $0x150] sm:$0xff]
        %v406 = vld [vmem:[%s350 + $0x158] sm:$0xff]
        %v407 = vld [vmem:[%s350 + $0x160] sm:$0xff]
        %v408 = vld [vmem:[%s350 + $0x168] sm:$0xff]
        %v409 = vld [vmem:[%s350 + $0x170] sm:$0xff]
        %v410 = vld [vmem:[%s350 + $0x178] sm:$0xff]
        %v411 = vld [vmem:[%s350 + $0x180] sm:$0xff]
        %v412 = vld [vmem:[%s350 + $0x188] sm:$0xff]
        %v413 = vld [vmem:[%s350 + $0x190] sm:$0xff]
        %v414 = vld [vmem:[%s350 + $0x198] sm:$0xff]
        %v415 = vld [vmem:[%s350 + $0x1a0] sm:$0xff]
        %v416 = vld [vmem:[%s350 + $0x1a8] sm:$0xff]
        %v417 = vld [vmem:[%s350 + $0x1b0] sm:$0xff]
        %v418 = vld [vmem:[%s350 + $0x1b8] sm:$0xff]
        %v419 = vld [vmem:[%s350 + $0x1c0] sm:$0xff]
        %v420 = vld [vmem:[%s350 + $0x1c8] sm:$0xff]
        %v421 = vld [vmem:[%s350 + $0x1d0] sm:$0xff]
        %v422 = vld [vmem:[%s350 + $0x1d8] sm:$0xff]
        %v423 = vld [vmem:[%s350 + $0x1e0] sm:$0xff]
        %v424 = vld [vmem:[%s350 + $0x1e8] sm:$0xff]
        %v425 = vld [vmem:[%s350 + $0x1f0] sm:$0xff]
        %v426 = vld [vmem:[%s350 + $0x1f8] sm:$0xff]
        %v427 = vld [vmem:[%s350 + $0x200] sm:$0xff]
        %v428 = vld [vmem:[%s350 + $0x208] sm:$0xff]
        %v429 = vld [vmem:[%s350 + $0x210] sm:$0xff]
        %v430 = vld [vmem:[%s350 + $0x218] sm:$0xff]
        %v431 = vld [vmem:[%s350 + $0x220] sm:$0xff]
        %v432 = vld [vmem:[%s350 + $0x228] sm:$0xff]
        %v433 = vld [vmem:[%s350 + $0x230] sm:$0xff]
        %v434 = vld [vmem:[%s350 + $0x238] sm:$0xff]
        %v435 = vld [vmem:[%s350 + $0x240] sm:$0xff]
        %v436 = vld [vmem:[%s350 + $0x248] sm:$0xff]
        %v437 = vld [vmem:[%s350 + $0x250] sm:$0xff]
        %v438 = vld [vmem:[%s350 + $0x258] sm:$0xff]
        %v439 = vld [vmem:[%s350 + $0x260] sm:$0xff]
        %v440 = vld [vmem:[%s350 + $0x268] sm:$0xff]
        %v441 = vld [vmem:[%s350 + $0x270] sm:$0xff]
        %v442 = vld [vmem:[%s350 + $0x278] sm:$0xff]
        %v443 = vld [vmem:[%s350 + $0x280] sm:$0xff]
        %v444 = vld [vmem:[%s350 + $0x288] sm:$0xff]
        %v445 = vld [vmem:[%s350 + $0x290] sm:$0xff]
        %v446 = vld [vmem:[%s350 + $0x298] sm:$0xff]
        %v447 = vld [vmem:[%s350 + $0x2a0] sm:$0xff]
        %v448 = vld [vmem:[%s350 + $0x2a8] sm:$0xff]
        %v449 = vld [vmem:[%s350 + $0x2b0] sm:$0xff]
        %v450 = vld [vmem:[%s350 + $0x2b8] sm:$0xff]
        %v451 = vld [vmem:[%s350 + $0x2c0] sm:$0xff]
        %v452 = vld [vmem:[%s350 + $0x2c8] sm:$0xff]
        %v453 = vld [vmem:[%s350 + $0x2d0] sm:$0xff]
        %v454 = vld [vmem:[%s350 + $0x2d8] sm:$0xff]
        %v455 = vld [vmem:[%s350 + $0x2e0] sm:$0xff]
        %v456 = vld [vmem:[%s350 + $0x2e8] sm:$0xff]
        %v457 = vld [vmem:[%s350 + $0x2f0] sm:$0xff]
        %v458 = vld [vmem:[%s350 + $0x2f8] sm:$0xff]
        %v459 = vld [vmem:[%s350 + $0x300] sm:$0xff]
        %v460 = vld [vmem:[%s350 + $0x308] sm:$0xff]
        %v461 = vld [vmem:[%s350 + $0x310] sm:$0xff]
        %v462 = vld [vmem:[%s350 + $0x318] sm:$0xff]
        %v463 = vld [vmem:[%s350 + $0x320] sm:$0xff]
        %v464 = vld [vmem:[%s350 + $0x328] sm:$0xff]
        %v465 = vld [vmem:[%s350 + $0x330] sm:$0xff]
        %v466 = vld [vmem:[%s350 + $0x338] sm:$0xff]
        %v467 = vld [vmem:[%s350 + $0x340] sm:$0xff]
        %v468 = vld [vmem:[%s350 + $0x348] sm:$0xff]
        %v469 = vld [vmem:[%s350 + $0x350] sm:$0xff]
        %v470 = vld [vmem:[%s350 + $0x358] sm:$0xff]
        %v471 = vld [vmem:[%s350 + $0x360] sm:$0xff]
        %v472 = vld [vmem:[%s350 + $0x368] sm:$0xff]
        %v473 = vld [vmem:[%s350 + $0x370] sm:$0xff]
        %v474 = vld [vmem:[%s350 + $0x378] sm:$0xff]
        %v475 = vld [vmem:[%s350 + $0x380] sm:$0xff]
        %v476 = vld [vmem:[%s350 + $0x388] sm:$0xff]
        %v477 = vld [vmem:[%s350 + $0x390] sm:$0xff]
        %v478 = vld [vmem:[%s350 + $0x398] sm:$0xff]
        %v479 = vld [vmem:[%s350 + $0x3a0] sm:$0xff]
        %v480 = vld [vmem:[%s350 + $0x3a8] sm:$0xff]
        %v481 = vld [vmem:[%s350 + $0x3b0] sm:$0xff]
        %v482 = vld [vmem:[%s350 + $0x3b8] sm:$0xff]
        %v483 = vld [vmem:[%s350 + $0x3c0] sm:$0xff]
        %v484 = vld [vmem:[%s350 + $0x3c8] sm:$0xff]
        %v485 = vld [vmem:[%s350 + $0x3d0] sm:$0xff]
        %v486 = vld [vmem:[%s350 + $0x3d8] sm:$0xff]
        %v487 = vld [vmem:[%s350 + $0x3e0] sm:$0xff]
        %v488 = vld [vmem:[%s350 + $0x3e8] sm:$0xff]
        %v489 = vld [vmem:[%s350 + $0x3f0] sm:$0xff]
        %v490 = vld [vmem:[%s350 + $0x3f8] sm:$0xff]
        %v491 = vld [vmem:[%s350 + $0x400] sm:$0xff]
        %v492 = vld [vmem:[%s350 + $0x408] sm:$0xff]
        %v493 = vld [vmem:[%s350 + $0x410] sm:$0xff]
        %v494 = vld [vmem:[%s350 + $0x418] sm:$0xff]
        %v495 = vld [vmem:[%s350 + $0x420] sm:$0xff]
        %v496 = vld [vmem:[%s350 + $0x428] sm:$0xff]
        %v497 = vld [vmem:[%s350 + $0x430] sm:$0xff]
        %v498 = vld [vmem:[%s350 + $0x438] sm:$0xff]
        %v499 = vld [vmem:[%s350 + $0x440] sm:$0xff]
        %v500 = vld [vmem:[%s350 + $0x448] sm:$0xff]
        %v501 = vld [vmem:[%s350 + $0x450] sm:$0xff]
        %v502 = vld [vmem:[%s350 + $0x458] sm:$0xff]
        %v503 = vld [vmem:[%s350 + $0x460] sm:$0xff]
        %v504 = vld [vmem:[%s350 + $0x468] sm:$0xff]
        %v505 = vld [vmem:[%s350 + $0x470] sm:$0xff]
        %v506 = vld [vmem:[%s350 + $0x478] sm:$0xff]
        %v507 = vld [vmem:[%s350 + $0x480] sm:$0xff]
        %v508 = vld [vmem:[%s350 + $0x488] sm:$0xff]
        %v509 = vld [vmem:[%s350 + $0x490] sm:$0xff]
        %v510 = vld [vmem:[%s350 + $0x498] sm:$0xff]
        %v511 = vld [vmem:[%s350 + $0x4a0] sm:$0xff]
        %v512 = vld [vmem:[%s350 + $0x4a8] sm:$0xff]
        %v513 = vld [vmem:[%s350 + $0x4b0] sm:$0xff]
        %v514 = vld [vmem:[%s350 + $0x4b8] sm:$0xff]
        %v515 = vld [vmem:[%s350 + $0x4c0] sm:$0xff]
        %v516 = vld [vmem:[%s350 + $0x4c8] sm:$0xff]
        %v517 = vld [vmem:[%s350 + $0x4d0] sm:$0xff]
        %v518 = vld [vmem:[%s350 + $0x4d8] sm:$0xff]
        %v519 = vld [vmem:[%s350 + $0x4e0] sm:$0xff]
        %v520 = vld [vmem:[%s350 + $0x4e8] sm:$0xff]
        %v521 = vld [vmem:[%s350 + $0x4f0] sm:$0xff]
        %v522 = vld [vmem:[%s350 + $0x4f8] sm:$0xff]
        %v523 = vld [vmem:[%s350 + $0x500] sm:$0xff]
        %v524 = vld [vmem:[%s350 + $0x508] sm:$0xff]
        %v525 = vld [vmem:[%s350 + $0x510] sm:$0xff]
        %v526 = vld [vmem:[%s350 + $0x518] sm:$0xff]
        %v527 = vld [vmem:[%s350 + $0x520] sm:$0xff]
        %v528 = vld [vmem:[%s350 + $0x528] sm:$0xff]
        %v529 = vld [vmem:[%s350 + $0x530] sm:$0xff]
        %v530 = vld [vmem:[%s350 + $0x538] sm:$0xff]
        %v531 = vld [vmem:[%s350 + $0x540] sm:$0xff]
        %v532 = vld [vmem:[%s350 + $0x548] sm:$0xff]
        %v533 = vld [vmem:[%s350 + $0x550] sm:$0xff]
        %v534 = vld [vmem:[%s350 + $0x558] sm:$0xff]
        %v535 = vld [vmem:[%s350 + $0x560] sm:$0xff]
        %v536 = vld [vmem:[%s350 + $0x568] sm:$0xff]
        %v537 = vld [vmem:[%s350 + $0x570] sm:$0xff]
        %v538 = vld [vmem:[%s350 + $0x578] sm:$0xff]
        %v539 = vld [vmem:[%s350 + $0x580] sm:$0xff]
        %v540 = vld [vmem:[%s350 + $0x588] sm:$0xff]
        %v541 = vld [vmem:[%s350 + $0x590] sm:$0xff]
        %v542 = vld [vmem:[%s350 + $0x598] sm:$0xff]
        %v543 = vld [vmem:[%s350 + $0x5a0] sm:$0xff]
        %v544 = vld [vmem:[%s350 + $0x5a8] sm:$0xff]
        %v545 = vld [vmem:[%s350 + $0x5b0] sm:$0xff]
        %v546 = vld [vmem:[%s350 + $0x5b8] sm:$0xff]
        %v547 = vld [vmem:[%s350 + $0x5c0] sm:$0xff]
        %v548 = vld [vmem:[%s350 + $0x5c8] sm:$0xff]
        %v549 = vld [vmem:[%s350 + $0x5d0] sm:$0xff]
        %v550 = vld [vmem:[%s350 + $0x5d8] sm:$0xff]
        %v551 = vld [vmem:[%s350 + $0x5e0] sm:$0xff]
        %v552 = vld [vmem:[%s350 + $0x5e8] sm:$0xff]
        %v553 = vld [vmem:[%s350 + $0x5f0] sm:$0xff]
        %v554 = vld [vmem:[%s350 + $0x5f8] sm:$0xff]
        %v555 = vld [vmem:[%s350 + $0x600] sm:$0xff]
        %v556 = vld [vmem:[%s350 + $0x608] sm:$0xff]
        %v557 = vld [vmem:[%s350 + $0x610] sm:$0xff]
        %v558 = vld [vmem:[%s350 + $0x618] sm:$0xff]
        %v559 = vld [vmem:[%s350 + $0x620] sm:$0xff]
        %v560 = vld [vmem:[%s350 + $0x628] sm:$0xff]
        %v561 = vld [vmem:[%s350 + $0x630] sm:$0xff]
        %v562 = vld [vmem:[%s350 + $0x638] sm:$0xff]
        %v563 = vld [vmem:[%s350 + $0x640] sm:$0xff]
        %v564 = vld [vmem:[%s350 + $0x648] sm:$0xff]
        %v565 = vld [vmem:[%s350 + $0x650] sm:$0xff]
        %v566 = vld [vmem:[%s350 + $0x658] sm:$0xff]
        %v567 = vld [vmem:[%s350 + $0x660] sm:$0xff]
        %v568 = vld [vmem:[%s350 + $0x668] sm:$0xff]
        %v569 = vld [vmem:[%s350 + $0x670] sm:$0xff]
        %v570 = vld [vmem:[%s350 + $0x678] sm:$0xff]
        %v571 = vld [vmem:[%s350 + $0x680] sm:$0xff]
        %v572 = vld [vmem:[%s350 + $0x688] sm:$0xff]
        %v573 = vld [vmem:[%s350 + $0x690] sm:$0xff]
        %v574 = vld [vmem:[%s350 + $0x698] sm:$0xff]
        %v575 = vld [vmem:[%s350 + $0x6a0] sm:$0xff]
        %v576 = vld [vmem:[%s350 + $0x6a8] sm:$0xff]
        %v577 = vld [vmem:[%s350 + $0x6b0] sm:$0xff]
        %v578 = vld [vmem:[%s350 + $0x6b8] sm:$0xff]
        %v579 = vld [vmem:[%s350 + $0x6c0] sm:$0xff]
        %v580 = vld [vmem:[%s350 + $0x6c8] sm:$0xff]
        %v581 = vld [vmem:[%s350 + $0x6d0] sm:$0xff]
        %v582 = vld [vmem:[%s350 + $0x6d8] sm:$0xff]
        %v583 = vld [vmem:[%s350 + $0x6e0] sm:$0xff]
        %v584 = vld [vmem:[%s350 + $0x6e8] sm:$0xff]
        %v585 = vld [vmem:[%s350 + $0x6f0] sm:$0xff]
        %v586 = vld [vmem:[%s350 + $0x6f8] sm:$0xff]
        %v587 = vpack.c.bf16 %v370, %v363
        %v588 = vpack.c.bf16 %v371, %v364
        %v589 = vpack.c.bf16 %v372, %v365
        %v590 = vpack.c.bf16 %v373, %v366
        %v591 = vpack.c.bf16 %v374, %v367
        %v592 = vpack.c.bf16 %v375, %v368
        %v593 = vpack.c.bf16 %v376, %v369
        %v594 = vpack.c.bf16 %v384, %v377
        %v595 = vpack.c.bf16 %v385, %v378
        %v596 = vpack.c.bf16 %v386, %v379
        %v597 = vpack.c.bf16 %v387, %v380
        %v598 = vpack.c.bf16 %v388, %v381
        %v599 = vpack.c.bf16 %v389, %v382
        %v600 = vpack.c.bf16 %v390, %v383
        %v601 = vpack.c.bf16 %v398, %v391
        %v602 = vpack.c.bf16 %v399, %v392
        %v603 = vpack.c.bf16 %v400, %v393
        %v604 = vpack.c.bf16 %v401, %v394
        %v605 = vpack.c.bf16 %v402, %v395
        %v606 = vpack.c.bf16 %v403, %v396
        %v607 = vpack.c.bf16 %v404, %v397
        %v608 = vpack.c.bf16 %v412, %v405
        %v609 = vpack.c.bf16 %v413, %v406
        %v610 = vpack.c.bf16 %v414, %v407
        %v611 = vpack.c.bf16 %v415, %v408
        %v612 = vpack.c.bf16 %v416, %v409
        %v613 = vpack.c.bf16 %v417, %v410
        %v614 = vpack.c.bf16 %v418, %v411
        %v615 = vpack.c.bf16 %v426, %v419
        %v616 = vpack.c.bf16 %v427, %v420
        %v617 = vpack.c.bf16 %v428, %v421
        %v618 = vpack.c.bf16 %v429, %v422
        %v619 = vpack.c.bf16 %v430, %v423
        %v620 = vpack.c.bf16 %v431, %v424
        %v621 = vpack.c.bf16 %v432, %v425
        %v622 = vpack.c.bf16 %v440, %v433
        %v623 = vpack.c.bf16 %v441, %v434
        %v624 = vpack.c.bf16 %v442, %v435
        %v625 = vpack.c.bf16 %v443, %v436
        %v626 = vpack.c.bf16 %v444, %v437
        %v627 = vpack.c.bf16 %v445, %v438
        %v628 = vpack.c.bf16 %v446, %v439
        %v629 = vpack.c.bf16 %v454, %v447
        %v630 = vpack.c.bf16 %v455, %v448
        %v631 = vpack.c.bf16 %v456, %v449
        %v632 = vpack.c.bf16 %v457, %v450
        %v633 = vpack.c.bf16 %v458, %v451
        %v634 = vpack.c.bf16 %v459, %v452
        %v635 = vpack.c.bf16 %v460, %v453
        %v636 = vpack.c.bf16 %v468, %v461
        %v637 = vpack.c.bf16 %v469, %v462
        %v638 = vpack.c.bf16 %v470, %v463
        %v639 = vpack.c.bf16 %v471, %v464
        %v640 = vpack.c.bf16 %v472, %v465
        %v641 = vpack.c.bf16 %v473, %v466
        %v642 = vpack.c.bf16 %v474, %v467
        %v643 = vpack.c.bf16 %v482, %v475
        %v644 = vpack.c.bf16 %v483, %v476
        %v645 = vpack.c.bf16 %v484, %v477
        %v646 = vpack.c.bf16 %v485, %v478
        %v647 = vpack.c.bf16 %v486, %v479
        %v648 = vpack.c.bf16 %v487, %v480
        %v649 = vpack.c.bf16 %v488, %v481
        %v650 = vpack.c.bf16 %v496, %v489
        %v651 = vpack.c.bf16 %v497, %v490
        %v652 = vpack.c.bf16 %v498, %v491
        %v653 = vpack.c.bf16 %v499, %v492
        %v654 = vpack.c.bf16 %v500, %v493
        %v655 = vpack.c.bf16 %v501, %v494
        %v656 = vpack.c.bf16 %v502, %v495
        %v657 = vpack.c.bf16 %v510, %v503
        %v658 = vpack.c.bf16 %v511, %v504
        %v659 = vpack.c.bf16 %v512, %v505
        %v660 = vpack.c.bf16 %v513, %v506
        %v661 = vpack.c.bf16 %v514, %v507
        %v662 = vpack.c.bf16 %v515, %v508
        %v663 = vpack.c.bf16 %v516, %v509
        %v664 = vpack.c.bf16 %v524, %v517
        %v665 = vpack.c.bf16 %v525, %v518
        %v666 = vpack.c.bf16 %v526, %v519
        %v667 = vpack.c.bf16 %v527, %v520
        %v668 = vpack.c.bf16 %v528, %v521
        %v669 = vpack.c.bf16 %v529, %v522
        %v670 = vpack.c.bf16 %v530, %v523
        %v671 = vpack.c.bf16 %v538, %v531
        %v672 = vpack.c.bf16 %v539, %v532
        %v673 = vpack.c.bf16 %v540, %v533
        %v674 = vpack.c.bf16 %v541, %v534
        %v675 = vpack.c.bf16 %v542, %v535
        %v676 = vpack.c.bf16 %v543, %v536
        %v677 = vpack.c.bf16 %v544, %v537
        %v678 = vpack.c.bf16 %v552, %v545
        %v679 = vpack.c.bf16 %v553, %v546
        %v680 = vpack.c.bf16 %v554, %v547
        %v681 = vpack.c.bf16 %v555, %v548
        %v682 = vpack.c.bf16 %v556, %v549
        %v683 = vpack.c.bf16 %v557, %v550
        %v684 = vpack.c.bf16 %v558, %v551
        %v685 = vpack.c.bf16 %v566, %v559
        %v686 = vpack.c.bf16 %v567, %v560
        %v687 = vpack.c.bf16 %v568, %v561
        %v688 = vpack.c.bf16 %v569, %v562
        %v689 = vpack.c.bf16 %v570, %v563
        %v690 = vpack.c.bf16 %v571, %v564
        %v691 = vpack.c.bf16 %v572, %v565
        %v692 = vpack.c.bf16 %v580, %v573
        %v693 = vpack.c.bf16 %v581, %v574
        %v694 = vpack.c.bf16 %v582, %v575
        %v695 = vpack.c.bf16 %v583, %v576
        %v696 = vpack.c.bf16 %v584, %v577
        %v697 = vpack.c.bf16 %v585, %v578
        %v698 = vpack.c.bf16 %v586, %v579
        %v699 = vld [vmem:[%s1] sm:$0xf]
        %v700 = vld [vmem:[%s1 + $0x4] sm:$0xf]
        %v701 = vld [vmem:[%s1 + $0x8] sm:$0xf]
        %v702 = vld [vmem:[%s1 + $0xc] sm:$0xf]
        %v703 = vld [vmem:[%s1 + $0x10] sm:$0xf]
        %v704 = vld [vmem:[%s1 + $0x14] sm:$0xf]
        %v705 = vld [vmem:[%s1 + $0x18] sm:$0xf]
        %v706 = vld [vmem:[%s1 + $0x1c] sm:$0xf]
        %v707 = vld [vmem:[%s1 + $0x20] sm:$0xf]
        %v708 = vld [vmem:[%s1 + $0x24] sm:$0xf]
        %v709 = vld [vmem:[%s1 + $0x28] sm:$0xf]
        %v710 = vld [vmem:[%s1 + $0x2c] sm:$0xf]
        %v711 = vld [vmem:[%s1 + $0x30] sm:$0xf]
        %v712 = vld [vmem:[%s1 + $0x34] sm:$0xf]
        %v713 = vld [vmem:[%s1 + $0x38] sm:$0xf]
        %v714 = vld [vmem:[%s1 + $0x3c] sm:$0xf]
        %v715 = vld [vmem:[%s1 + $0x40] sm:$0xf]
        %v716 = vld [vmem:[%s1 + $0x44] sm:$0xf]
        %v717 = vld [vmem:[%s1 + $0x48] sm:$0xf]
        %v718 = vld [vmem:[%s1 + $0x4c] sm:$0xf]
        %v719 = vld [vmem:[%s1 + $0x50] sm:$0xf]
        %v720 = vld [vmem:[%s1 + $0x54] sm:$0xf]
        %v721 = vld [vmem:[%s1 + $0x58] sm:$0xf]
        %v722 = vld [vmem:[%s1 + $0x5c] sm:$0xf]
        %v723 = vld [vmem:[%s1 + $0x60] sm:$0xf]
        %v724 = vld [vmem:[%s1 + $0x64] sm:$0xf]
        %v725 = vld [vmem:[%s1 + $0x68] sm:$0xf]
        %v726 = vld [vmem:[%s1 + $0x6c] sm:$0xf]
        %v727 = vld [vmem:[%s1 + $0x70] sm:$0xf]
        %v728 = vld [vmem:[%s1 + $0x74] sm:$0xf]
        %v729 = vld [vmem:[%s1 + $0x78] sm:$0xf]
        %v730 = vld [vmem:[%s1 + $0x7c] sm:$0xf]
        %v731 = vld [vmem:[%s1 + $0x80] sm:$0xf]
        %v732 = vld [vmem:[%s1 + $0x84] sm:$0xf]
        %v733 = vld [vmem:[%s1 + $0x88] sm:$0xf]
        %v734 = vld [vmem:[%s1 + $0x8c] sm:$0xf]
        %v735 = vld [vmem:[%s1 + $0x90] sm:$0xf]
        %v736 = vld [vmem:[%s1 + $0x94] sm:$0xf]
        %v737 = vld [vmem:[%s1 + $0x98] sm:$0xf]
        %v738 = vld [vmem:[%s1 + $0x9c] sm:$0xf]
        %v739 = vld [vmem:[%s1 + $0xa0] sm:$0xf]
        %v740 = vld [vmem:[%s1 + $0xa4] sm:$0xf]
        %v741 = vld [vmem:[%s1 + $0xa8] sm:$0xf]
        %v742 = vld [vmem:[%s1 + $0xac] sm:$0xf]
        %v743 = vld [vmem:[%s1 + $0xb0] sm:$0xf]
        %v744 = vld [vmem:[%s1 + $0xb4] sm:$0xf]
        %v745 = vld [vmem:[%s1 + $0xb8] sm:$0xf]
        %v746 = vld [vmem:[%s1 + $0xbc] sm:$0xf]
        %v747 = vld [vmem:[%s1 + $0xc0] sm:$0xf]
        %v748 = vld [vmem:[%s1 + $0xc4] sm:$0xf]
        %v749 = vld [vmem:[%s1 + $0xc8] sm:$0xf]
        %v750 = vld [vmem:[%s1 + $0xcc] sm:$0xf]
        %v751 = vld [vmem:[%s1 + $0xd0] sm:$0xf]
        %v752 = vld [vmem:[%s1 + $0xd4] sm:$0xf]
        %v753 = vld [vmem:[%s1 + $0xd8] sm:$0xf]
        %v754 = vld [vmem:[%s1 + $0xdc] sm:$0xf]
        %v755 = vld [vmem:[%s1 + $0xe0] sm:$0xf]
        %v756 = vld [vmem:[%s1 + $0xe4] sm:$0xf]
        %v757 = vld [vmem:[%s1 + $0xe8] sm:$0xf]
        %v758 = vld [vmem:[%s1 + $0xec] sm:$0xf]
        %v759 = vld [vmem:[%s1 + $0xf0] sm:$0xf]
        %v760 = vld [vmem:[%s1 + $0xf4] sm:$0xf]
        %v761 = vld [vmem:[%s1 + $0xf8] sm:$0xf]
        %v762 = vld [vmem:[%s1 + $0xfc] sm:$0xf]
        %v763 = vld [vmem:[%s1 + $0x100] sm:$0xf]
        %v764 = vld [vmem:[%s1 + $0x104] sm:$0xf]
        %v765 = vld [vmem:[%s1 + $0x108] sm:$0xf]
        %v766 = vld [vmem:[%s1 + $0x10c] sm:$0xf]
        %v767 = vld [vmem:[%s1 + $0x110] sm:$0xf]
        %v768 = vld [vmem:[%s1 + $0x114] sm:$0xf]
        %v769 = vld [vmem:[%s1 + $0x118] sm:$0xf]
        %v770 = vld [vmem:[%s1 + $0x11c] sm:$0xf]
        %v771 = vld [vmem:[%s1 + $0x120] sm:$0xf]
        %v772 = vld [vmem:[%s1 + $0x124] sm:$0xf]
        %v773 = vld [vmem:[%s1 + $0x128] sm:$0xf]
        %v774 = vld [vmem:[%s1 + $0x12c] sm:$0xf]
        %v775 = vld [vmem:[%s1 + $0x130] sm:$0xf]
        %v776 = vld [vmem:[%s1 + $0x134] sm:$0xf]
        %v777 = vld [vmem:[%s1 + $0x138] sm:$0xf]
        %v778 = vld [vmem:[%s1 + $0x13c] sm:$0xf]
        %v779 = vld [vmem:[%s1 + $0x140] sm:$0xf]
        %v780 = vld [vmem:[%s1 + $0x144] sm:$0xf]
        %v781 = vld [vmem:[%s1 + $0x148] sm:$0xf]
        %v782 = vld [vmem:[%s1 + $0x14c] sm:$0xf]
        %v783 = vld [vmem:[%s1 + $0x150] sm:$0xf]
        %v784 = vld [vmem:[%s1 + $0x154] sm:$0xf]
        %v785 = vld [vmem:[%s1 + $0x158] sm:$0xf]
        %v786 = vld [vmem:[%s1 + $0x15c] sm:$0xf]
        %v787 = vld [vmem:[%s1 + $0x160] sm:$0xf]
        %v788 = vld [vmem:[%s1 + $0x164] sm:$0xf]
        %v789 = vld [vmem:[%s1 + $0x168] sm:$0xf]
        %v790 = vld [vmem:[%s1 + $0x16c] sm:$0xf]
        %v791 = vld [vmem:[%s1 + $0x170] sm:$0xf]
        %v792 = vld [vmem:[%s1 + $0x174] sm:$0xf]
        %v793 = vld [vmem:[%s1 + $0x178] sm:$0xf]
        %v794 = vld [vmem:[%s1 + $0x17c] sm:$0xf]
        %v795 = vld [vmem:[%s1 + $0x180] sm:$0xf]
        %v796 = vld [vmem:[%s1 + $0x184] sm:$0xf]
        %v797 = vld [vmem:[%s2] sm:$0x1]
        %v799 = vlaneseq
        %v800 = vshrl.u32 %v799, 7
        %v801 = vsub.s32 0, %v800
        %v802 = vrot.slane %v797, %v801
        %v902 = vunpack.c.l.b16 %v699
        %v903 = vunpack.c.l.b16 %v700
        %v904 = vunpack.c.l.b16 %v701
        %v905 = vunpack.c.l.b16 %v702
        %v906 = vunpack.c.l.b16 %v703
        %v907 = vunpack.c.l.b16 %v704
        %v908 = vunpack.c.l.b16 %v705
        %v909 = vunpack.c.l.b16 %v706
        %v910 = vunpack.c.l.b16 %v707
        %v911 = vunpack.c.l.b16 %v708
        %v912 = vunpack.c.l.b16 %v709
        %v913 = vunpack.c.l.b16 %v710
        %v914 = vunpack.c.l.b16 %v711
        %v915 = vunpack.c.l.b16 %v712
        %v916 = vunpack.c.l.b16 %v713
        %v917 = vunpack.c.l.b16 %v714
        %v918 = vunpack.c.l.b16 %v715
        %v919 = vunpack.c.l.b16 %v716
        %v920 = vunpack.c.l.b16 %v717
        %v921 = vunpack.c.l.b16 %v718
        %v922 = vunpack.c.l.b16 %v719
        %v923 = vunpack.c.l.b16 %v720
        %v924 = vunpack.c.l.b16 %v721
        %v925 = vunpack.c.l.b16 %v722
        %v926 = vunpack.c.l.b16 %v723
        %v927 = vunpack.c.l.b16 %v724
        %v928 = vunpack.c.l.b16 %v725
        %v929 = vunpack.c.l.b16 %v726
        %v930 = vunpack.c.l.b16 %v727
        %v931 = vunpack.c.l.b16 %v728
        %v932 = vunpack.c.l.b16 %v729
        %v933 = vunpack.c.l.b16 %v730
        %v934 = vunpack.c.l.b16 %v731
        %v935 = vunpack.c.l.b16 %v732
        %v936 = vunpack.c.l.b16 %v733
        %v937 = vunpack.c.l.b16 %v734
        %v938 = vunpack.c.l.b16 %v735
        %v939 = vunpack.c.l.b16 %v736
        %v940 = vunpack.c.l.b16 %v737
        %v941 = vunpack.c.l.b16 %v738
        %v942 = vunpack.c.l.b16 %v739
        %v943 = vunpack.c.l.b16 %v740
        %v944 = vunpack.c.l.b16 %v741
        %v945 = vunpack.c.l.b16 %v742
        %v946 = vunpack.c.l.b16 %v743
        %v947 = vunpack.c.l.b16 %v744
        %v948 = vunpack.c.l.b16 %v745
        %v949 = vunpack.c.l.b16 %v746
        %v950 = vunpack.c.l.b16 %v747
        %v951 = vunpack.c.l.b16 %v748
        %v952 = vunpack.c.l.b16 %v749
        %v953 = vunpack.c.l.b16 %v750
        %v954 = vunpack.c.l.b16 %v751
        %v955 = vunpack.c.l.b16 %v752
        %v956 = vunpack.c.l.b16 %v753
        %v957 = vunpack.c.l.b16 %v754
        %v958 = vunpack.c.l.b16 %v755
        %v959 = vunpack.c.l.b16 %v756
        %v960 = vunpack.c.l.b16 %v757
        %v961 = vunpack.c.l.b16 %v758
        %v962 = vunpack.c.l.b16 %v759
        %v963 = vunpack.c.l.b16 %v760
        %v964 = vunpack.c.l.b16 %v761
        %v965 = vunpack.c.l.b16 %v762
        %v966 = vunpack.c.l.b16 %v763
        %v967 = vunpack.c.l.b16 %v764
        %v968 = vunpack.c.l.b16 %v765
        %v969 = vunpack.c.l.b16 %v766
        %v970 = vunpack.c.l.b16 %v767
        %v971 = vunpack.c.l.b16 %v768
        %v972 = vunpack.c.l.b16 %v769
        %v973 = vunpack.c.l.b16 %v770
        %v974 = vunpack.c.l.b16 %v771
        %v975 = vunpack.c.l.b16 %v772
        %v976 = vunpack.c.l.b16 %v773
        %v977 = vunpack.c.l.b16 %v774
        %v978 = vunpack.c.l.b16 %v775
        %v979 = vunpack.c.l.b16 %v776
        %v980 = vunpack.c.l.b16 %v777
        %v981 = vunpack.c.l.b16 %v778
        %v982 = vunpack.c.l.b16 %v779
        %v983 = vunpack.c.l.b16 %v780
        %v984 = vunpack.c.l.b16 %v781
        %v985 = vunpack.c.l.b16 %v782
        %v986 = vunpack.c.l.b16 %v783
        %v987 = vunpack.c.l.b16 %v784
        %v988 = vunpack.c.l.b16 %v785
        %v989 = vunpack.c.l.b16 %v786
        %v990 = vunpack.c.l.b16 %v787
        %v991 = vunpack.c.l.b16 %v788
        %v992 = vunpack.c.l.b16 %v789
        %v993 = vunpack.c.l.b16 %v790
        %v994 = vunpack.c.l.b16 %v791
        %v995 = vunpack.c.l.b16 %v792
        %v996 = vunpack.c.l.b16 %v793
        %v997 = vunpack.c.l.b16 %v794
        %v998 = vunpack.c.l.b16 %v795
        %v999 = vunpack.c.l.b16 %v796
        %v1000 = vpack.c.b16 %v903, %v902
        %v1001 = vpack.c.b16 %v905, %v904
        %v1002 = vpack.c.b16 %v907, %v906
        %v1003 = vpack.c.b16 %v909, %v908
        %v1004 = vpack.c.b16 %v911, %v910
        %v1005 = vpack.c.b16 %v913, %v912
        %v1006 = vpack.c.b16 %v915, %v914
        %v1007 = vpack.c.b16 %v917, %v916
        %v1008 = vpack.c.b16 %v919, %v918
        %v1009 = vpack.c.b16 %v921, %v920
        %v1010 = vpack.c.b16 %v923, %v922
        %v1011 = vpack.c.b16 %v925, %v924
        %v1012 = vpack.c.b16 %v927, %v926
        %v1013 = vpack.c.b16 %v929, %v928
        %v1014 = vpack.c.b16 %v931, %v930
        %v1015 = vpack.c.b16 %v933, %v932
        %v1016 = vpack.c.b16 %v935, %v934
        %v1017 = vpack.c.b16 %v937, %v936
        %v1018 = vpack.c.b16 %v939, %v938
        %v1019 = vpack.c.b16 %v941, %v940
        %v1020 = vpack.c.b16 %v943, %v942
        %v1021 = vpack.c.b16 %v945, %v944
        %v1022 = vpack.c.b16 %v947, %v946
        %v1023 = vpack.c.b16 %v949, %v948
        %v1024 = vpack.c.b16 %v951, %v950
        %v1025 = vpack.c.b16 %v953, %v952
        %v1026 = vpack.c.b16 %v955, %v954
        %v1027 = vpack.c.b16 %v957, %v956
        %v1028 = vpack.c.b16 %v959, %v958
        %v1029 = vpack.c.b16 %v961, %v960
        %v1030 = vpack.c.b16 %v963, %v962
        %v1031 = vpack.c.b16 %v965, %v964
        %v1032 = vpack.c.b16 %v967, %v966
        %v1033 = vpack.c.b16 %v969, %v968
        %v1034 = vpack.c.b16 %v971, %v970
        %v1035 = vpack.c.b16 %v973, %v972
        %v1036 = vpack.c.b16 %v975, %v974
        %v1037 = vpack.c.b16 %v977, %v976
        %v1038 = vpack.c.b16 %v979, %v978
        %v1039 = vpack.c.b16 %v981, %v980
        %v1040 = vpack.c.b16 %v983, %v982
        %v1041 = vpack.c.b16 %v985, %v984
        %v1042 = vpack.c.b16 %v987, %v986
        %v1043 = vpack.c.b16 %v989, %v988
        %v1044 = vpack.c.b16 %v991, %v990
        %v1045 = vpack.c.b16 %v993, %v992
        %v1046 = vpack.c.b16 %v995, %v994
        %v1047 = vpack.c.b16 %v997, %v996
        %v1048 = vpack.c.b16 %v999, %v998
        %vm1098 = vcmask 130048
        %v1100 = vsel %vm1098, %v593, 0
        %v1103 = vsel %vm1098, %v600, 0
        %v1106 = vsel %vm1098, %v607, 0
        %v1109 = vsel %vm1098, %v614, 0
        %v1112 = vsel %vm1098, %v621, 0
        %v1115 = vsel %vm1098, %v628, 0
        %v1118 = vsel %vm1098, %v635, 0
        %v1121 = vsel %vm1098, %v642, 0
        %v1124 = vsel %vm1098, %v649, 0
        %v1127 = vsel %vm1098, %v656, 0
        %v1130 = vsel %vm1098, %v663, 0
        %v1133 = vsel %vm1098, %v670, 0
        %v1136 = vsel %vm1098, %v677, 0
        %v1139 = vsel %vm1098, %v684, 0
        %v1142 = vsel %vm1098, %v691, 0
        %v1145 = vsel %vm1098, %v698, 0
        %1147 = vmatprep.subr.bf16.mxu0 0
        %1148 = vmatpush1.bf16.msra.mxu0 %v1000
        %1149 = vmatprep.subr.bf16.mxu0 0
        %1150 = vmatpush1.bf16.msra.mxu0 %v1001
        %1151 = vmatprep.subr.bf16.mxu0 0
        %1152 = vmatpush1.bf16.msra.mxu0 %v1002
        %1153 = vmatprep.subr.bf16.mxu0 0
        %1154 = vmatpush1.bf16.msra.mxu0 %v1003
        %1155 = vmatprep.subr.bf16.mxu0 0
        %1156 = vmatpush1.bf16.msra.mxu0 %v1004
        %1157 = vmatprep.subr.bf16.mxu0 0
        %1158 = vmatpush1.bf16.msra.mxu0 %v1005
        %1159 = vmatprep.subr.bf16.mxu0 0
        %1160 = vmatpush1.bf16.msra.mxu0 %v1006
        %1161 = vmatprep.subr.bf16.mxu0 0
        %1162 = vmatpush1.bf16.msra.mxu0 %v1007
        %1163 = vmatprep.subr.bf16.mxu0 0
        %1164 = vmatpush1.bf16.msra.mxu0 %v1008
        %1165 = vmatprep.subr.bf16.mxu0 0
        %1166 = vmatpush1.bf16.msra.mxu0 %v1009
        %1167 = vmatprep.subr.bf16.mxu0 0
        %1168 = vmatpush1.bf16.msra.mxu0 %v1010
        %1169 = vmatprep.subr.bf16.mxu0 0
        %1170 = vmatpush1.bf16.msra.mxu0 %v1011
        %1171 = vmatprep.subr.bf16.mxu0 0
        %1172 = vmatpush1.bf16.msra.mxu0 %v1012
        %1173 = vmatprep.subr.bf16.mxu0 0
        %1174 = vmatpush1.bf16.msra.mxu0 %v1013
        %1175 = vmatprep.subr.bf16.mxu0 0
        %1176 = vmatpush1.bf16.msra.mxu0 %v1014
        %1177 = vmatprep.subr.bf16.mxu0 0
        %1178 = vmatpush1.bf16.msra.mxu0 %v1015
        %1179 = vmatprep.mubr.bf16.mxu0 %v588
        %1180 = vmatmul.mubr.bf16.gmra.mrb[0].mxu0 %v587
        %v1181 = vpop.f32.mrb[0].mxu0
        %v1182 = vadd.f32 %v802, %v1181
        %v1183 = vpop.f32.mrb[0].mxu0
        %v1184 = vpop.f32.mrb[0].mxu0
        %v1185 = vadd.f32 %v802, %v1184
        %v1186 = vpop.f32.mrb[0].mxu0
        %1187 = vmatprep.mubr.bf16.mxu0 %v595
        %1188 = vmatmul.mubr.bf16.gmra.mrb[0].mxu0 %v594
        %v1189 = vpop.f32.mrb[0].mxu0
        %v1190 = vadd.f32 %v802, %v1189
        %v1191 = vpop.f32.mrb[0].mxu0
        %v1192 = vpop.f32.mrb[0].mxu0
        %v1193 = vadd.f32 %v802, %v1192
        %v1194 = vpop.f32.mrb[0].mxu0
        %1195 = vmatprep.mubr.bf16.mxu0 %v602
        %1196 = vmatmul.mubr.bf16.gmra.mrb[0].mxu0 %v601
        %v1197 = vpop.f32.mrb[0].mxu0
        %v1198 = vadd.f32 %v802, %v1197
        %v1199 = vpop.f32.mrb[0].mxu0
        %v1200 = vpop.f32.mrb[0].mxu0
        %v1201 = vadd.f32 %v802, %v1200
        %v1202 = vpop.f32.mrb[0].mxu0
        %1203 = vmatprep.mubr.bf16.mxu0 %v609
        %1204 = vmatmul.mubr.bf16.gmra.mrb[0].mxu0 %v608
        %v1205 = vpop.f32.mrb[0].mxu0
        %v1206 = vadd.f32 %v802, %v1205
        %v1207 = vpop.f32.mrb[0].mxu0
        %v1208 = vpop.f32.mrb[0].mxu0
        %v1209 = vadd.f32 %v802, %v1208
        %v1210 = vpop.f32.mrb[0].mxu0
        %1211 = vmatprep.mubr.bf16.mxu0 %v616
        %1212 = vmatmul.mubr.bf16.gmra.mrb[0].mxu0 %v615
        %v1213 = vpop.f32.mrb[0].mxu0
        %v1214 = vadd.f32 %v802, %v1213
        %v1215 = vpop.f32.mrb[0].mxu0
        %v1216 = vpop.f32.mrb[0].mxu0
        %v1217 = vadd.f32 %v802, %v1216
        %v1218 = vpop.f32.mrb[0].mxu0
        %1219 = vmatprep.mubr.bf16.mxu0 %v623
        %1220 = vmatmul.mubr.bf16.gmra.mrb[0].mxu0 %v622
        %v1221 = vpop.f32.mrb[0].mxu0
        %v1222 = vadd.f32 %v802, %v1221
        %v1223 = vpop.f32.mrb[0].mxu0
        %v1224 = vpop.f32.mrb[0].mxu0
        %v1225 = vadd.f32 %v802, %v1224
        %v1226 = vpop.f32.mrb[0].mxu0
        %1227 = vmatprep.mubr.bf16.mxu0 %v630
        %1228 = vmatmul.mubr.bf16.gmra.mrb[0].mxu0 %v629
        %v1229 = vpop.f32.mrb[0].mxu0
        %v1230 = vadd.f32 %v802, %v1229
        %v1231 = vpop.f32.mrb[0].mxu0
        %v1232 = vpop.f32.mrb[0].mxu0
        %v1233 = vadd.f32 %v802, %v1232
        %v1234 = vpop.f32.mrb[0].mxu0
        %1235 = vmatprep.mubr.bf16.mxu0 %v637
        %1236 = vmatmul.mubr.bf16.gmra.mrb[0].mxu0 %v636
        %v1237 = vpop.f32.mrb[0].mxu0
        %v1238 = vadd.f32 %v802, %v1237
        %v1239 = vpop.f32.mrb[0].mxu0
        %v1240 = vpop.f32.mrb[0].mxu0
        %v1241 = vadd.f32 %v802, %v1240
        %v1242 = vpop.f32.mrb[0].mxu0
        %1243 = vmatprep.mubr.bf16.mxu0 %v644
        %1244 = vmatmul.mubr.bf16.gmra.mrb[0].mxu0 %v643
        %v1245 = vpop.f32.mrb[0].mxu0
        %v1246 = vadd.f32 %v802, %v1245
        %v1247 = vpop.f32.mrb[0].mxu0
        %v1248 = vpop.f32.mrb[0].mxu0
        %v1249 = vadd.f32 %v802, %v1248
        %v1250 = vpop.f32.mrb[0].mxu0
        %1251 = vmatprep.mubr.bf16.mxu0 %v651
        %1252 = vmatmul.mubr.bf16.gmra.mrb[0].mxu0 %v650
        %v1253 = vpop.f32.mrb[0].mxu0
        %v1254 = vadd.f32 %v802, %v1253
        %v1255 = vpop.f32.mrb[0].mxu0
        %v1256 = vpop.f32.mrb[0].mxu0
        %v1257 = vadd.f32 %v802, %v1256
        %v1258 = vpop.f32.mrb[0].mxu0
        %1259 = vmatprep.mubr.bf16.mxu0 %v658
        %1260 = vmatmul.mubr.bf16.gmra.mrb[0].mxu0 %v657
        %v1261 = vpop.f32.mrb[0].mxu0
        %v1262 = vadd.f32 %v802, %v1261
        %v1263 = vpop.f32.mrb[0].mxu0
        %v1264 = vpop.f32.mrb[0].mxu0
        %v1265 = vadd.f32 %v802, %v1264
        %v1266 = vpop.f32.mrb[0].mxu0
        %1267 = vmatprep.mubr.bf16.mxu0 %v665
        %1268 = vmatmul.mubr.bf16.gmra.mrb[0].mxu0 %v664
        %v1269 = vpop.f32.mrb[0].mxu0
        %v1270 = vadd.f32 %v802, %v1269
        %v1271 = vpop.f32.mrb[0].mxu0
        %v1272 = vpop.f32.mrb[0].mxu0
        %v1273 = vadd.f32 %v802, %v1272
        %v1274 = vpop.f32.mrb[0].mxu0
        %1275 = vmatprep.mubr.bf16.mxu0 %v672
        %1276 = vmatmul.mubr.bf16.gmra.mrb[0].mxu0 %v671
        %v1277 = vpop.f32.mrb[0].mxu0
        %v1278 = vadd.f32 %v802, %v1277
        %v1279 = vpop.f32.mrb[0].mxu0
        %v1280 = vpop.f32.mrb[0].mxu0
        %v1281 = vadd.f32 %v802, %v1280
        %v1282 = vpop.f32.mrb[0].mxu0
        %1283 = vmatprep.mubr.bf16.mxu0 %v679
        %1284 = vmatmul.mubr.bf16.gmra.mrb[0].mxu0 %v678
        %v1285 = vpop.f32.mrb[0].mxu0
        %v1286 = vadd.f32 %v802, %v1285
        %v1287 = vpop.f32.mrb[0].mxu0
        %v1288 = vpop.f32.mrb[0].mxu0
        %v1289 = vadd.f32 %v802, %v1288
        %v1290 = vpop.f32.mrb[0].mxu0
        %1291 = vmatprep.mubr.bf16.mxu0 %v686
        %1292 = vmatmul.mubr.bf16.gmra.mrb[0].mxu0 %v685
        %v1293 = vpop.f32.mrb[0].mxu0
        %v1294 = vadd.f32 %v802, %v1293
        %v1295 = vpop.f32.mrb[0].mxu0
        %v1296 = vpop.f32.mrb[0].mxu0
        %v1297 = vadd.f32 %v802, %v1296
        %v1298 = vpop.f32.mrb[0].mxu0
        %1299 = vmatprep.mubr.bf16.mxu0 %v693
        %1300 = vmatmul.mubr.bf16.gmra.mrb[0].mxu0 %v692
        %v1301 = vpop.f32.mrb[0].mxu0
        %v1302 = vadd.f32 %v802, %v1301
        %v1303 = vpop.f32.mrb[0].mxu0
        %v1304 = vpop.f32.mrb[0].mxu0
        %v1305 = vadd.f32 %v802, %v1304
        %v1306 = vpop.f32.mrb[0].mxu0
        %1307 = vdwg.mxu0
        %1308 = vmatprep.subr.bf16.mxu0 0
        %1309 = vmatpush1.bf16.msra.mxu0 %v1016
        %1310 = vmatprep.subr.bf16.mxu0 0
        %1311 = vmatpush1.bf16.msra.mxu0 %v1017
        %1312 = vmatprep.subr.bf16.mxu0 0
        %1313 = vmatpush1.bf16.msra.mxu0 %v1018
        %1314 = vmatprep.subr.bf16.mxu0 0
        %1315 = vmatpush1.bf16.msra.mxu0 %v1019
        %1316 = vmatprep.subr.bf16.mxu0 0
        %1317 = vmatpush1.bf16.msra.mxu0 %v1020
        %1318 = vmatprep.subr.bf16.mxu0 0
        %1319 = vmatpush1.bf16.msra.mxu0 %v1021
        %1320 = vmatprep.subr.bf16.mxu0 0
        %1321 = vmatpush1.bf16.msra.mxu0 %v1022
        %1322 = vmatprep.subr.bf16.mxu0 0
        %1323 = vmatpush1.bf16.msra.mxu0 %v1023
        %1324 = vmatprep.subr.bf16.mxu0 0
        %1325 = vmatpush1.bf16.msra.mxu0 %v1024
        %1326 = vmatprep.subr.bf16.mxu0 0
        %1327 = vmatpush1.bf16.msra.mxu0 %v1025
        %1328 = vmatprep.subr.bf16.mxu0 0
        %1329 = vmatpush1.bf16.msra.mxu0 %v1026
        %1330 = vmatprep.subr.bf16.mxu0 0
        %1331 = vmatpush1.bf16.msra.mxu0 %v1027
        %1332 = vmatprep.subr.bf16.mxu0 0
        %1333 = vmatpush1.bf16.msra.mxu0 %v1028
        %1334 = vmatprep.subr.bf16.mxu0 0
        %1335 = vmatpush1.bf16.msra.mxu0 %v1029
        %1336 = vmatprep.subr.bf16.mxu0 0
        %1337 = vmatpush1.bf16.msra.mxu0 %v1030
        %1338 = vmatprep.subr.bf16.mxu0 0
        %1339 = vmatpush1.bf16.msra.mxu0 %v1031
        %1340 = vmatprep.mubr.bf16.mxu0 %v590
        %1341 = vmatmul.mubr.bf16.gmra.mrb[0].mxu0 %v589
        %v1342 = vpop.f32.mrb[0].mxu0
        %v1343 = vadd.f32 %v1182, %v1342
        %v1344 = vpop.f32.mrb[0].mxu0
        %v1345 = vpop.f32.mrb[0].mxu0
        %v1346 = vadd.f32 %v1185, %v1345
        %v1347 = vpop.f32.mrb[0].mxu0
        %1348 = vmatprep.mubr.bf16.mxu0 %v597
        %1349 = vmatmul.mubr.bf16.gmra.mrb[0].mxu0 %v596
        %v1350 = vpop.f32.mrb[0].mxu0
        %v1351 = vadd.f32 %v1190, %v1350
        %v1352 = vpop.f32.mrb[0].mxu0
        %v1353 = vpop.f32.mrb[0].mxu0
        %v1354 = vadd.f32 %v1193, %v1353
        %v1355 = vpop.f32.mrb[0].mxu0
        %1356 = vmatprep.mubr.bf16.mxu0 %v604
        %1357 = vmatmul.mubr.bf16.gmra.mrb[0].mxu0 %v603
        %v1358 = vpop.f32.mrb[0].mxu0
        %v1359 = vadd.f32 %v1198, %v1358
        %v1360 = vpop.f32.mrb[0].mxu0
        %v1361 = vpop.f32.mrb[0].mxu0
        %v1362 = vadd.f32 %v1201, %v1361
        %v1363 = vpop.f32.mrb[0].mxu0
        %1364 = vmatprep.mubr.bf16.mxu0 %v611
        %1365 = vmatmul.mubr.bf16.gmra.mrb[0].mxu0 %v610
        %v1366 = vpop.f32.mrb[0].mxu0
        %v1367 = vadd.f32 %v1206, %v1366
        %v1368 = vpop.f32.mrb[0].mxu0
        %v1369 = vpop.f32.mrb[0].mxu0
        %v1370 = vadd.f32 %v1209, %v1369
        %v1371 = vpop.f32.mrb[0].mxu0
        %1372 = vmatprep.mubr.bf16.mxu0 %v618
        %1373 = vmatmul.mubr.bf16.gmra.mrb[0].mxu0 %v617
        %v1374 = vpop.f32.mrb[0].mxu0
        %v1375 = vadd.f32 %v1214, %v1374
        %v1376 = vpop.f32.mrb[0].mxu0
        %v1377 = vpop.f32.mrb[0].mxu0
        %v1378 = vadd.f32 %v1217, %v1377
        %v1379 = vpop.f32.mrb[0].mxu0
        %1380 = vmatprep.mubr.bf16.mxu0 %v625
        %1381 = vmatmul.mubr.bf16.gmra.mrb[0].mxu0 %v624
        %v1382 = vpop.f32.mrb[0].mxu0
        %v1383 = vadd.f32 %v1222, %v1382
        %v1384 = vpop.f32.mrb[0].mxu0
        %v1385 = vpop.f32.mrb[0].mxu0
        %v1386 = vadd.f32 %v1225, %v1385
        %v1387 = vpop.f32.mrb[0].mxu0
        %1388 = vmatprep.mubr.bf16.mxu0 %v632
        %1389 = vmatmul.mubr.bf16.gmra.mrb[0].mxu0 %v631
        %v1390 = vpop.f32.mrb[0].mxu0
        %v1391 = vadd.f32 %v1230, %v1390
        %v1392 = vpop.f32.mrb[0].mxu0
        %v1393 = vpop.f32.mrb[0].mxu0
        %v1394 = vadd.f32 %v1233, %v1393
        %v1395 = vpop.f32.mrb[0].mxu0
        %1396 = vmatprep.mubr.bf16.mxu0 %v639
        %1397 = vmatmul.mubr.bf16.gmra.mrb[0].mxu0 %v638
        %v1398 = vpop.f32.mrb[0].mxu0
        %v1399 = vadd.f32 %v1238, %v1398
        %v1400 = vpop.f32.mrb[0].mxu0
        %v1401 = vpop.f32.mrb[0].mxu0
        %v1402 = vadd.f32 %v1241, %v1401
        %v1403 = vpop.f32.mrb[0].mxu0
        %1404 = vmatprep.mubr.bf16.mxu0 %v646
        %1405 = vmatmul.mubr.bf16.gmra.mrb[0].mxu0 %v645
        %v1406 = vpop.f32.mrb[0].mxu0
        %v1407 = vadd.f32 %v1246, %v1406
        %v1408 = vpop.f32.mrb[0].mxu0
        %v1409 = vpop.f32.mrb[0].mxu0
        %v1410 = vadd.f32 %v1249, %v1409
        %v1411 = vpop.f32.mrb[0].mxu0
        %1412 = vmatprep.mubr.bf16.mxu0 %v653
        %1413 = vmatmul.mubr.bf16.gmra.mrb[0].mxu0 %v652
        %v1414 = vpop.f32.mrb[0].mxu0
        %v1415 = vadd.f32 %v1254, %v1414
        %v1416 = vpop.f32.mrb[0].mxu0
        %v1417 = vpop.f32.mrb[0].mxu0
        %v1418 = vadd.f32 %v1257, %v1417
        %v1419 = vpop.f32.mrb[0].mxu0
        %1420 = vmatprep.mubr.bf16.mxu0 %v660
        %1421 = vmatmul.mubr.bf16.gmra.mrb[0].mxu0 %v659
        %v1422 = vpop.f32.mrb[0].mxu0
        %v1423 = vadd.f32 %v1262, %v1422
        %v1424 = vpop.f32.mrb[0].mxu0
        %v1425 = vpop.f32.mrb[0].mxu0
        %v1426 = vadd.f32 %v1265, %v1425
        %v1427 = vpop.f32.mrb[0].mxu0
        %1428 = vmatprep.mubr.bf16.mxu0 %v667
        %1429 = vmatmul.mubr.bf16.gmra.mrb[0].mxu0 %v666
        %v1430 = vpop.f32.mrb[0].mxu0
        %v1431 = vadd.f32 %v1270, %v1430
        %v1432 = vpop.f32.mrb[0].mxu0
        %v1433 = vpop.f32.mrb[0].mxu0
        %v1434 = vadd.f32 %v1273, %v1433
        %v1435 = vpop.f32.mrb[0].mxu0
        %1436 = vmatprep.mubr.bf16.mxu0 %v674
        %1437 = vmatmul.mubr.bf16.gmra.mrb[0].mxu0 %v673
        %v1438 = vpop.f32.mrb[0].mxu0
        %v1439 = vadd.f32 %v1278, %v1438
        %v1440 = vpop.f32.mrb[0].mxu0
        %v1441 = vpop.f32.mrb[0].mxu0
        %v1442 = vadd.f32 %v1281, %v1441
        %v1443 = vpop.f32.mrb[0].mxu0
        %1444 = vmatprep.mubr.bf16.mxu0 %v681
        %1445 = vmatmul.mubr.bf16.gmra.mrb[0].mxu0 %v680
        %v1446 = vpop.f32.mrb[0].mxu0
        %v1447 = vadd.f32 %v1286, %v1446
        %v1448 = vpop.f32.mrb[0].mxu0
        %v1449 = vpop.f32.mrb[0].mxu0
        %v1450 = vadd.f32 %v1289, %v1449
        %v1451 = vpop.f32.mrb[0].mxu0
        %1452 = vmatprep.mubr.bf16.mxu0 %v688
        %1453 = vmatmul.mubr.bf16.gmra.mrb[0].mxu0 %v687
        %v1454 = vpop.f32.mrb[0].mxu0
        %v1455 = vadd.f32 %v1294, %v1454
        %v1456 = vpop.f32.mrb[0].mxu0
        %v1457 = vpop.f32.mrb[0].mxu0
        %v1458 = vadd.f32 %v1297, %v1457
        %v1459 = vpop.f32.mrb[0].mxu0
        %1460 = vmatprep.mubr.bf16.mxu0 %v695
        %1461 = vmatmul.mubr.bf16.gmra.mrb[0].mxu0 %v694
        %v1462 = vpop.f32.mrb[0].mxu0
        %v1463 = vadd.f32 %v1302, %v1462
        %v1464 = vpop.f32.mrb[0].mxu0
        %v1465 = vpop.f32.mrb[0].mxu0
        %v1466 = vadd.f32 %v1305, %v1465
        %v1467 = vpop.f32.mrb[0].mxu0
        %1468 = vdwg.mxu0
        %1469 = vmatprep.subr.bf16.mxu0 0
        %1470 = vmatpush1.bf16.msra.mxu0 %v1032
        %1471 = vmatprep.subr.bf16.mxu0 0
        %1472 = vmatpush1.bf16.msra.mxu0 %v1033
        %1473 = vmatprep.subr.bf16.mxu0 0
        %1474 = vmatpush1.bf16.msra.mxu0 %v1034
        %1475 = vmatprep.subr.bf16.mxu0 0
        %1476 = vmatpush1.bf16.msra.mxu0 %v1035
        %1477 = vmatprep.subr.bf16.mxu0 0
        %1478 = vmatpush1.bf16.msra.mxu0 %v1036
        %1479 = vmatprep.subr.bf16.mxu0 0
        %1480 = vmatpush1.bf16.msra.mxu0 %v1037
        %1481 = vmatprep.subr.bf16.mxu0 0
        %1482 = vmatpush1.bf16.msra.mxu0 %v1038
        %1483 = vmatprep.subr.bf16.mxu0 0
        %1484 = vmatpush1.bf16.msra.mxu0 %v1039
        %1485 = vmatprep.subr.bf16.mxu0 0
        %1486 = vmatpush1.bf16.msra.mxu0 %v1040
        %1487 = vmatprep.subr.bf16.mxu0 0
        %1488 = vmatpush1.bf16.msra.mxu0 %v1041
        %1489 = vmatprep.subr.bf16.mxu0 0
        %1490 = vmatpush1.bf16.msra.mxu0 %v1042
        %1491 = vmatprep.subr.bf16.mxu0 0
        %1492 = vmatpush1.bf16.msra.mxu0 %v1043
        %1493 = vmatprep.subr.bf16.mxu0 0
        %1494 = vmatpush1.bf16.msra.mxu0 %v1044
        %1495 = vmatprep.subr.bf16.mxu0 0
        %1496 = vmatpush1.bf16.msra.mxu0 %v1045
        %1497 = vmatprep.subr.bf16.mxu0 0
        %1498 = vmatpush1.bf16.msra.mxu0 %v1046
        %1499 = vmatprep.subr.bf16.mxu0 0
        %1500 = vmatpush1.bf16.msra.mxu0 %v1047
        %1501 = vmatprep.mubr.bf16.mxu0 %v592
        %1502 = vmatmul.mubr.bf16.gmra.mrb[0].mxu0 %v591
        %v1503 = vpop.f32.mrb[0].mxu0
        %v1504 = vadd.f32 %v1343, %v1503
        %v1505 = vpop.f32.mrb[0].mxu0
        %v1506 = vpop.f32.mrb[0].mxu0
        %v1507 = vadd.f32 %v1346, %v1506
        %v1508 = vpop.f32.mrb[0].mxu0
        %1509 = vmatprep.mubr.bf16.mxu0 %v599
        %1510 = vmatmul.mubr.bf16.gmra.mrb[0].mxu0 %v598
        %v1511 = vpop.f32.mrb[0].mxu0
        %v1512 = vadd.f32 %v1351, %v1511
        %v1513 = vpop.f32.mrb[0].mxu0
        %v1514 = vpop.f32.mrb[0].mxu0
        %v1515 = vadd.f32 %v1354, %v1514
        %v1516 = vpop.f32.mrb[0].mxu0
        %1517 = vmatprep.mubr.bf16.mxu0 %v606
        %1518 = vmatmul.mubr.bf16.gmra.mrb[0].mxu0 %v605
        %v1519 = vpop.f32.mrb[0].mxu0
        %v1520 = vadd.f32 %v1359, %v1519
        %v1521 = vpop.f32.mrb[0].mxu0
        %v1522 = vpop.f32.mrb[0].mxu0
        %v1523 = vadd.f32 %v1362, %v1522
        %v1524 = vpop.f32.mrb[0].mxu0
        %1525 = vmatprep.mubr.bf16.mxu0 %v613
        %1526 = vmatmul.mubr.bf16.gmra.mrb[0].mxu0 %v612
        %v1527 = vpop.f32.mrb[0].mxu0
        %v1528 = vadd.f32 %v1367, %v1527
        %v1529 = vpop.f32.mrb[0].mxu0
        %v1530 = vpop.f32.mrb[0].mxu0
        %v1531 = vadd.f32 %v1370, %v1530
        %v1532 = vpop.f32.mrb[0].mxu0
        %1533 = vmatprep.mubr.bf16.mxu0 %v620
        %1534 = vmatmul.mubr.bf16.gmra.mrb[0].mxu0 %v619
        %v1535 = vpop.f32.mrb[0].mxu0
        %v1536 = vadd.f32 %v1375, %v1535
        %v1537 = vpop.f32.mrb[0].mxu0
        %v1538 = vpop.f32.mrb[0].mxu0
        %v1539 = vadd.f32 %v1378, %v1538
        %v1540 = vpop.f32.mrb[0].mxu0
        %1541 = vmatprep.mubr.bf16.mxu0 %v627
        %1542 = vmatmul.mubr.bf16.gmra.mrb[0].mxu0 %v626
        %v1543 = vpop.f32.mrb[0].mxu0
        %v1544 = vadd.f32 %v1383, %v1543
        %v1545 = vpop.f32.mrb[0].mxu0
        %v1546 = vpop.f32.mrb[0].mxu0
        %v1547 = vadd.f32 %v1386, %v1546
        %v1548 = vpop.f32.mrb[0].mxu0
        %1549 = vmatprep.mubr.bf16.mxu0 %v634
        %1550 = vmatmul.mubr.bf16.gmra.mrb[0].mxu0 %v633
        %v1551 = vpop.f32.mrb[0].mxu0
        %v1552 = vadd.f32 %v1391, %v1551
        %v1553 = vpop.f32.mrb[0].mxu0
        %v1554 = vpop.f32.mrb[0].mxu0
        %v1555 = vadd.f32 %v1394, %v1554
        %v1556 = vpop.f32.mrb[0].mxu0
        %1557 = vmatprep.mubr.bf16.mxu0 %v641
        %1558 = vmatmul.mubr.bf16.gmra.mrb[0].mxu0 %v640
        %v1559 = vpop.f32.mrb[0].mxu0
        %v1560 = vadd.f32 %v1399, %v1559
        %v1561 = vpop.f32.mrb[0].mxu0
        %v1562 = vpop.f32.mrb[0].mxu0
        %v1563 = vadd.f32 %v1402, %v1562
        %v1564 = vpop.f32.mrb[0].mxu0
        %1565 = vmatprep.mubr.bf16.mxu0 %v648
        %1566 = vmatmul.mubr.bf16.gmra.mrb[0].mxu0 %v647
        %v1567 = vpop.f32.mrb[0].mxu0
        %v1568 = vadd.f32 %v1407, %v1567
        %v1569 = vpop.f32.mrb[0].mxu0
        %v1570 = vpop.f32.mrb[0].mxu0
        %v1571 = vadd.f32 %v1410, %v1570
        %v1572 = vpop.f32.mrb[0].mxu0
        %1573 = vmatprep.mubr.bf16.mxu0 %v655
        %1574 = vmatmul.mubr.bf16.gmra.mrb[0].mxu0 %v654
        %v1575 = vpop.f32.mrb[0].mxu0
        %v1576 = vadd.f32 %v1415, %v1575
        %v1577 = vpop.f32.mrb[0].mxu0
        %v1578 = vpop.f32.mrb[0].mxu0
        %v1579 = vadd.f32 %v1418, %v1578
        %v1580 = vpop.f32.mrb[0].mxu0
        %1581 = vmatprep.mubr.bf16.mxu0 %v662
        %1582 = vmatmul.mubr.bf16.gmra.mrb[0].mxu0 %v661
        %v1583 = vpop.f32.mrb[0].mxu0
        %v1584 = vadd.f32 %v1423, %v1583
        %v1585 = vpop.f32.mrb[0].mxu0
        %v1586 = vpop.f32.mrb[0].mxu0
        %v1587 = vadd.f32 %v1426, %v1586
        %v1588 = vpop.f32.mrb[0].mxu0
        %1589 = vmatprep.mubr.bf16.mxu0 %v669
        %1590 = vmatmul.mubr.bf16.gmra.mrb[0].mxu0 %v668
        %v1591 = vpop.f32.mrb[0].mxu0
        %v1592 = vadd.f32 %v1431, %v1591
        %v1593 = vpop.f32.mrb[0].mxu0
        %v1594 = vpop.f32.mrb[0].mxu0
        %v1595 = vadd.f32 %v1434, %v1594
        %v1596 = vpop.f32.mrb[0].mxu0
        %1597 = vmatprep.mubr.bf16.mxu0 %v676
        %1598 = vmatmul.mubr.bf16.gmra.mrb[0].mxu0 %v675
        %v1599 = vpop.f32.mrb[0].mxu0
        %v1600 = vadd.f32 %v1439, %v1599
        %v1601 = vpop.f32.mrb[0].mxu0
        %v1602 = vpop.f32.mrb[0].mxu0
        %v1603 = vadd.f32 %v1442, %v1602
        %v1604 = vpop.f32.mrb[0].mxu0
        %1605 = vmatprep.mubr.bf16.mxu0 %v683
        %1606 = vmatmul.mubr.bf16.gmra.mrb[0].mxu0 %v682
        %v1607 = vpop.f32.mrb[0].mxu0
        %v1608 = vadd.f32 %v1447, %v1607
        %v1609 = vpop.f32.mrb[0].mxu0
        %v1610 = vpop.f32.mrb[0].mxu0
        %v1611 = vadd.f32 %v1450, %v1610
        %v1612 = vpop.f32.mrb[0].mxu0
        %1613 = vmatprep.mubr.bf16.mxu0 %v690
        %1614 = vmatmul.mubr.bf16.gmra.mrb[0].mxu0 %v689
        %v1615 = vpop.f32.mrb[0].mxu0
        %v1616 = vadd.f32 %v1455, %v1615
        %v1617 = vpop.f32.mrb[0].mxu0
        %v1618 = vpop.f32.mrb[0].mxu0
        %v1619 = vadd.f32 %v1458, %v1618
        %v1620 = vpop.f32.mrb[0].mxu0
        %1621 = vmatprep.mubr.bf16.mxu0 %v697
        %1622 = vmatmul.mubr.bf16.gmra.mrb[0].mxu0 %v696
        %v1623 = vpop.f32.mrb[0].mxu0
        %v1624 = vadd.f32 %v1463, %v1623
        %v1625 = vpop.f32.mrb[0].mxu0
        %v1626 = vpop.f32.mrb[0].mxu0
        %v1627 = vadd.f32 %v1466, %v1626
        %v1628 = vpop.f32.mrb[0].mxu0
        %1629 = vdwg.mxu0
        %1630 = vmatprep.subr.bf16.mxu0 0
        %1631 = vmatpush1.bf16.msra.mxu0 %v1048
        %1632 = vmatprep.subr.bf16.mxu0 0
        %1633 = vmatpush1.bf16.msra.mxu0 0
        %1634 = vmatprep.subr.bf16.mxu0 0
        %1635 = vmatpush1.bf16.msra.mxu0 0
        %1636 = vmatprep.subr.bf16.mxu0 0
        %1637 = vmatpush1.bf16.msra.mxu0 0
        %1638 = vmatprep.subr.bf16.mxu0 0
        %1639 = vmatpush1.bf16.msra.mxu0 0
        %1640 = vmatprep.subr.bf16.mxu0 0
        %1641 = vmatpush1.bf16.msra.mxu0 0
        %1642 = vmatprep.subr.bf16.mxu0 0
        %1643 = vmatpush1.bf16.msra.mxu0 0
        %1644 = vmatprep.subr.bf16.mxu0 0
        %1645 = vmatpush1.bf16.msra.mxu0 0
        %1646 = vmatprep.subr.bf16.mxu0 0
        %1647 = vmatpush1.bf16.msra.mxu0 0
        %1648 = vmatprep.subr.bf16.mxu0 0
        %1649 = vmatpush1.bf16.msra.mxu0 0
        %1650 = vmatprep.subr.bf16.mxu0 0
        %1651 = vmatpush1.bf16.msra.mxu0 0
        %1652 = vmatprep.subr.bf16.mxu0 0
        %1653 = vmatpush1.bf16.msra.mxu0 0
        %1654 = vmatprep.subr.bf16.mxu0 0
        %1655 = vmatpush1.bf16.msra.mxu0 0
        %1656 = vmatprep.subr.bf16.mxu0 0
        %1657 = vmatpush1.bf16.msra.mxu0 0
        %1658 = vmatprep.subr.bf16.mxu0 0
        %1659 = vmatpush1.bf16.msra.mxu0 0
        %1660 = vmatprep.subr.bf16.mxu0 0
        %1661 = vmatpush1.bf16.msra.mxu0 0
        %1662 = vmatprep.mubr.bf16.mxu0 0
        %1663 = vmatmul.mubr.bf16.gmra.mrb[0].mxu0 %v1100
        %v1664 = vpop.f32.mrb[0].mxu0
        %v1665 = vadd.f32 %v1504, %v1664
        %v1666 = vpop.f32.mrb[0].mxu0
        %v1667 = vpop.f32.mrb[0].mxu0
        %v1668 = vadd.f32 %v1507, %v1667
        %v1669 = vpop.f32.mrb[0].mxu0
        %1670 = vmatprep.mubr.bf16.mxu0 0
        %1671 = vmatmul.mubr.bf16.gmra.mrb[0].mxu0 %v1103
        %v1672 = vpop.f32.mrb[0].mxu0
        %v1673 = vadd.f32 %v1512, %v1672
        %v1674 = vpop.f32.mrb[0].mxu0
        %v1675 = vpop.f32.mrb[0].mxu0
        %v1676 = vadd.f32 %v1515, %v1675
        %v1677 = vpop.f32.mrb[0].mxu0
        %1678 = vmatprep.mubr.bf16.mxu0 0
        %1679 = vmatmul.mubr.bf16.gmra.mrb[0].mxu0 %v1106
        %v1680 = vpop.f32.mrb[0].mxu0
        %v1681 = vadd.f32 %v1520, %v1680
        %v1682 = vpop.f32.mrb[0].mxu0
        %v1683 = vpop.f32.mrb[0].mxu0
        %v1684 = vadd.f32 %v1523, %v1683
        %v1685 = vpop.f32.mrb[0].mxu0
        %1686 = vmatprep.mubr.bf16.mxu0 0
        %1687 = vmatmul.mubr.bf16.gmra.mrb[0].mxu0 %v1109
        %v1688 = vpop.f32.mrb[0].mxu0
        %v1689 = vadd.f32 %v1528, %v1688
        %v1690 = vpop.f32.mrb[0].mxu0
        %v1691 = vpop.f32.mrb[0].mxu0
        %v1692 = vadd.f32 %v1531, %v1691
        %v1693 = vpop.f32.mrb[0].mxu0
        %1694 = vmatprep.mubr.bf16.mxu0 0
        %1695 = vmatmul.mubr.bf16.gmra.mrb[0].mxu0 %v1112
        %v1696 = vpop.f32.mrb[0].mxu0
        %v1697 = vadd.f32 %v1536, %v1696
        %v1698 = vpop.f32.mrb[0].mxu0
        %v1699 = vpop.f32.mrb[0].mxu0
        %v1700 = vadd.f32 %v1539, %v1699
        %v1701 = vpop.f32.mrb[0].mxu0
        %1702 = vmatprep.mubr.bf16.mxu0 0
        %1703 = vmatmul.mubr.bf16.gmra.mrb[0].mxu0 %v1115
        %v1704 = vpop.f32.mrb[0].mxu0
        %v1705 = vadd.f32 %v1544, %v1704
        %v1706 = vpop.f32.mrb[0].mxu0
        %v1707 = vpop.f32.mrb[0].mxu0
        %v1708 = vadd.f32 %v1547, %v1707
        %v1709 = vpop.f32.mrb[0].mxu0
        %1710 = vmatprep.mubr.bf16.mxu0 0
        %1711 = vmatmul.mubr.bf16.gmra.mrb[0].mxu0 %v1118
        %v1712 = vpop.f32.mrb[0].mxu0
        %v1713 = vadd.f32 %v1552, %v1712
        %v1714 = vpop.f32.mrb[0].mxu0
        %v1715 = vpop.f32.mrb[0].mxu0
        %v1716 = vadd.f32 %v1555, %v1715
        %v1717 = vpop.f32.mrb[0].mxu0
        %1718 = vmatprep.mubr.bf16.mxu0 0
        %1719 = vmatmul.mubr.bf16.gmra.mrb[0].mxu0 %v1121
        %v1720 = vpop.f32.mrb[0].mxu0
        %v1721 = vadd.f32 %v1560, %v1720
        %v1722 = vpop.f32.mrb[0].mxu0
        %v1723 = vpop.f32.mrb[0].mxu0
        %v1724 = vadd.f32 %v1563, %v1723
        %v1725 = vpop.f32.mrb[0].mxu0
        %1726 = vmatprep.mubr.bf16.mxu0 0
        %1727 = vmatmul.mubr.bf16.gmra.mrb[0].mxu0 %v1124
        %v1728 = vpop.f32.mrb[0].mxu0
        %v1729 = vadd.f32 %v1568, %v1728
        %v1730 = vpop.f32.mrb[0].mxu0
        %v1731 = vpop.f32.mrb[0].mxu0
        %v1732 = vadd.f32 %v1571, %v1731
        %v1733 = vpop.f32.mrb[0].mxu0
        %1734 = vmatprep.mubr.bf16.mxu0 0
        %1735 = vmatmul.mubr.bf16.gmra.mrb[0].mxu0 %v1127
        %v1736 = vpop.f32.mrb[0].mxu0
        %v1737 = vadd.f32 %v1576, %v1736
        %v1738 = vpop.f32.mrb[0].mxu0
        %v1739 = vpop.f32.mrb[0].mxu0
        %v1740 = vadd.f32 %v1579, %v1739
        %v1741 = vpop.f32.mrb[0].mxu0
        %1742 = vmatprep.mubr.bf16.mxu0 0
        %1743 = vmatmul.mubr.bf16.gmra.mrb[0].mxu0 %v1130
        %v1744 = vpop.f32.mrb[0].mxu0
        %v1745 = vadd.f32 %v1584, %v1744
        %v1746 = vpop.f32.mrb[0].mxu0
        %v1747 = vpop.f32.mrb[0].mxu0
        %v1748 = vadd.f32 %v1587, %v1747
        %v1749 = vpop.f32.mrb[0].mxu0
        %1750 = vmatprep.mubr.bf16.mxu0 0
        %1751 = vmatmul.mubr.bf16.gmra.mrb[0].mxu0 %v1133
        %v1752 = vpop.f32.mrb[0].mxu0
        %v1753 = vadd.f32 %v1592, %v1752
        %v1754 = vpop.f32.mrb[0].mxu0
        %v1755 = vpop.f32.mrb[0].mxu0
        %v1756 = vadd.f32 %v1595, %v1755
        %v1757 = vpop.f32.mrb[0].mxu0
        %1758 = vmatprep.mubr.bf16.mxu0 0
        %1759 = vmatmul.mubr.bf16.gmra.mrb[0].mxu0 %v1136
        %v1760 = vpop.f32.mrb[0].mxu0
        %v1761 = vadd.f32 %v1600, %v1760
        %v1762 = vpop.f32.mrb[0].mxu0
        %v1763 = vpop.f32.mrb[0].mxu0
        %v1764 = vadd.f32 %v1603, %v1763
        %v1765 = vpop.f32.mrb[0].mxu0
        %1766 = vmatprep.mubr.bf16.mxu0 0
        %1767 = vmatmul.mubr.bf16.gmra.mrb[0].mxu0 %v1139
        %v1768 = vpop.f32.mrb[0].mxu0
        %v1769 = vadd.f32 %v1608, %v1768
        %v1770 = vpop.f32.mrb[0].mxu0
        %v1771 = vpop.f32.mrb[0].mxu0
        %v1772 = vadd.f32 %v1611, %v1771
        %v1773 = vpop.f32.mrb[0].mxu0
        %1774 = vmatprep.mubr.bf16.mxu0 0
        %1775 = vmatmul.mubr.bf16.gmra.mrb[0].mxu0 %v1142
        %v1776 = vpop.f32.mrb[0].mxu0
        %v1777 = vadd.f32 %v1616, %v1776
        %v1778 = vpop.f32.mrb[0].mxu0
        %v1779 = vpop.f32.mrb[0].mxu0
        %v1780 = vadd.f32 %v1619, %v1779
        %v1781 = vpop.f32.mrb[0].mxu0
        %1782 = vmatprep.mubr.bf16.mxu0 0
        %1783 = vmatmul.mubr.bf16.gmra.mrb[0].mxu0 %v1145
        %v1784 = vpop.f32.mrb[0].mxu0
        %v1785 = vadd.f32 %v1624, %v1784
        %v1786 = vpop.f32.mrb[0].mxu0
        %v1787 = vpop.f32.mrb[0].mxu0
        %v1788 = vadd.f32 %v1627, %v1787
        %v1789 = vpop.f32.mrb[0].mxu0
        %1790 = vdwg.mxu0
        %v1791 = vmax.f32 %v1665, 0.0
        %v1792 = vmax.f32 %v1668, 0.0
        %v1793 = vmax.f32 %v1673, 0.0
        %v1794 = vmax.f32 %v1676, 0.0
        %v1795 = vmax.f32 %v1681, 0.0
        %v1796 = vmax.f32 %v1684, 0.0
        %v1797 = vmax.f32 %v1689, 0.0
        %v1798 = vmax.f32 %v1692, 0.0
        %v1799 = vmax.f32 %v1697, 0.0
        %v1800 = vmax.f32 %v1700, 0.0
        %v1801 = vmax.f32 %v1705, 0.0
        %v1802 = vmax.f32 %v1708, 0.0
        %v1803 = vmax.f32 %v1713, 0.0
        %v1804 = vmax.f32 %v1716, 0.0
        %v1805 = vmax.f32 %v1721, 0.0
        %v1806 = vmax.f32 %v1724, 0.0
        %v1807 = vmax.f32 %v1729, 0.0
        %v1808 = vmax.f32 %v1732, 0.0
        %v1809 = vmax.f32 %v1737, 0.0
        %v1810 = vmax.f32 %v1740, 0.0
        %v1811 = vmax.f32 %v1745, 0.0
        %v1812 = vmax.f32 %v1748, 0.0
        %v1813 = vmax.f32 %v1753, 0.0
        %v1814 = vmax.f32 %v1756, 0.0
        %v1815 = vmax.f32 %v1761, 0.0
        %v1816 = vmax.f32 %v1764, 0.0
        %v1817 = vmax.f32 %v1769, 0.0
        %v1818 = vmax.f32 %v1772, 0.0
        %v1819 = vmax.f32 %v1777, 0.0
        %v1820 = vmax.f32 %v1780, 0.0
        %v1821 = vmax.f32 %v1785, 0.0
        %v1822 = vmax.f32 %v1788, 0.0
        %v1823 = vpack.c.bf16 %v1792, %v1791
        %v1824 = vpack.c.bf16 %v1794, %v1793
        %v1825 = vpack.c.bf16 %v1796, %v1795
        %v1826 = vpack.c.bf16 %v1798, %v1797
        %v1827 = vpack.c.bf16 %v1800, %v1799
        %v1828 = vpack.c.bf16 %v1802, %v1801
        %v1829 = vpack.c.bf16 %v1804, %v1803
        %v1830 = vpack.c.bf16 %v1806, %v1805
        %v1831 = vpack.c.bf16 %v1808, %v1807
        %v1832 = vpack.c.bf16 %v1810, %v1809
        %v1833 = vpack.c.bf16 %v1812, %v1811
        %v1834 = vpack.c.bf16 %v1814, %v1813
        %v1835 = vpack.c.bf16 %v1816, %v1815
        %v1836 = vpack.c.bf16 %v1818, %v1817
        %v1837 = vpack.c.bf16 %v1820, %v1819
        %v1838 = vpack.c.bf16 %v1822, %v1821
        %v1839 = vld [vmem:[%s3] sm:$0xf]
        %v1840 = vld [vmem:[%s3 + $0x4] sm:$0xf]
        %v1841 = vld [vmem:[%s3 + $0x8] sm:$0xf]
        %v1842 = vld [vmem:[%s3 + $0xc] sm:$0xf]
        %v1843 = vld [vmem:[%s3 + $0x10] sm:$0xf]
        %v1844 = vld [vmem:[%s3 + $0x14] sm:$0xf]
        %v1845 = vld [vmem:[%s3 + $0x18] sm:$0xf]
        %v1846 = vld [vmem:[%s3 + $0x1c] sm:$0xf]
        %v1847 = vld [vmem:[%s3 + $0x20] sm:$0xf]
        %v1848 = vld [vmem:[%s3 + $0x24] sm:$0xf]
        %v1849 = vld [vmem:[%s3 + $0x28] sm:$0xf]
        %v1850 = vld [vmem:[%s3 + $0x2c] sm:$0xf]
        %v1851 = vld [vmem:[%s3 + $0x30] sm:$0xf]
        %v1852 = vld [vmem:[%s3 + $0x34] sm:$0xf]
        %v1853 = vld [vmem:[%s3 + $0x38] sm:$0xf]
        %v1854 = vld [vmem:[%s3 + $0x3c] sm:$0xf]
        %v1855 = vld [vmem:[%s4] sm:$0x1]
        %v1857 = vlaneseq
        %v1858 = vshrl.u32 %v1857, 7
        %v1859 = vsub.s32 0, %v1858
        %v1860 = vrot.slane %v1855, %v1859
        %v1878 = vunpack.c.l.b16 %v1839
        %v1879 = vunpack.c.l.b16 %v1840
        %v1880 = vunpack.c.l.b16 %v1841
        %v1881 = vunpack.c.l.b16 %v1842
        %v1882 = vunpack.c.l.b16 %v1843
        %v1883 = vunpack.c.l.b16 %v1844
        %v1884 = vunpack.c.l.b16 %v1845
        %v1885 = vunpack.c.l.b16 %v1846
        %v1886 = vunpack.c.l.b16 %v1847
        %v1887 = vunpack.c.l.b16 %v1848
        %v1888 = vunpack.c.l.b16 %v1849
        %v1889 = vunpack.c.l.b16 %v1850
        %v1890 = vunpack.c.l.b16 %v1851
        %v1891 = vunpack.c.l.b16 %v1852
        %v1892 = vunpack.c.l.b16 %v1853
        %v1893 = vunpack.c.l.b16 %v1854
        %v1894 = vpack.c.b16 %v1879, %v1878
        %v1895 = vpack.c.b16 %v1881, %v1880
        %v1896 = vpack.c.b16 %v1883, %v1882
        %v1897 = vpack.c.b16 %v1885, %v1884
        %v1898 = vpack.c.b16 %v1887, %v1886
        %v1899 = vpack.c.b16 %v1889, %v1888
        %v1900 = vpack.c.b16 %v1891, %v1890
        %v1901 = vpack.c.b16 %v1893, %v1892
        %1910 = vmatprep.subr.bf16.mxu0 0
        %1911 = vmatpush1.bf16.msra.mxu0 %v1894
        %1912 = vmatprep.subr.bf16.mxu0 0
        %1913 = vmatpush1.bf16.msra.mxu0 %v1895
        %1914 = vmatprep.subr.bf16.mxu0 0
        %1915 = vmatpush1.bf16.msra.mxu0 %v1896
        %1916 = vmatprep.subr.bf16.mxu0 0
        %1917 = vmatpush1.bf16.msra.mxu0 %v1897
        %1918 = vmatprep.subr.bf16.mxu0 0
        %1919 = vmatpush1.bf16.msra.mxu0 %v1898
        %1920 = vmatprep.subr.bf16.mxu0 0
        %1921 = vmatpush1.bf16.msra.mxu0 %v1899
        %1922 = vmatprep.subr.bf16.mxu0 0
        %1923 = vmatpush1.bf16.msra.mxu0 %v1900
        %1924 = vmatprep.subr.bf16.mxu0 0
        %1925 = vmatpush1.bf16.msra.mxu0 %v1901
        %1926 = vmatprep.subr.bf16.mxu0 0
        %1927 = vmatpush1.bf16.msra.mxu0 0
        %1928 = vmatprep.subr.bf16.mxu0 0
        %1929 = vmatpush1.bf16.msra.mxu0 0
        %1930 = vmatprep.subr.bf16.mxu0 0
        %1931 = vmatpush1.bf16.msra.mxu0 0
        %1932 = vmatprep.subr.bf16.mxu0 0
        %1933 = vmatpush1.bf16.msra.mxu0 0
        %1934 = vmatprep.subr.bf16.mxu0 0
        %1935 = vmatpush1.bf16.msra.mxu0 0
        %1936 = vmatprep.subr.bf16.mxu0 0
        %1937 = vmatpush1.bf16.msra.mxu0 0
        %1938 = vmatprep.subr.bf16.mxu0 0
        %1939 = vmatpush1.bf16.msra.mxu0 0
        %1940 = vmatprep.subr.bf16.mxu0 0
        %1941 = vmatpush1.bf16.msra.mxu0 0
        %1942 = vmatprep.mubr.bf16.mxu0 0
        %1943 = vmatmul.mubr.bf16.gmra.mrb[0].mxu0 %v1823
        %v1944 = vpop.f32.mrb[0].mxu0
        %v1945 = vadd.f32 %v1860, %v1944
        %v1946 = vpop.f32.mrb[0].mxu0
        %v1947 = vpop.f32.mrb[0].mxu0
        %v1948 = vadd.f32 %v1860, %v1947
        %v1949 = vpop.f32.mrb[0].mxu0
        %1950 = vmatprep.mubr.bf16.mxu0 0
        %1951 = vmatmul.mubr.bf16.gmra.mrb[0].mxu0 %v1824
        %v1952 = vpop.f32.mrb[0].mxu0
        %v1953 = vadd.f32 %v1860, %v1952
        %v1954 = vpop.f32.mrb[0].mxu0
        %v1955 = vpop.f32.mrb[0].mxu0
        %v1956 = vadd.f32 %v1860, %v1955
        %v1957 = vpop.f32.mrb[0].mxu0
        %1958 = vmatprep.mubr.bf16.mxu0 0
        %1959 = vmatmul.mubr.bf16.gmra.mrb[0].mxu0 %v1825
        %v1960 = vpop.f32.mrb[0].mxu0
        %v1961 = vadd.f32 %v1860, %v1960
        %v1962 = vpop.f32.mrb[0].mxu0
        %v1963 = vpop.f32.mrb[0].mxu0
        %v1964 = vadd.f32 %v1860, %v1963
        %v1965 = vpop.f32.mrb[0].mxu0
        %1966 = vmatprep.mubr.bf16.mxu0 0
        %1967 = vmatmul.mubr.bf16.gmra.mrb[0].mxu0 %v1826
        %v1968 = vpop.f32.mrb[0].mxu0
        %v1969 = vadd.f32 %v1860, %v1968
        %v1970 = vpop.f32.mrb[0].mxu0
        %v1971 = vpop.f32.mrb[0].mxu0
        %v1972 = vadd.f32 %v1860, %v1971
        %v1973 = vpop.f32.mrb[0].mxu0
        %1974 = vmatprep.mubr.bf16.mxu0 0
        %1975 = vmatmul.mubr.bf16.gmra.mrb[0].mxu0 %v1827
        %v1976 = vpop.f32.mrb[0].mxu0
        %v1977 = vadd.f32 %v1860, %v1976
        %v1978 = vpop.f32.mrb[0].mxu0
        %v1979 = vpop.f32.mrb[0].mxu0
        %v1980 = vadd.f32 %v1860, %v1979
        %v1981 = vpop.f32.mrb[0].mxu0
        %1982 = vmatprep.mubr.bf16.mxu0 0
        %1983 = vmatmul.mubr.bf16.gmra.mrb[0].mxu0 %v1828
        %v1984 = vpop.f32.mrb[0].mxu0
        %v1985 = vadd.f32 %v1860, %v1984
        %v1986 = vpop.f32.mrb[0].mxu0
        %v1987 = vpop.f32.mrb[0].mxu0
        %v1988 = vadd.f32 %v1860, %v1987
        %v1989 = vpop.f32.mrb[0].mxu0
        %1990 = vmatprep.mubr.bf16.mxu0 0
        %1991 = vmatmul.mubr.bf16.gmra.mrb[0].mxu0 %v1829
        %v1992 = vpop.f32.mrb[0].mxu0
        %v1993 = vadd.f32 %v1860, %v1992
        %v1994 = vpop.f32.mrb[0].mxu0
        %v1995 = vpop.f32.mrb[0].mxu0
        %v1996 = vadd.f32 %v1860, %v1995
        %v1997 = vpop.f32.mrb[0].mxu0
        %1998 = vmatprep.mubr.bf16.mxu0 0
        %1999 = vmatmul.mubr.bf16.gmra.mrb[0].mxu0 %v1830
        %v2000 = vpop.f32.mrb[0].mxu0
        %v2001 = vadd.f32 %v1860, %v2000
        %v2002 = vpop.f32.mrb[0].mxu0
        %v2003 = vpop.f32.mrb[0].mxu0
        %v2004 = vadd.f32 %v1860, %v2003
        %v2005 = vpop.f32.mrb[0].mxu0
        %2006 = vmatprep.mubr.bf16.mxu0 0
        %2007 = vmatmul.mubr.bf16.gmra.mrb[0].mxu0 %v1831
        %v2008 = vpop.f32.mrb[0].mxu0
        %v2009 = vadd.f32 %v1860, %v2008
        %v2010 = vpop.f32.mrb[0].mxu0
        %v2011 = vpop.f32.mrb[0].mxu0
        %v2012 = vadd.f32 %v1860, %v2011
        %v2013 = vpop.f32.mrb[0].mxu0
        %2014 = vmatprep.mubr.bf16.mxu0 0
        %2015 = vmatmul.mubr.bf16.gmra.mrb[0].mxu0 %v1832
        %v2016 = vpop.f32.mrb[0].mxu0
        %v2017 = vadd.f32 %v1860, %v2016
        %v2018 = vpop.f32.mrb[0].mxu0
        %v2019 = vpop.f32.mrb[0].mxu0
        %v2020 = vadd.f32 %v1860, %v2019
        %v2021 = vpop.f32.mrb[0].mxu0
        %2022 = vmatprep.mubr.bf16.mxu0 0
        %2023 = vmatmul.mubr.bf16.gmra.mrb[0].mxu0 %v1833
        %v2024 = vpop.f32.mrb[0].mxu0
        %v2025 = vadd.f32 %v1860, %v2024
        %v2026 = vpop.f32.mrb[0].mxu0
        %v2027 = vpop.f32.mrb[0].mxu0
        %v2028 = vadd.f32 %v1860, %v2027
        %v2029 = vpop.f32.mrb[0].mxu0
        %2030 = vmatprep.mubr.bf16.mxu0 0
        %2031 = vmatmul.mubr.bf16.gmra.mrb[0].mxu0 %v1834
        %v2032 = vpop.f32.mrb[0].mxu0
        %v2033 = vadd.f32 %v1860, %v2032
        %v2034 = vpop.f32.mrb[0].mxu0
        %v2035 = vpop.f32.mrb[0].mxu0
        %v2036 = vadd.f32 %v1860, %v2035
        %v2037 = vpop.f32.mrb[0].mxu0
        %2038 = vmatprep.mubr.bf16.mxu0 0
        %2039 = vmatmul.mubr.bf16.gmra.mrb[0].mxu0 %v1835
        %v2040 = vpop.f32.mrb[0].mxu0
        %v2041 = vadd.f32 %v1860, %v2040
        %v2042 = vpop.f32.mrb[0].mxu0
        %v2043 = vpop.f32.mrb[0].mxu0
        %v2044 = vadd.f32 %v1860, %v2043
        %v2045 = vpop.f32.mrb[0].mxu0
        %2046 = vmatprep.mubr.bf16.mxu0 0
        %2047 = vmatmul.mubr.bf16.gmra.mrb[0].mxu0 %v1836
        %v2048 = vpop.f32.mrb[0].mxu0
        %v2049 = vadd.f32 %v1860, %v2048
        %v2050 = vpop.f32.mrb[0].mxu0
        %v2051 = vpop.f32.mrb[0].mxu0
        %v2052 = vadd.f32 %v1860, %v2051
        %v2053 = vpop.f32.mrb[0].mxu0
        %2054 = vmatprep.mubr.bf16.mxu0 0
        %2055 = vmatmul.mubr.bf16.gmra.mrb[0].mxu0 %v1837
        %v2056 = vpop.f32.mrb[0].mxu0
        %v2057 = vadd.f32 %v1860, %v2056
        %v2058 = vpop.f32.mrb[0].mxu0
        %v2059 = vpop.f32.mrb[0].mxu0
        %v2060 = vadd.f32 %v1860, %v2059
        %v2061 = vpop.f32.mrb[0].mxu0
        %2062 = vmatprep.mubr.bf16.mxu0 0
        %2063 = vmatmul.mubr.bf16.gmra.mrb[0].mxu0 %v1838
        %v2064 = vpop.f32.mrb[0].mxu0
        %v2065 = vadd.f32 %v1860, %v2064
        %v2066 = vpop.f32.mrb[0].mxu0
        %v2067 = vpop.f32.mrb[0].mxu0
        %v2068 = vadd.f32 %v1860, %v2067
        %v2069 = vpop.f32.mrb[0].mxu0
        %2070 = vdwg.mxu0
        %v2071 = vmax.f32 %v1945, 0.0
        %v2072 = vmax.f32 %v1948, 0.0
        %v2073 = vmax.f32 %v1953, 0.0
        %v2074 = vmax.f32 %v1956, 0.0
        %v2075 = vmax.f32 %v1961, 0.0
        %v2076 = vmax.f32 %v1964, 0.0
        %v2077 = vmax.f32 %v1969, 0.0
        %v2078 = vmax.f32 %v1972, 0.0
        %v2079 = vmax.f32 %v1977, 0.0
        %v2080 = vmax.f32 %v1980, 0.0
        %v2081 = vmax.f32 %v1985, 0.0
        %v2082 = vmax.f32 %v1988, 0.0
        %v2083 = vmax.f32 %v1993, 0.0
        %v2084 = vmax.f32 %v1996, 0.0
        %v2085 = vmax.f32 %v2001, 0.0
        %v2086 = vmax.f32 %v2004, 0.0
        %v2087 = vmax.f32 %v2009, 0.0
        %v2088 = vmax.f32 %v2012, 0.0
        %v2089 = vmax.f32 %v2017, 0.0
        %v2090 = vmax.f32 %v2020, 0.0
        %v2091 = vmax.f32 %v2025, 0.0
        %v2092 = vmax.f32 %v2028, 0.0
        %v2093 = vmax.f32 %v2033, 0.0
        %v2094 = vmax.f32 %v2036, 0.0
        %v2095 = vmax.f32 %v2041, 0.0
        %v2096 = vmax.f32 %v2044, 0.0
        %v2097 = vmax.f32 %v2049, 0.0
        %v2098 = vmax.f32 %v2052, 0.0
        %v2099 = vmax.f32 %v2057, 0.0
        %v2100 = vmax.f32 %v2060, 0.0
        %v2101 = vmax.f32 %v2065, 0.0
        %v2102 = vmax.f32 %v2068, 0.0
        %v2103 = vpack.c.bf16 %v2072, %v2071
        %v2104 = vpack.c.bf16 %v2074, %v2073
        %v2105 = vpack.c.bf16 %v2076, %v2075
        %v2106 = vpack.c.bf16 %v2078, %v2077
        %v2107 = vpack.c.bf16 %v2080, %v2079
        %v2108 = vpack.c.bf16 %v2082, %v2081
        %v2109 = vpack.c.bf16 %v2084, %v2083
        %v2110 = vpack.c.bf16 %v2086, %v2085
        %v2111 = vpack.c.bf16 %v2088, %v2087
        %v2112 = vpack.c.bf16 %v2090, %v2089
        %v2113 = vpack.c.bf16 %v2092, %v2091
        %v2114 = vpack.c.bf16 %v2094, %v2093
        %v2115 = vpack.c.bf16 %v2096, %v2095
        %v2116 = vpack.c.bf16 %v2098, %v2097
        %v2117 = vpack.c.bf16 %v2100, %v2099
        %v2118 = vpack.c.bf16 %v2102, %v2101
        %v2119 = vld [vmem:[%s5] sm:$0xf]
        %v2120 = vld [vmem:[%s5 + $0x4] sm:$0xf]
        %v2121 = vld [vmem:[%s5 + $0x8] sm:$0xf]
        %v2122 = vld [vmem:[%s5 + $0xc] sm:$0xf]
        %v2123 = vld [vmem:[%s5 + $0x10] sm:$0xf]
        %v2124 = vld [vmem:[%s5 + $0x14] sm:$0xf]
        %v2125 = vld [vmem:[%s5 + $0x18] sm:$0xf]
        %v2126 = vld [vmem:[%s5 + $0x1c] sm:$0xf]
        %v2127 = vld [vmem:[%s5 + $0x20] sm:$0xf]
        %v2128 = vld [vmem:[%s5 + $0x24] sm:$0xf]
        %v2129 = vld [vmem:[%s5 + $0x28] sm:$0xf]
        %v2130 = vld [vmem:[%s5 + $0x2c] sm:$0xf]
        %v2131 = vld [vmem:[%s5 + $0x30] sm:$0xf]
        %v2132 = vld [vmem:[%s5 + $0x34] sm:$0xf]
        %v2133 = vld [vmem:[%s5 + $0x38] sm:$0xf]
        %v2134 = vld [vmem:[%s5 + $0x3c] sm:$0xf]
        %v2135 = vld [vmem:[%s6] sm:$0x1]
        %v2137 = vlaneseq
        %v2138 = vshrl.u32 %v2137, 7
        %v2139 = vsub.s32 0, %v2138
        %v2140 = vrot.slane %v2135, %v2139
        %v2158 = vunpack.c.l.b16 %v2119
        %v2159 = vunpack.c.l.b16 %v2120
        %v2160 = vunpack.c.l.b16 %v2121
        %v2161 = vunpack.c.l.b16 %v2122
        %v2162 = vunpack.c.l.b16 %v2123
        %v2163 = vunpack.c.l.b16 %v2124
        %v2164 = vunpack.c.l.b16 %v2125
        %v2165 = vunpack.c.l.b16 %v2126
        %v2166 = vunpack.c.l.b16 %v2127
        %v2167 = vunpack.c.l.b16 %v2128
        %v2168 = vunpack.c.l.b16 %v2129
        %v2169 = vunpack.c.l.b16 %v2130
        %v2170 = vunpack.c.l.b16 %v2131
        %v2171 = vunpack.c.l.b16 %v2132
        %v2172 = vunpack.c.l.b16 %v2133
        %v2173 = vunpack.c.l.b16 %v2134
        %v2174 = vpack.c.b16 %v2159, %v2158
        %v2175 = vpack.c.b16 %v2161, %v2160
        %v2176 = vpack.c.b16 %v2163, %v2162
        %v2177 = vpack.c.b16 %v2165, %v2164
        %v2178 = vpack.c.b16 %v2167, %v2166
        %v2179 = vpack.c.b16 %v2169, %v2168
        %v2180 = vpack.c.b16 %v2171, %v2170
        %v2181 = vpack.c.b16 %v2173, %v2172
        %2190 = vmatprep.subr.bf16.mxu0 0
        %2191 = vmatpush1.bf16.msra.mxu0 %v2174
        %2192 = vmatprep.subr.bf16.mxu0 0
        %2193 = vmatpush1.bf16.msra.mxu0 %v2175
        %2194 = vmatprep.subr.bf16.mxu0 0
        %2195 = vmatpush1.bf16.msra.mxu0 %v2176
        %2196 = vmatprep.subr.bf16.mxu0 0
        %2197 = vmatpush1.bf16.msra.mxu0 %v2177
        %2198 = vmatprep.subr.bf16.mxu0 0
        %2199 = vmatpush1.bf16.msra.mxu0 %v2178
        %2200 = vmatprep.subr.bf16.mxu0 0
        %2201 = vmatpush1.bf16.msra.mxu0 %v2179
        %2202 = vmatprep.subr.bf16.mxu0 0
        %2203 = vmatpush1.bf16.msra.mxu0 %v2180
        %2204 = vmatprep.subr.bf16.mxu0 0
        %2205 = vmatpush1.bf16.msra.mxu0 %v2181
        %2206 = vmatprep.subr.bf16.mxu0 0
        %2207 = vmatpush1.bf16.msra.mxu0 0
        %2208 = vmatprep.subr.bf16.mxu0 0
        %2209 = vmatpush1.bf16.msra.mxu0 0
        %2210 = vmatprep.subr.bf16.mxu0 0
        %2211 = vmatpush1.bf16.msra.mxu0 0
        %2212 = vmatprep.subr.bf16.mxu0 0
        %2213 = vmatpush1.bf16.msra.mxu0 0
        %2214 = vmatprep.subr.bf16.mxu0 0
        %2215 = vmatpush1.bf16.msra.mxu0 0
        %2216 = vmatprep.subr.bf16.mxu0 0
        %2217 = vmatpush1.bf16.msra.mxu0 0
        %2218 = vmatprep.subr.bf16.mxu0 0
        %2219 = vmatpush1.bf16.msra.mxu0 0
        %2220 = vmatprep.subr.bf16.mxu0 0
        %2221 = vmatpush1.bf16.msra.mxu0 0
        %2222 = vmatprep.mubr.bf16.mxu0 0
        %2223 = vmatmul.mubr.bf16.gmra.mrb[0].mxu0 %v2103
        %v2224 = vpop.f32.mrb[0].mxu0
        %v2225 = vadd.f32 %v2140, %v2224
        %v2226 = vpop.f32.mrb[0].mxu0
        %v2227 = vpop.f32.mrb[0].mxu0
        %v2228 = vadd.f32 %v2140, %v2227
        %v2229 = vpop.f32.mrb[0].mxu0
        %2230 = vmatprep.mubr.bf16.mxu0 0
        %2231 = vmatmul.mubr.bf16.gmra.mrb[0].mxu0 %v2104
        %v2232 = vpop.f32.mrb[0].mxu0
        %v2233 = vadd.f32 %v2140, %v2232
        %v2234 = vpop.f32.mrb[0].mxu0
        %v2235 = vpop.f32.mrb[0].mxu0
        %v2236 = vadd.f32 %v2140, %v2235
        %v2237 = vpop.f32.mrb[0].mxu0
        %2238 = vmatprep.mubr.bf16.mxu0 0
        %2239 = vmatmul.mubr.bf16.gmra.mrb[0].mxu0 %v2105
        %v2240 = vpop.f32.mrb[0].mxu0
        %v2241 = vadd.f32 %v2140, %v2240
        %v2242 = vpop.f32.mrb[0].mxu0
        %v2243 = vpop.f32.mrb[0].mxu0
        %v2244 = vadd.f32 %v2140, %v2243
        %v2245 = vpop.f32.mrb[0].mxu0
        %2246 = vmatprep.mubr.bf16.mxu0 0
        %2247 = vmatmul.mubr.bf16.gmra.mrb[0].mxu0 %v2106
        %v2248 = vpop.f32.mrb[0].mxu0
        %v2249 = vadd.f32 %v2140, %v2248
        %v2250 = vpop.f32.mrb[0].mxu0
        %v2251 = vpop.f32.mrb[0].mxu0
        %v2252 = vadd.f32 %v2140, %v2251
        %v2253 = vpop.f32.mrb[0].mxu0
        %2254 = vmatprep.mubr.bf16.mxu0 0
        %2255 = vmatmul.mubr.bf16.gmra.mrb[0].mxu0 %v2107
        %v2256 = vpop.f32.mrb[0].mxu0
        %v2257 = vadd.f32 %v2140, %v2256
        %v2258 = vpop.f32.mrb[0].mxu0
        %v2259 = vpop.f32.mrb[0].mxu0
        %v2260 = vadd.f32 %v2140, %v2259
        %v2261 = vpop.f32.mrb[0].mxu0
        %2262 = vmatprep.mubr.bf16.mxu0 0
        %2263 = vmatmul.mubr.bf16.gmra.mrb[0].mxu0 %v2108
        %v2264 = vpop.f32.mrb[0].mxu0
        %v2265 = vadd.f32 %v2140, %v2264
        %v2266 = vpop.f32.mrb[0].mxu0
        %v2267 = vpop.f32.mrb[0].mxu0
        %v2268 = vadd.f32 %v2140, %v2267
        %v2269 = vpop.f32.mrb[0].mxu0
        %2270 = vmatprep.mubr.bf16.mxu0 0
        %2271 = vmatmul.mubr.bf16.gmra.mrb[0].mxu0 %v2109
        %v2272 = vpop.f32.mrb[0].mxu0
        %v2273 = vadd.f32 %v2140, %v2272
        %v2274 = vpop.f32.mrb[0].mxu0
        %v2275 = vpop.f32.mrb[0].mxu0
        %v2276 = vadd.f32 %v2140, %v2275
        %v2277 = vpop.f32.mrb[0].mxu0
        %2278 = vmatprep.mubr.bf16.mxu0 0
        %2279 = vmatmul.mubr.bf16.gmra.mrb[0].mxu0 %v2110
        %v2280 = vpop.f32.mrb[0].mxu0
        %v2281 = vadd.f32 %v2140, %v2280
        %v2282 = vpop.f32.mrb[0].mxu0
        %v2283 = vpop.f32.mrb[0].mxu0
        %v2284 = vadd.f32 %v2140, %v2283
        %v2285 = vpop.f32.mrb[0].mxu0
        %2286 = vmatprep.mubr.bf16.mxu0 0
        %2287 = vmatmul.mubr.bf16.gmra.mrb[0].mxu0 %v2111
        %v2288 = vpop.f32.mrb[0].mxu0
        %v2289 = vadd.f32 %v2140, %v2288
        %v2290 = vpop.f32.mrb[0].mxu0
        %v2291 = vpop.f32.mrb[0].mxu0
        %v2292 = vadd.f32 %v2140, %v2291
        %v2293 = vpop.f32.mrb[0].mxu0
        %2294 = vmatprep.mubr.bf16.mxu0 0
        %2295 = vmatmul.mubr.bf16.gmra.mrb[0].mxu0 %v2112
        %v2296 = vpop.f32.mrb[0].mxu0
        %v2297 = vadd.f32 %v2140, %v2296
        %v2298 = vpop.f32.mrb[0].mxu0
        %v2299 = vpop.f32.mrb[0].mxu0
        %v2300 = vadd.f32 %v2140, %v2299
        %v2301 = vpop.f32.mrb[0].mxu0
        %2302 = vmatprep.mubr.bf16.mxu0 0
        %2303 = vmatmul.mubr.bf16.gmra.mrb[0].mxu0 %v2113
        %v2304 = vpop.f32.mrb[0].mxu0
        %v2305 = vadd.f32 %v2140, %v2304
        %v2306 = vpop.f32.mrb[0].mxu0
        %v2307 = vpop.f32.mrb[0].mxu0
        %v2308 = vadd.f32 %v2140, %v2307
        %v2309 = vpop.f32.mrb[0].mxu0
        %2310 = vmatprep.mubr.bf16.mxu0 0
        %2311 = vmatmul.mubr.bf16.gmra.mrb[0].mxu0 %v2114
        %v2312 = vpop.f32.mrb[0].mxu0
        %v2313 = vadd.f32 %v2140, %v2312
        %v2314 = vpop.f32.mrb[0].mxu0
        %v2315 = vpop.f32.mrb[0].mxu0
        %v2316 = vadd.f32 %v2140, %v2315
        %v2317 = vpop.f32.mrb[0].mxu0
        %2318 = vmatprep.mubr.bf16.mxu0 0
        %2319 = vmatmul.mubr.bf16.gmra.mrb[0].mxu0 %v2115
        %v2320 = vpop.f32.mrb[0].mxu0
        %v2321 = vadd.f32 %v2140, %v2320
        %v2322 = vpop.f32.mrb[0].mxu0
        %v2323 = vpop.f32.mrb[0].mxu0
        %v2324 = vadd.f32 %v2140, %v2323
        %v2325 = vpop.f32.mrb[0].mxu0
        %2326 = vmatprep.mubr.bf16.mxu0 0
        %2327 = vmatmul.mubr.bf16.gmra.mrb[0].mxu0 %v2116
        %v2328 = vpop.f32.mrb[0].mxu0
        %v2329 = vadd.f32 %v2140, %v2328
        %v2330 = vpop.f32.mrb[0].mxu0
        %v2331 = vpop.f32.mrb[0].mxu0
        %v2332 = vadd.f32 %v2140, %v2331
        %v2333 = vpop.f32.mrb[0].mxu0
        %2334 = vmatprep.mubr.bf16.mxu0 0
        %2335 = vmatmul.mubr.bf16.gmra.mrb[0].mxu0 %v2117
        %v2336 = vpop.f32.mrb[0].mxu0
        %v2337 = vadd.f32 %v2140, %v2336
        %v2338 = vpop.f32.mrb[0].mxu0
        %v2339 = vpop.f32.mrb[0].mxu0
        %v2340 = vadd.f32 %v2140, %v2339
        %v2341 = vpop.f32.mrb[0].mxu0
        %2342 = vmatprep.mubr.bf16.mxu0 0
        %2343 = vmatmul.mubr.bf16.gmra.mrb[0].mxu0 %v2118
        %v2344 = vpop.f32.mrb[0].mxu0
        %v2345 = vadd.f32 %v2140, %v2344
        %v2346 = vpop.f32.mrb[0].mxu0
        %v2347 = vpop.f32.mrb[0].mxu0
        %v2348 = vadd.f32 %v2140, %v2347
        %v2349 = vpop.f32.mrb[0].mxu0
        %2350 = vdwg.mxu0
        %v2351 = vmax.f32 %v2225, 0.0
        %v2352 = vmax.f32 %v2228, 0.0
        %v2353 = vmax.f32 %v2233, 0.0
        %v2354 = vmax.f32 %v2236, 0.0
        %v2355 = vmax.f32 %v2241, 0.0
        %v2356 = vmax.f32 %v2244, 0.0
        %v2357 = vmax.f32 %v2249, 0.0
        %v2358 = vmax.f32 %v2252, 0.0
        %v2359 = vmax.f32 %v2257, 0.0
        %v2360 = vmax.f32 %v2260, 0.0
        %v2361 = vmax.f32 %v2265, 0.0
        %v2362 = vmax.f32 %v2268, 0.0
        %v2363 = vmax.f32 %v2273, 0.0
        %v2364 = vmax.f32 %v2276, 0.0
        %v2365 = vmax.f32 %v2281, 0.0
        %v2366 = vmax.f32 %v2284, 0.0
        %v2367 = vmax.f32 %v2289, 0.0
        %v2368 = vmax.f32 %v2292, 0.0
        %v2369 = vmax.f32 %v2297, 0.0
        %v2370 = vmax.f32 %v2300, 0.0
        %v2371 = vmax.f32 %v2305, 0.0
        %v2372 = vmax.f32 %v2308, 0.0
        %v2373 = vmax.f32 %v2313, 0.0
        %v2374 = vmax.f32 %v2316, 0.0
        %v2375 = vmax.f32 %v2321, 0.0
        %v2376 = vmax.f32 %v2324, 0.0
        %v2377 = vmax.f32 %v2329, 0.0
        %v2378 = vmax.f32 %v2332, 0.0
        %v2379 = vmax.f32 %v2337, 0.0
        %v2380 = vmax.f32 %v2340, 0.0
        %v2381 = vmax.f32 %v2345, 0.0
        %v2382 = vmax.f32 %v2348, 0.0
        %v2383 = vpack.c.bf16 %v2352, %v2351
        %v2384 = vpack.c.bf16 %v2354, %v2353
        %v2385 = vpack.c.bf16 %v2356, %v2355
        %v2386 = vpack.c.bf16 %v2358, %v2357
        %v2387 = vpack.c.bf16 %v2360, %v2359
        %v2388 = vpack.c.bf16 %v2362, %v2361
        %v2389 = vpack.c.bf16 %v2364, %v2363
        %v2390 = vpack.c.bf16 %v2366, %v2365
        %v2391 = vpack.c.bf16 %v2368, %v2367
        %v2392 = vpack.c.bf16 %v2370, %v2369
        %v2393 = vpack.c.bf16 %v2372, %v2371
        %v2394 = vpack.c.bf16 %v2374, %v2373
        %v2395 = vpack.c.bf16 %v2376, %v2375
        %v2396 = vpack.c.bf16 %v2378, %v2377
        %v2397 = vpack.c.bf16 %v2380, %v2379
        %v2398 = vpack.c.bf16 %v2382, %v2381
        %v2399 = vld [vmem:[%s7] sm:$0xf]
        %v2400 = vld [vmem:[%s7 + $0x4] sm:$0xf]
        %v2401 = vld [vmem:[%s7 + $0x8] sm:$0xf]
        %v2402 = vld [vmem:[%s7 + $0xc] sm:$0xf]
        %v2403 = vld [vmem:[%s7 + $0x10] sm:$0xf]
        %v2404 = vld [vmem:[%s7 + $0x14] sm:$0xf]
        %v2405 = vld [vmem:[%s7 + $0x18] sm:$0xf]
        %v2406 = vld [vmem:[%s7 + $0x1c] sm:$0xf]
        %v2407 = vld [vmem:[%s7 + $0x20] sm:$0xf]
        %v2408 = vld [vmem:[%s7 + $0x24] sm:$0xf]
        %v2409 = vld [vmem:[%s7 + $0x28] sm:$0xf]
        %v2410 = vld [vmem:[%s7 + $0x2c] sm:$0xf]
        %v2411 = vld [vmem:[%s7 + $0x30] sm:$0xf]
        %v2412 = vld [vmem:[%s7 + $0x34] sm:$0xf]
        %v2413 = vld [vmem:[%s7 + $0x38] sm:$0xf]
        %v2414 = vld [vmem:[%s7 + $0x3c] sm:$0xf]
        %v2415 = vld [vmem:[%s8] sm:$0x1]
        %v2417 = vlaneseq
        %v2418 = vshrl.u32 %v2417, 7
        %v2419 = vsub.s32 0, %v2418
        %v2420 = vrot.slane %v2415, %v2419
        %v2438 = vunpack.c.l.b16 %v2399
        %v2439 = vunpack.c.l.b16 %v2400
        %v2440 = vunpack.c.l.b16 %v2401
        %v2441 = vunpack.c.l.b16 %v2402
        %v2442 = vunpack.c.l.b16 %v2403
        %v2443 = vunpack.c.l.b16 %v2404
        %v2444 = vunpack.c.l.b16 %v2405
        %v2445 = vunpack.c.l.b16 %v2406
        %v2446 = vunpack.c.l.b16 %v2407
        %v2447 = vunpack.c.l.b16 %v2408
        %v2448 = vunpack.c.l.b16 %v2409
        %v2449 = vunpack.c.l.b16 %v2410
        %v2450 = vunpack.c.l.b16 %v2411
        %v2451 = vunpack.c.l.b16 %v2412
        %v2452 = vunpack.c.l.b16 %v2413
        %v2453 = vunpack.c.l.b16 %v2414
        %v2454 = vpack.c.b16 %v2439, %v2438
        %v2455 = vpack.c.b16 %v2441, %v2440
        %v2456 = vpack.c.b16 %v2443, %v2442
        %v2457 = vpack.c.b16 %v2445, %v2444
        %v2458 = vpack.c.b16 %v2447, %v2446
        %v2459 = vpack.c.b16 %v2449, %v2448
        %v2460 = vpack.c.b16 %v2451, %v2450
        %v2461 = vpack.c.b16 %v2453, %v2452
        %2470 = vmatprep.subr.bf16.mxu0 0
        %2471 = vmatpush1.bf16.msra.mxu0 %v2454
        %2472 = vmatprep.subr.bf16.mxu0 0
        %2473 = vmatpush1.bf16.msra.mxu0 %v2455
        %2474 = vmatprep.subr.bf16.mxu0 0
        %2475 = vmatpush1.bf16.msra.mxu0 %v2456
        %2476 = vmatprep.subr.bf16.mxu0 0
        %2477 = vmatpush1.bf16.msra.mxu0 %v2457
        %2478 = vmatprep.subr.bf16.mxu0 0
        %2479 = vmatpush1.bf16.msra.mxu0 %v2458
        %2480 = vmatprep.subr.bf16.mxu0 0
        %2481 = vmatpush1.bf16.msra.mxu0 %v2459
        %2482 = vmatprep.subr.bf16.mxu0 0
        %2483 = vmatpush1.bf16.msra.mxu0 %v2460
        %2484 = vmatprep.subr.bf16.mxu0 0
        %2485 = vmatpush1.bf16.msra.mxu0 %v2461
        %2486 = vmatprep.subr.bf16.mxu0 0
        %2487 = vmatpush1.bf16.msra.mxu0 0
        %2488 = vmatprep.subr.bf16.mxu0 0
        %2489 = vmatpush1.bf16.msra.mxu0 0
        %2490 = vmatprep.subr.bf16.mxu0 0
        %2491 = vmatpush1.bf16.msra.mxu0 0
        %2492 = vmatprep.subr.bf16.mxu0 0
        %2493 = vmatpush1.bf16.msra.mxu0 0
        %2494 = vmatprep.subr.bf16.mxu0 0
        %2495 = vmatpush1.bf16.msra.mxu0 0
        %2496 = vmatprep.subr.bf16.mxu0 0
        %2497 = vmatpush1.bf16.msra.mxu0 0
        %2498 = vmatprep.subr.bf16.mxu0 0
        %2499 = vmatpush1.bf16.msra.mxu0 0
        %2500 = vmatprep.subr.bf16.mxu0 0
        %2501 = vmatpush1.bf16.msra.mxu0 0
        %2502 = vmatprep.mubr.bf16.mxu0 0
        %2503 = vmatmul.mubr.bf16.gmra.mrb[0].mxu0 %v2383
        %v2504 = vpop.f32.mrb[0].mxu0
        %v2505 = vadd.f32 %v2420, %v2504
        %v2506 = vpop.f32.mrb[0].mxu0
        %v2507 = vpop.f32.mrb[0].mxu0
        %v2508 = vadd.f32 %v2420, %v2507
        %v2509 = vpop.f32.mrb[0].mxu0
        %2510 = vmatprep.mubr.bf16.mxu0 0
        %2511 = vmatmul.mubr.bf16.gmra.mrb[0].mxu0 %v2384
        %v2512 = vpop.f32.mrb[0].mxu0
        %v2513 = vadd.f32 %v2420, %v2512
        %v2514 = vpop.f32.mrb[0].mxu0
        %v2515 = vpop.f32.mrb[0].mxu0
        %v2516 = vadd.f32 %v2420, %v2515
        %v2517 = vpop.f32.mrb[0].mxu0
        %2518 = vmatprep.mubr.bf16.mxu0 0
        %2519 = vmatmul.mubr.bf16.gmra.mrb[0].mxu0 %v2385
        %v2520 = vpop.f32.mrb[0].mxu0
        %v2521 = vadd.f32 %v2420, %v2520
        %v2522 = vpop.f32.mrb[0].mxu0
        %v2523 = vpop.f32.mrb[0].mxu0
        %v2524 = vadd.f32 %v2420, %v2523
        %v2525 = vpop.f32.mrb[0].mxu0
        %2526 = vmatprep.mubr.bf16.mxu0 0
        %2527 = vmatmul.mubr.bf16.gmra.mrb[0].mxu0 %v2386
        %v2528 = vpop.f32.mrb[0].mxu0
        %v2529 = vadd.f32 %v2420, %v2528
        %v2530 = vpop.f32.mrb[0].mxu0
        %v2531 = vpop.f32.mrb[0].mxu0
        %v2532 = vadd.f32 %v2420, %v2531
        %v2533 = vpop.f32.mrb[0].mxu0
        %2534 = vmatprep.mubr.bf16.mxu0 0
        %2535 = vmatmul.mubr.bf16.gmra.mrb[0].mxu0 %v2387
        %v2536 = vpop.f32.mrb[0].mxu0
        %v2537 = vadd.f32 %v2420, %v2536
        %v2538 = vpop.f32.mrb[0].mxu0
        %v2539 = vpop.f32.mrb[0].mxu0
        %v2540 = vadd.f32 %v2420, %v2539
        %v2541 = vpop.f32.mrb[0].mxu0
        %2542 = vmatprep.mubr.bf16.mxu0 0
        %2543 = vmatmul.mubr.bf16.gmra.mrb[0].mxu0 %v2388
        %v2544 = vpop.f32.mrb[0].mxu0
        %v2545 = vadd.f32 %v2420, %v2544
        %v2546 = vpop.f32.mrb[0].mxu0
        %v2547 = vpop.f32.mrb[0].mxu0
        %v2548 = vadd.f32 %v2420, %v2547
        %v2549 = vpop.f32.mrb[0].mxu0
        %2550 = vmatprep.mubr.bf16.mxu0 0
        %2551 = vmatmul.mubr.bf16.gmra.mrb[0].mxu0 %v2389
        %v2552 = vpop.f32.mrb[0].mxu0
        %v2553 = vadd.f32 %v2420, %v2552
        %v2554 = vpop.f32.mrb[0].mxu0
        %v2555 = vpop.f32.mrb[0].mxu0
        %v2556 = vadd.f32 %v2420, %v2555
        %v2557 = vpop.f32.mrb[0].mxu0
        %2558 = vmatprep.mubr.bf16.mxu0 0
        %2559 = vmatmul.mubr.bf16.gmra.mrb[0].mxu0 %v2390
        %v2560 = vpop.f32.mrb[0].mxu0
        %v2561 = vadd.f32 %v2420, %v2560
        %v2562 = vpop.f32.mrb[0].mxu0
        %v2563 = vpop.f32.mrb[0].mxu0
        %v2564 = vadd.f32 %v2420, %v2563
        %v2565 = vpop.f32.mrb[0].mxu0
        %2566 = vmatprep.mubr.bf16.mxu0 0
        %2567 = vmatmul.mubr.bf16.gmra.mrb[0].mxu0 %v2391
        %v2568 = vpop.f32.mrb[0].mxu0
        %v2569 = vadd.f32 %v2420, %v2568
        %v2570 = vpop.f32.mrb[0].mxu0
        %v2571 = vpop.f32.mrb[0].mxu0
        %v2572 = vadd.f32 %v2420, %v2571
        %v2573 = vpop.f32.mrb[0].mxu0
        %2574 = vmatprep.mubr.bf16.mxu0 0
        %2575 = vmatmul.mubr.bf16.gmra.mrb[0].mxu0 %v2392
        %v2576 = vpop.f32.mrb[0].mxu0
        %v2577 = vadd.f32 %v2420, %v2576
        %v2578 = vpop.f32.mrb[0].mxu0
        %v2579 = vpop.f32.mrb[0].mxu0
        %v2580 = vadd.f32 %v2420, %v2579
        %v2581 = vpop.f32.mrb[0].mxu0
        %2582 = vmatprep.mubr.bf16.mxu0 0
        %2583 = vmatmul.mubr.bf16.gmra.mrb[0].mxu0 %v2393
        %v2584 = vpop.f32.mrb[0].mxu0
        %v2585 = vadd.f32 %v2420, %v2584
        %v2586 = vpop.f32.mrb[0].mxu0
        %v2587 = vpop.f32.mrb[0].mxu0
        %v2588 = vadd.f32 %v2420, %v2587
        %v2589 = vpop.f32.mrb[0].mxu0
        %2590 = vmatprep.mubr.bf16.mxu0 0
        %2591 = vmatmul.mubr.bf16.gmra.mrb[0].mxu0 %v2394
        %v2592 = vpop.f32.mrb[0].mxu0
        %v2593 = vadd.f32 %v2420, %v2592
        %v2594 = vpop.f32.mrb[0].mxu0
        %v2595 = vpop.f32.mrb[0].mxu0
        %v2596 = vadd.f32 %v2420, %v2595
        %v2597 = vpop.f32.mrb[0].mxu0
        %2598 = vmatprep.mubr.bf16.mxu0 0
        %2599 = vmatmul.mubr.bf16.gmra.mrb[0].mxu0 %v2395
        %v2600 = vpop.f32.mrb[0].mxu0
        %v2601 = vadd.f32 %v2420, %v2600
        %v2602 = vpop.f32.mrb[0].mxu0
        %v2603 = vpop.f32.mrb[0].mxu0
        %v2604 = vadd.f32 %v2420, %v2603
        %v2605 = vpop.f32.mrb[0].mxu0
        %2606 = vmatprep.mubr.bf16.mxu0 0
        %2607 = vmatmul.mubr.bf16.gmra.mrb[0].mxu0 %v2396
        %v2608 = vpop.f32.mrb[0].mxu0
        %v2609 = vadd.f32 %v2420, %v2608
        %v2610 = vpop.f32.mrb[0].mxu0
        %v2611 = vpop.f32.mrb[0].mxu0
        %v2612 = vadd.f32 %v2420, %v2611
        %v2613 = vpop.f32.mrb[0].mxu0
        %2614 = vmatprep.mubr.bf16.mxu0 0
        %2615 = vmatmul.mubr.bf16.gmra.mrb[0].mxu0 %v2397
        %v2616 = vpop.f32.mrb[0].mxu0
        %v2617 = vadd.f32 %v2420, %v2616
        %v2618 = vpop.f32.mrb[0].mxu0
        %v2619 = vpop.f32.mrb[0].mxu0
        %v2620 = vadd.f32 %v2420, %v2619
        %v2621 = vpop.f32.mrb[0].mxu0
        %2622 = vmatprep.mubr.bf16.mxu0 0
        %2623 = vmatmul.mubr.bf16.gmra.mrb[0].mxu0 %v2398
        %v2624 = vpop.f32.mrb[0].mxu0
        %v2625 = vadd.f32 %v2420, %v2624
        %v2626 = vpop.f32.mrb[0].mxu0
        %v2627 = vpop.f32.mrb[0].mxu0
        %v2628 = vadd.f32 %v2420, %v2627
        %v2629 = vpop.f32.mrb[0].mxu0
        %2630 = vdwg.mxu0
        %v2631 = vlaneseq
        %v2632 = vand.u32 %v2631, 127
        %vm2633 = vcmp.lt.s32.totalorder %v2632, 10
        %v2634 = vsel %vm2633, %v2505, -1e+30
        %v2635 = vsel %vm2633, %v2508, -1e+30
        %v2636 = vsel %vm2633, %v2513, -1e+30
        %v2637 = vsel %vm2633, %v2516, -1e+30
        %v2638 = vsel %vm2633, %v2521, -1e+30
        %v2639 = vsel %vm2633, %v2524, -1e+30
        %v2640 = vsel %vm2633, %v2529, -1e+30
        %v2641 = vsel %vm2633, %v2532, -1e+30
        %v2642 = vsel %vm2633, %v2537, -1e+30
        %v2643 = vsel %vm2633, %v2540, -1e+30
        %v2644 = vsel %vm2633, %v2545, -1e+30
        %v2645 = vsel %vm2633, %v2548, -1e+30
        %v2646 = vsel %vm2633, %v2553, -1e+30
        %v2647 = vsel %vm2633, %v2556, -1e+30
        %v2648 = vsel %vm2633, %v2561, -1e+30
        %v2649 = vsel %vm2633, %v2564, -1e+30
        %v2650 = vsel %vm2633, %v2569, -1e+30
        %v2651 = vsel %vm2633, %v2572, -1e+30
        %v2652 = vsel %vm2633, %v2577, -1e+30
        %v2653 = vsel %vm2633, %v2580, -1e+30
        %v2654 = vsel %vm2633, %v2585, -1e+30
        %v2655 = vsel %vm2633, %v2588, -1e+30
        %v2656 = vsel %vm2633, %v2593, -1e+30
        %v2657 = vsel %vm2633, %v2596, -1e+30
        %v2658 = vsel %vm2633, %v2601, -1e+30
        %v2659 = vsel %vm2633, %v2604, -1e+30
        %v2660 = vsel %vm2633, %v2609, -1e+30
        %v2661 = vsel %vm2633, %v2612, -1e+30
        %v2662 = vsel %vm2633, %v2617, -1e+30
        %v2663 = vsel %vm2633, %v2620, -1e+30
        %v2664 = vsel %vm2633, %v2625, -1e+30
        %v2665 = vsel %vm2633, %v2628, -1e+30
        %2666 = vmax.xlane.f32.xlu0 %v2634
        %v2667 = vpop.xlane.xlu0 %2666
        %2668 = vmax.xlane.f32.xlu0 %v2635
        %v2669 = vpop.xlane.xlu0 %2668
        %2670 = vmax.xlane.f32.xlu0 %v2636
        %v2671 = vpop.xlane.xlu0 %2670
        %2672 = vmax.xlane.f32.xlu0 %v2637
        %v2673 = vpop.xlane.xlu0 %2672
        %2674 = vmax.xlane.f32.xlu0 %v2638
        %v2675 = vpop.xlane.xlu0 %2674
        %2676 = vmax.xlane.f32.xlu0 %v2639
        %v2677 = vpop.xlane.xlu0 %2676
        %2678 = vmax.xlane.f32.xlu0 %v2640
        %v2679 = vpop.xlane.xlu0 %2678
        %2680 = vmax.xlane.f32.xlu0 %v2641
        %v2681 = vpop.xlane.xlu0 %2680
        %2682 = vmax.xlane.f32.xlu0 %v2642
        %v2683 = vpop.xlane.xlu0 %2682
        %2684 = vmax.xlane.f32.xlu0 %v2643
        %v2685 = vpop.xlane.xlu0 %2684
        %2686 = vmax.xlane.f32.xlu0 %v2644
        %v2687 = vpop.xlane.xlu0 %2686
        %2688 = vmax.xlane.f32.xlu0 %v2645
        %v2689 = vpop.xlane.xlu0 %2688
        %2690 = vmax.xlane.f32.xlu0 %v2646
        %v2691 = vpop.xlane.xlu0 %2690
        %2692 = vmax.xlane.f32.xlu0 %v2647
        %v2693 = vpop.xlane.xlu0 %2692
        %2694 = vmax.xlane.f32.xlu0 %v2648
        %v2695 = vpop.xlane.xlu0 %2694
        %2696 = vmax.xlane.f32.xlu0 %v2649
        %v2697 = vpop.xlane.xlu0 %2696
        %2698 = vmax.xlane.f32.xlu0 %v2650
        %v2699 = vpop.xlane.xlu0 %2698
        %2700 = vmax.xlane.f32.xlu0 %v2651
        %v2701 = vpop.xlane.xlu0 %2700
        %2702 = vmax.xlane.f32.xlu0 %v2652
        %v2703 = vpop.xlane.xlu0 %2702
        %2704 = vmax.xlane.f32.xlu0 %v2653
        %v2705 = vpop.xlane.xlu0 %2704
        %2706 = vmax.xlane.f32.xlu0 %v2654
        %v2707 = vpop.xlane.xlu0 %2706
        %2708 = vmax.xlane.f32.xlu0 %v2655
        %v2709 = vpop.xlane.xlu0 %2708
        %2710 = vmax.xlane.f32.xlu0 %v2656
        %v2711 = vpop.xlane.xlu0 %2710
        %2712 = vmax.xlane.f32.xlu0 %v2657
        %v2713 = vpop.xlane.xlu0 %2712
        %2714 = vmax.xlane.f32.xlu0 %v2658
        %v2715 = vpop.xlane.xlu0 %2714
        %2716 = vmax.xlane.f32.xlu0 %v2659
        %v2717 = vpop.xlane.xlu0 %2716
        %2718 = vmax.xlane.f32.xlu0 %v2660
        %v2719 = vpop.xlane.xlu0 %2718
        %2720 = vmax.xlane.f32.xlu0 %v2661
        %v2721 = vpop.xlane.xlu0 %2720
        %2722 = vmax.xlane.f32.xlu0 %v2662
        %v2723 = vpop.xlane.xlu0 %2722
        %2724 = vmax.xlane.f32.xlu0 %v2663
        %v2725 = vpop.xlane.xlu0 %2724
        %2726 = vmax.xlane.f32.xlu0 %v2664
        %v2727 = vpop.xlane.xlu0 %2726
        %2728 = vmax.xlane.f32.xlu0 %v2665
        %v2729 = vpop.xlane.xlu0 %2728
        %v2730 = vsub.f32 %v2634, %v2667
        %v2731 = vsub.f32 %v2635, %v2669
        %v2732 = vsub.f32 %v2636, %v2671
        %v2733 = vsub.f32 %v2637, %v2673
        %v2734 = vsub.f32 %v2638, %v2675
        %v2735 = vsub.f32 %v2639, %v2677
        %v2736 = vsub.f32 %v2640, %v2679
        %v2737 = vsub.f32 %v2641, %v2681
        %v2738 = vsub.f32 %v2642, %v2683
        %v2739 = vsub.f32 %v2643, %v2685
        %v2740 = vsub.f32 %v2644, %v2687
        %v2741 = vsub.f32 %v2645, %v2689
        %v2742 = vsub.f32 %v2646, %v2691
        %v2743 = vsub.f32 %v2647, %v2693
        %v2744 = vsub.f32 %v2648, %v2695
        %v2745 = vsub.f32 %v2649, %v2697
        %v2746 = vsub.f32 %v2650, %v2699
        %v2747 = vsub.f32 %v2651, %v2701
        %v2748 = vsub.f32 %v2652, %v2703
        %v2749 = vsub.f32 %v2653, %v2705
        %v2750 = vsub.f32 %v2654, %v2707
        %v2751 = vsub.f32 %v2655, %v2709
        %v2752 = vsub.f32 %v2656, %v2711
        %v2753 = vsub.f32 %v2657, %v2713
        %v2754 = vsub.f32 %v2658, %v2715
        %v2755 = vsub.f32 %v2659, %v2717
        %v2756 = vsub.f32 %v2660, %v2719
        %v2757 = vsub.f32 %v2661, %v2721
        %v2758 = vsub.f32 %v2662, %v2723
        %v2759 = vsub.f32 %v2663, %v2725
        %v2760 = vsub.f32 %v2664, %v2727
        %v2761 = vsub.f32 %v2665, %v2729
        %v2762 = vmul.f32 %v2730, 1.442695
        %v2763 = vpow.pop %v2762
        %v2764 = vmul.f32 %v2731, 1.442695
        %v2765 = vpow.pop %v2764
        %v2766 = vmul.f32 %v2732, 1.442695
        %v2767 = vpow.pop %v2766
        %v2768 = vmul.f32 %v2733, 1.442695
        %v2769 = vpow.pop %v2768
        %v2770 = vmul.f32 %v2734, 1.442695
        %v2771 = vpow.pop %v2770
        %v2772 = vmul.f32 %v2735, 1.442695
        %v2773 = vpow.pop %v2772
        %v2774 = vmul.f32 %v2736, 1.442695
        %v2775 = vpow.pop %v2774
        %v2776 = vmul.f32 %v2737, 1.442695
        %v2777 = vpow.pop %v2776
        %v2778 = vmul.f32 %v2738, 1.442695
        %v2779 = vpow.pop %v2778
        %v2780 = vmul.f32 %v2739, 1.442695
        %v2781 = vpow.pop %v2780
        %v2782 = vmul.f32 %v2740, 1.442695
        %v2783 = vpow.pop %v2782
        %v2784 = vmul.f32 %v2741, 1.442695
        %v2785 = vpow.pop %v2784
        %v2786 = vmul.f32 %v2742, 1.442695
        %v2787 = vpow.pop %v2786
        %v2788 = vmul.f32 %v2743, 1.442695
        %v2789 = vpow.pop %v2788
        %v2790 = vmul.f32 %v2744, 1.442695
        %v2791 = vpow.pop %v2790
        %v2792 = vmul.f32 %v2745, 1.442695
        %v2793 = vpow.pop %v2792
        %v2794 = vmul.f32 %v2746, 1.442695
        %v2795 = vpow.pop %v2794
        %v2796 = vmul.f32 %v2747, 1.442695
        %v2797 = vpow.pop %v2796
        %v2798 = vmul.f32 %v2748, 1.442695
        %v2799 = vpow.pop %v2798
        %v2800 = vmul.f32 %v2749, 1.442695
        %v2801 = vpow.pop %v2800
        %v2802 = vmul.f32 %v2750, 1.442695
        %v2803 = vpow.pop %v2802
        %v2804 = vmul.f32 %v2751, 1.442695
        %v2805 = vpow.pop %v2804
        %v2806 = vmul.f32 %v2752, 1.442695
        %v2807 = vpow.pop %v2806
        %v2808 = vmul.f32 %v2753, 1.442695
        %v2809 = vpow.pop %v2808
        %v2810 = vmul.f32 %v2754, 1.442695
        %v2811 = vpow.pop %v2810
        %v2812 = vmul.f32 %v2755, 1.442695
        %v2813 = vpow.pop %v2812
        %v2814 = vmul.f32 %v2756, 1.442695
        %v2815 = vpow.pop %v2814
        %v2816 = vmul.f32 %v2757, 1.442695
        %v2817 = vpow.pop %v2816
        %v2818 = vmul.f32 %v2758, 1.442695
        %v2819 = vpow.pop %v2818
        %v2820 = vmul.f32 %v2759, 1.442695
        %v2821 = vpow.pop %v2820
        %v2822 = vmul.f32 %v2760, 1.442695
        %v2823 = vpow.pop %v2822
        %v2824 = vmul.f32 %v2761, 1.442695
        %v2825 = vpow.pop %v2824
        %2826 = vadd.xlane.f32.xlu0 %v2763
        %v2827 = vpop.xlane.xlu0 %2826
        %2828 = vadd.xlane.f32.xlu0 %v2765
        %v2829 = vpop.xlane.xlu0 %2828
        %2830 = vadd.xlane.f32.xlu0 %v2767
        %v2831 = vpop.xlane.xlu0 %2830
        %2832 = vadd.xlane.f32.xlu0 %v2769
        %v2833 = vpop.xlane.xlu0 %2832
        %2834 = vadd.xlane.f32.xlu0 %v2771
        %v2835 = vpop.xlane.xlu0 %2834
        %2836 = vadd.xlane.f32.xlu0 %v2773
        %v2837 = vpop.xlane.xlu0 %2836
        %2838 = vadd.xlane.f32.xlu0 %v2775
        %v2839 = vpop.xlane.xlu0 %2838
        %2840 = vadd.xlane.f32.xlu0 %v2777
        %v2841 = vpop.xlane.xlu0 %2840
        %2842 = vadd.xlane.f32.xlu0 %v2779
        %v2843 = vpop.xlane.xlu0 %2842
        %2844 = vadd.xlane.f32.xlu0 %v2781
        %v2845 = vpop.xlane.xlu0 %2844
        %2846 = vadd.xlane.f32.xlu0 %v2783
        %v2847 = vpop.xlane.xlu0 %2846
        %2848 = vadd.xlane.f32.xlu0 %v2785
        %v2849 = vpop.xlane.xlu0 %2848
        %2850 = vadd.xlane.f32.xlu0 %v2787
        %v2851 = vpop.xlane.xlu0 %2850
        %2852 = vadd.xlane.f32.xlu0 %v2789
        %v2853 = vpop.xlane.xlu0 %2852
        %2854 = vadd.xlane.f32.xlu0 %v2791
        %v2855 = vpop.xlane.xlu0 %2854
        %2856 = vadd.xlane.f32.xlu0 %v2793
        %v2857 = vpop.xlane.xlu0 %2856
        %2858 = vadd.xlane.f32.xlu0 %v2795
        %v2859 = vpop.xlane.xlu0 %2858
        %2860 = vadd.xlane.f32.xlu0 %v2797
        %v2861 = vpop.xlane.xlu0 %2860
        %2862 = vadd.xlane.f32.xlu0 %v2799
        %v2863 = vpop.xlane.xlu0 %2862
        %2864 = vadd.xlane.f32.xlu0 %v2801
        %v2865 = vpop.xlane.xlu0 %2864
        %2866 = vadd.xlane.f32.xlu0 %v2803
        %v2867 = vpop.xlane.xlu0 %2866
        %2868 = vadd.xlane.f32.xlu0 %v2805
        %v2869 = vpop.xlane.xlu0 %2868
        %2870 = vadd.xlane.f32.xlu0 %v2807
        %v2871 = vpop.xlane.xlu0 %2870
        %2872 = vadd.xlane.f32.xlu0 %v2809
        %v2873 = vpop.xlane.xlu0 %2872
        %2874 = vadd.xlane.f32.xlu0 %v2811
        %v2875 = vpop.xlane.xlu0 %2874
        %2876 = vadd.xlane.f32.xlu0 %v2813
        %v2877 = vpop.xlane.xlu0 %2876
        %2878 = vadd.xlane.f32.xlu0 %v2815
        %v2879 = vpop.xlane.xlu0 %2878
        %2880 = vadd.xlane.f32.xlu0 %v2817
        %v2881 = vpop.xlane.xlu0 %2880
        %2882 = vadd.xlane.f32.xlu0 %v2819
        %v2883 = vpop.xlane.xlu0 %2882
        %2884 = vadd.xlane.f32.xlu0 %v2821
        %v2885 = vpop.xlane.xlu0 %2884
        %2886 = vadd.xlane.f32.xlu0 %v2823
        %v2887 = vpop.xlane.xlu0 %2886
        %2888 = vadd.xlane.f32.xlu0 %v2825
        %v2889 = vpop.xlane.xlu0 %2888
        %v2890 = vlog2.pop %v2827
        %v2891 = vmul.f32 %v2890, 0.6931472
        %v2892 = vlog2.pop %v2829
        %v2893 = vmul.f32 %v2892, 0.6931472
        %v2894 = vlog2.pop %v2831
        %v2895 = vmul.f32 %v2894, 0.6931472
        %v2896 = vlog2.pop %v2833
        %v2897 = vmul.f32 %v2896, 0.6931472
        %v2898 = vlog2.pop %v2835
        %v2899 = vmul.f32 %v2898, 0.6931472
        %v2900 = vlog2.pop %v2837
        %v2901 = vmul.f32 %v2900, 0.6931472
        %v2902 = vlog2.pop %v2839
        %v2903 = vmul.f32 %v2902, 0.6931472
        %v2904 = vlog2.pop %v2841
        %v2905 = vmul.f32 %v2904, 0.6931472
        %v2906 = vlog2.pop %v2843
        %v2907 = vmul.f32 %v2906, 0.6931472
        %v2908 = vlog2.pop %v2845
        %v2909 = vmul.f32 %v2908, 0.6931472
        %v2910 = vlog2.pop %v2847
        %v2911 = vmul.f32 %v2910, 0.6931472
        %v2912 = vlog2.pop %v2849
        %v2913 = vmul.f32 %v2912, 0.6931472
        %v2914 = vlog2.pop %v2851
        %v2915 = vmul.f32 %v2914, 0.6931472
        %v2916 = vlog2.pop %v2853
        %v2917 = vmul.f32 %v2916, 0.6931472
        %v2918 = vlog2.pop %v2855
        %v2919 = vmul.f32 %v2918, 0.6931472
        %v2920 = vlog2.pop %v2857
        %v2921 = vmul.f32 %v2920, 0.6931472
        %v2922 = vlog2.pop %v2859
        %v2923 = vmul.f32 %v2922, 0.6931472
        %v2924 = vlog2.pop %v2861
        %v2925 = vmul.f32 %v2924, 0.6931472
        %v2926 = vlog2.pop %v2863
        %v2927 = vmul.f32 %v2926, 0.6931472
        %v2928 = vlog2.pop %v2865
        %v2929 = vmul.f32 %v2928, 0.6931472
        %v2930 = vlog2.pop %v2867
        %v2931 = vmul.f32 %v2930, 0.6931472
        %v2932 = vlog2.pop %v2869
        %v2933 = vmul.f32 %v2932, 0.6931472
        %v2934 = vlog2.pop %v2871
        %v2935 = vmul.f32 %v2934, 0.6931472
        %v2936 = vlog2.pop %v2873
        %v2937 = vmul.f32 %v2936, 0.6931472
        %v2938 = vlog2.pop %v2875
        %v2939 = vmul.f32 %v2938, 0.6931472
        %v2940 = vlog2.pop %v2877
        %v2941 = vmul.f32 %v2940, 0.6931472
        %v2942 = vlog2.pop %v2879
        %v2943 = vmul.f32 %v2942, 0.6931472
        %v2944 = vlog2.pop %v2881
        %v2945 = vmul.f32 %v2944, 0.6931472
        %v2946 = vlog2.pop %v2883
        %v2947 = vmul.f32 %v2946, 0.6931472
        %v2948 = vlog2.pop %v2885
        %v2949 = vmul.f32 %v2948, 0.6931472
        %v2950 = vlog2.pop %v2887
        %v2951 = vmul.f32 %v2950, 0.6931472
        %v2952 = vlog2.pop %v2889
        %v2953 = vmul.f32 %v2952, 0.6931472
        %v2954 = vsub.f32 %v2730, %v2891
        %v2955 = vsub.f32 %v2731, %v2893
        %v2956 = vsub.f32 %v2732, %v2895
        %v2957 = vsub.f32 %v2733, %v2897
        %v2958 = vsub.f32 %v2734, %v2899
        %v2959 = vsub.f32 %v2735, %v2901
        %v2960 = vsub.f32 %v2736, %v2903
        %v2961 = vsub.f32 %v2737, %v2905
        %v2962 = vsub.f32 %v2738, %v2907
        %v2963 = vsub.f32 %v2739, %v2909
        %v2964 = vsub.f32 %v2740, %v2911
        %v2965 = vsub.f32 %v2741, %v2913
        %v2966 = vsub.f32 %v2742, %v2915
        %v2967 = vsub.f32 %v2743, %v2917
        %v2968 = vsub.f32 %v2744, %v2919
        %v2969 = vsub.f32 %v2745, %v2921
        %v2970 = vsub.f32 %v2746, %v2923
        %v2971 = vsub.f32 %v2747, %v2925
        %v2972 = vsub.f32 %v2748, %v2927
        %v2973 = vsub.f32 %v2749, %v2929
        %v2974 = vsub.f32 %v2750, %v2931
        %v2975 = vsub.f32 %v2751, %v2933
        %v2976 = vsub.f32 %v2752, %v2935
        %v2977 = vsub.f32 %v2753, %v2937
        %v2978 = vsub.f32 %v2754, %v2939
        %v2979 = vsub.f32 %v2755, %v2941
        %v2980 = vsub.f32 %v2756, %v2943
        %v2981 = vsub.f32 %v2757, %v2945
        %v2982 = vsub.f32 %v2758, %v2947
        %v2983 = vsub.f32 %v2759, %v2949
        %v2984 = vsub.f32 %v2760, %v2951
        %v2985 = vsub.f32 %v2761, %v2953
        %v2986 = vsel %vm2633, %v2954, 0.0
        %v2987 = vsel %vm2633, %v2955, 0.0
        %v2988 = vsel %vm2633, %v2956, 0.0
        %v2989 = vsel %vm2633, %v2957, 0.0
        %v2990 = vsel %vm2633, %v2958, 0.0
        %v2991 = vsel %vm2633, %v2959, 0.0
        %v2992 = vsel %vm2633, %v2960, 0.0
        %v2993 = vsel %vm2633, %v2961, 0.0
        %v2994 = vsel %vm2633, %v2962, 0.0
        %v2995 = vsel %vm2633, %v2963, 0.0
        %v2996 = vsel %vm2633, %v2964, 0.0
        %v2997 = vsel %vm2633, %v2965, 0.0
        %v2998 = vsel %vm2633, %v2966, 0.0
        %v2999 = vsel %vm2633, %v2967, 0.0
        %v3000 = vsel %vm2633, %v2968, 0.0
        %v3001 = vsel %vm2633, %v2969, 0.0
        %v3002 = vsel %vm2633, %v2970, 0.0
        %v3003 = vsel %vm2633, %v2971, 0.0
        %v3004 = vsel %vm2633, %v2972, 0.0
        %v3005 = vsel %vm2633, %v2973, 0.0
        %v3006 = vsel %vm2633, %v2974, 0.0
        %v3007 = vsel %vm2633, %v2975, 0.0
        %v3008 = vsel %vm2633, %v2976, 0.0
        %v3009 = vsel %vm2633, %v2977, 0.0
        %v3010 = vsel %vm2633, %v2978, 0.0
        %v3011 = vsel %vm2633, %v2979, 0.0
        %v3012 = vsel %vm2633, %v2980, 0.0
        %v3013 = vsel %vm2633, %v2981, 0.0
        %v3014 = vsel %vm2633, %v2982, 0.0
        %v3015 = vsel %vm2633, %v2983, 0.0
        %v3016 = vsel %vm2633, %v2984, 0.0
        %v3017 = vsel %vm2633, %v2985, 0.0
        %3018 = vst [vmem:[%s339] sm:$0xff] %v2986
        %3019 = vst [vmem:[%s339 + $0x8] sm:$0xff] %v2987
        %3020 = vst [vmem:[%s339 + $0x10] sm:$0xff] %v2988
        %3021 = vst [vmem:[%s339 + $0x18] sm:$0xff] %v2989
        %3022 = vst [vmem:[%s339 + $0x20] sm:$0xff] %v2990
        %3023 = vst [vmem:[%s339 + $0x28] sm:$0xff] %v2991
        %3024 = vst [vmem:[%s339 + $0x30] sm:$0xff] %v2992
        %3025 = vst [vmem:[%s339 + $0x38] sm:$0xff] %v2993
        %3026 = vst [vmem:[%s339 + $0x40] sm:$0xff] %v2994
        %3027 = vst [vmem:[%s339 + $0x48] sm:$0xff] %v2995
        %3028 = vst [vmem:[%s339 + $0x50] sm:$0xff] %v2996
        %3029 = vst [vmem:[%s339 + $0x58] sm:$0xff] %v2997
        %3030 = vst [vmem:[%s339 + $0x60] sm:$0xff] %v2998
        %3031 = vst [vmem:[%s339 + $0x68] sm:$0xff] %v2999
        %3032 = vst [vmem:[%s339 + $0x70] sm:$0xff] %v3000
        %3033 = vst [vmem:[%s339 + $0x78] sm:$0xff] %v3001
        %3034 = vst [vmem:[%s339 + $0x80] sm:$0xff] %v3002
        %3035 = vst [vmem:[%s339 + $0x88] sm:$0xff] %v3003
        %3036 = vst [vmem:[%s339 + $0x90] sm:$0xff] %v3004
        %3037 = vst [vmem:[%s339 + $0x98] sm:$0xff] %v3005
        %3038 = vst [vmem:[%s339 + $0xa0] sm:$0xff] %v3006
        %3039 = vst [vmem:[%s339 + $0xa8] sm:$0xff] %v3007
        %3040 = vst [vmem:[%s339 + $0xb0] sm:$0xff] %v3008
        %3041 = vst [vmem:[%s339 + $0xb8] sm:$0xff] %v3009
        %3042 = vst [vmem:[%s339 + $0xc0] sm:$0xff] %v3010
        %3043 = vst [vmem:[%s339 + $0xc8] sm:$0xff] %v3011
        %3044 = vst [vmem:[%s339 + $0xd0] sm:$0xff] %v3012
        %3045 = vst [vmem:[%s339 + $0xd8] sm:$0xff] %v3013
        %3046 = vst [vmem:[%s339 + $0xe0] sm:$0xff] %v3014
        %3047 = vst [vmem:[%s339 + $0xe8] sm:$0xff] %v3015
        %3048 = vst [vmem:[%s339 + $0xf0] sm:$0xff] %v3016
        %3049 = vst [vmem:[%s339 + $0xf8] sm:$0xff] %v3017
        %s3050 = sand.u32 %s222, 1
        %s3051 = sand.u32 %s222, 1
        %s3052 = smul.addr %s3051, 256
        %s3053 = scalar_lea.vmem [#allocation2], %s3052
        // Predicated region
        $region57: #{net_forward.1} parent=55 // pred_check
          %p3054 = pneg %p232
        $region58: #{net_forward.1} parent=55 // pred_check_branch
          %3056 = sbr.rel (%p3054) target = $region60
        $region59: #{net_forward.1} parent=55 // pred_region
          %s3057 = smul.u32 32, %s20
          %s3058 = ssub.s32 63, %s3057
          %p3059 = scmp.lt.s32.totalorder %s3058, 32
          %s3060 = scalar_select %p3059, %s3058, 32
          %s3061 = smul.u32 128, %s3060
          %p3062 = scmp.ne.s32.totalorder 0, %s3061
          %s3063 = smul.addr %s3057, 8
          %s3064 = scalar_lea.vmem %s9, %s3063
          // Predicated region
          $region61: #{net_forward.1} parent=59 // pred_check
            %p3065 = pneg %p3062
          $region62: #{net_forward.1} parent=59 // pred_check_branch
            %3067 = sbr.rel (%p3065) target = $region64
          $region63: #{net_forward.1} parent=59 // pred_region
            // Predicated region
            $region65: #{net_forward.1} parent=63 // pred_check
              _
            $region66: #{net_forward.1} parent=63 // pred_check_branch
              %3069 = sbr.rel (0) target = $region68
            $region67: #{net_forward.1} parent=63 // pred_region
              // Predicated region
              $region87: #{net_forward.1} parent=67 // pred_check
                _
              $region88: #{net_forward.1} parent=67 // pred_check_branch
                %3180 = sbr.rel (0) target = $region90
              $region89: #{net_forward.1} parent=67 // pred_region
                %s3181 = sshrl.u32 %s3060, 5
                // While loop
                $region91: #{net_forward.1} parent=89 // loop_pre_header
                  _
                $region92: #{net_forward.1} parent=89 // loop_header
                  %s3183 = sphi 0, %s3185
                  %p3184 = scmp.ge.s32.totalorder %s3183, %s3181
                  %s3188 = sphi 0, %s3257
                  %s3189 = sphi %s3053, %s3260
                  %s3190 = sphi %s3064, %s3261
                $region93: #{net_forward.1} parent=89 // loop_header_branch
                  %3187 = sbr.rel (%p3184) target = $region97
                $region94: #{net_forward.1} parent=89 // loop_body
                  %v3191 = vld [vmem:[%s3189] sm:$0xff]
                  %3192 = vst [vmem:[%s3190] sm:$0xff] %v3191
                  %v3193 = vld [vmem:[%s3189 + $0x8] sm:$0xff]
                  %3194 = vst [vmem:[%s3190 + $0x8] sm:$0xff] %v3193
                  %v3195 = vld [vmem:[%s3189 + $0x10] sm:$0xff]
                  %3196 = vst [vmem:[%s3190 + $0x10] sm:$0xff] %v3195
                  %v3197 = vld [vmem:[%s3189 + $0x18] sm:$0xff]
                  %3198 = vst [vmem:[%s3190 + $0x18] sm:$0xff] %v3197
                  %v3199 = vld [vmem:[%s3189 + $0x20] sm:$0xff]
                  %3200 = vst [vmem:[%s3190 + $0x20] sm:$0xff] %v3199
                  %v3201 = vld [vmem:[%s3189 + $0x28] sm:$0xff]
                  %3202 = vst [vmem:[%s3190 + $0x28] sm:$0xff] %v3201
                  %v3203 = vld [vmem:[%s3189 + $0x30] sm:$0xff]
                  %3204 = vst [vmem:[%s3190 + $0x30] sm:$0xff] %v3203
                  %v3205 = vld [vmem:[%s3189 + $0x38] sm:$0xff]
                  %3206 = vst [vmem:[%s3190 + $0x38] sm:$0xff] %v3205
                  %v3207 = vld [vmem:[%s3189 + $0x40] sm:$0xff]
                  %3208 = vst [vmem:[%s3190 + $0x40] sm:$0xff] %v3207
                  %v3209 = vld [vmem:[%s3189 + $0x48] sm:$0xff]
                  %3210 = vst [vmem:[%s3190 + $0x48] sm:$0xff] %v3209
                  %v3211 = vld [vmem:[%s3189 + $0x50] sm:$0xff]
                  %3212 = vst [vmem:[%s3190 + $0x50] sm:$0xff] %v3211
                  %v3213 = vld [vmem:[%s3189 + $0x58] sm:$0xff]
                  %3214 = vst [vmem:[%s3190 + $0x58] sm:$0xff] %v3213
                  %v3215 = vld [vmem:[%s3189 + $0x60] sm:$0xff]
                  %3216 = vst [vmem:[%s3190 + $0x60] sm:$0xff] %v3215
                  %v3217 = vld [vmem:[%s3189 + $0x68] sm:$0xff]
                  %3218 = vst [vmem:[%s3190 + $0x68] sm:$0xff] %v3217
                  %v3219 = vld [vmem:[%s3189 + $0x70] sm:$0xff]
                  %3220 = vst [vmem:[%s3190 + $0x70] sm:$0xff] %v3219
                  %v3221 = vld [vmem:[%s3189 + $0x78] sm:$0xff]
                  %3222 = vst [vmem:[%s3190 + $0x78] sm:$0xff] %v3221
                  %v3223 = vld [vmem:[%s3189 + $0x80] sm:$0xff]
                  %3224 = vst [vmem:[%s3190 + $0x80] sm:$0xff] %v3223
                  %v3225 = vld [vmem:[%s3189 + $0x88] sm:$0xff]
                  %3226 = vst [vmem:[%s3190 + $0x88] sm:$0xff] %v3225
                  %v3227 = vld [vmem:[%s3189 + $0x90] sm:$0xff]
                  %3228 = vst [vmem:[%s3190 + $0x90] sm:$0xff] %v3227
                  %v3229 = vld [vmem:[%s3189 + $0x98] sm:$0xff]
                  %3230 = vst [vmem:[%s3190 + $0x98] sm:$0xff] %v3229
                  %v3231 = vld [vmem:[%s3189 + $0xa0] sm:$0xff]
                  %3232 = vst [vmem:[%s3190 + $0xa0] sm:$0xff] %v3231
                  %v3233 = vld [vmem:[%s3189 + $0xa8] sm:$0xff]
                  %3234 = vst [vmem:[%s3190 + $0xa8] sm:$0xff] %v3233
                  %v3235 = vld [vmem:[%s3189 + $0xb0] sm:$0xff]
                  %3236 = vst [vmem:[%s3190 + $0xb0] sm:$0xff] %v3235
                  %v3237 = vld [vmem:[%s3189 + $0xb8] sm:$0xff]
                  %3238 = vst [vmem:[%s3190 + $0xb8] sm:$0xff] %v3237
                  %v3239 = vld [vmem:[%s3189 + $0xc0] sm:$0xff]
                  %3240 = vst [vmem:[%s3190 + $0xc0] sm:$0xff] %v3239
                  %v3241 = vld [vmem:[%s3189 + $0xc8] sm:$0xff]
                  %3242 = vst [vmem:[%s3190 + $0xc8] sm:$0xff] %v3241
                  %v3243 = vld [vmem:[%s3189 + $0xd0] sm:$0xff]
                  %3244 = vst [vmem:[%s3190 + $0xd0] sm:$0xff] %v3243
                  %v3245 = vld [vmem:[%s3189 + $0xd8] sm:$0xff]
                  %3246 = vst [vmem:[%s3190 + $0xd8] sm:$0xff] %v3245
                  %v3247 = vld [vmem:[%s3189 + $0xe0] sm:$0xff]
                  %3248 = vst [vmem:[%s3190 + $0xe0] sm:$0xff] %v3247
                  %v3249 = vld [vmem:[%s3189 + $0xe8] sm:$0xff]
                  %3250 = vst [vmem:[%s3190 + $0xe8] sm:$0xff] %v3249
                  %v3251 = vld [vmem:[%s3189 + $0xf0] sm:$0xff]
                  %3252 = vst [vmem:[%s3190 + $0xf0] sm:$0xff] %v3251
                  %v3253 = vld [vmem:[%s3189 + $0xf8] sm:$0xff]
                  %3254 = vst [vmem:[%s3190 + $0xf8] sm:$0xff] %v3253
                  %s3255 = sadd.s32 1, %s3188
                  %p3256 = scmp.ge.s32.totalorder %s3255, %s3181
                  %s3257 = scalar_select %p3256, 0, %s3255
                  %s3258 = smul.u32 %s3257, 256
                  %s3259 = smul.u32 %s3257, 256
                  %s3260 = scalar_lea.vmem %s3053, %s3258 [#allocation2]
                  %s3261 = scalar_lea.vmem %s3064, %s3259
                $region95: #{net_forward.1} parent=89 // loop_footer
                  %s3185 = sadd.s32 %s3183, 1
                $region96: #{net_forward.1} parent=89 // loop_footer_branch
                  %3182 = sbr.rel target = $region92
                $region97: #{net_forward.1} parent=89 // loop_exit
                  _
                %s3262 = sshrl.u32 %s3060, 5
                %s3263 = sand.u32 %s3060, 31
                %s3264 = smul.u32 %s3262, 32
                %s3265 = smul.u32 8, %s3264
                %s3266 = scalar_lea.vmem %s3053, %s3265 [#allocation2]
                %s3267 = smul.u32 8, %s3264
                %s3268 = scalar_lea.vmem %s3064, %s3267
                // While loop
                $region98: #{net_forward.1} parent=89 // loop_pre_header
                  _
                $region99: #{net_forward.1} parent=89 // loop_header
                  %s3270 = sphi 0, %s3272
                  %p3271 = scmp.ge.s32.totalorder %s3270, %s3263
                  %s3275 = sphi 0, %s3282
                  %s3276 = sphi %s3266, %s3285
                  %s3277 = sphi %s3268, %s3286
                $region100: #{net_forward.1} parent=89 // loop_header_branch
                  %3274 = sbr.rel (%p3271) target = $region104
                $region101: #{net_forward.1} parent=89 // loop_body
                  %v3278 = vld [vmem:[%s3276] sm:$0xff]
                  %3279 = vst [vmem:[%s3277] sm:$0xff] %v3278
                  %s3280 = sadd.s32 1, %s3275
                  %p3281 = scmp.ge.s32.totalorder %s3280, %s3263
                  %s3282 = scalar_select %p3281, 0, %s3280
                  %s3283 = smul.u32 %s3282, 8
                  %s3284 = smul.u32 %s3282, 8
                  %s3285 = scalar_lea.vmem %s3266, %s3283 [#allocation2]
                  %s3286 = scalar_lea.vmem %s3268, %s3284
                $region102: #{net_forward.1} parent=89 // loop_footer
                  %s3272 = sadd.s32 %s3270, 1
                $region103: #{net_forward.1} parent=89 // loop_footer_branch
                  %3269 = sbr.rel target = $region99
                $region104: #{net_forward.1} parent=89 // loop_exit
                  _
              $region90: #{net_forward.1} parent=67 // pred_fallthru
                _
              // Predicated region
              $region105: #{net_forward.1} parent=67 // pred_check
                _
              $region106: #{net_forward.1} parent=67 // pred_check_branch
                %3288 = sbr.rel target = $region108
              $region107: #{net_forward.1} parent=67 // pred_region
                _
              $region108: #{net_forward.1} parent=67 // pred_fallthru
                _
            $region68: #{net_forward.1} parent=63 // pred_fallthru
              _
            // Predicated region
            $region69: #{net_forward.1} parent=63 // pred_check
              _
            $region70: #{net_forward.1} parent=63 // pred_check_branch
              %3071 = sbr.rel target = $region72
            $region71: #{net_forward.1} parent=63 // pred_region
              %s3073 = sshrl.u32 %s3060, 5
              // While loop
              $region73: #{net_forward.1} parent=71 // loop_pre_header
                _
              $region74: #{net_forward.1} parent=71 // loop_header
                %s3075 = sphi 0, %s3077
                %p3076 = scmp.ge.s32.totalorder %s3075, %s3073
                %s3080 = sphi 0, %s3149
                %s3081 = sphi %s3053, %s3152
                %s3082 = sphi %s3064, %s3153
              $region75: #{net_forward.1} parent=71 // loop_header_branch
                %3079 = sbr.rel (%p3076) target = $region79
              $region76: #{net_forward.1} parent=71 // loop_body
                %v3083 = vld [vmem:[%s3081] sm:$0xff]
                %3084 = vst [vmem:[%s3082] sm:$0xff] %v3083
                %v3085 = vld [vmem:[%s3081 + $0x8] sm:$0xff]
                %3086 = vst [vmem:[%s3082 + $0x8] sm:$0xff] %v3085
                %v3087 = vld [vmem:[%s3081 + $0x10] sm:$0xff]
                %3088 = vst [vmem:[%s3082 + $0x10] sm:$0xff] %v3087
                %v3089 = vld [vmem:[%s3081 + $0x18] sm:$0xff]
                %3090 = vst [vmem:[%s3082 + $0x18] sm:$0xff] %v3089
                %v3091 = vld [vmem:[%s3081 + $0x20] sm:$0xff]
                %3092 = vst [vmem:[%s3082 + $0x20] sm:$0xff] %v3091
                %v3093 = vld [vmem:[%s3081 + $0x28] sm:$0xff]
                %3094 = vst [vmem:[%s3082 + $0x28] sm:$0xff] %v3093
                %v3095 = vld [vmem:[%s3081 + $0x30] sm:$0xff]
                %3096 = vst [vmem:[%s3082 + $0x30] sm:$0xff] %v3095
                %v3097 = vld [vmem:[%s3081 + $0x38] sm:$0xff]
                %3098 = vst [vmem:[%s3082 + $0x38] sm:$0xff] %v3097
                %v3099 = vld [vmem:[%s3081 + $0x40] sm:$0xff]
                %3100 = vst [vmem:[%s3082 + $0x40] sm:$0xff] %v3099
                %v3101 = vld [vmem:[%s3081 + $0x48] sm:$0xff]
                %3102 = vst [vmem:[%s3082 + $0x48] sm:$0xff] %v3101
                %v3103 = vld [vmem:[%s3081 + $0x50] sm:$0xff]
                %3104 = vst [vmem:[%s3082 + $0x50] sm:$0xff] %v3103
                %v3105 = vld [vmem:[%s3081 + $0x58] sm:$0xff]
                %3106 = vst [vmem:[%s3082 + $0x58] sm:$0xff] %v3105
                %v3107 = vld [vmem:[%s3081 + $0x60] sm:$0xff]
                %3108 = vst [vmem:[%s3082 + $0x60] sm:$0xff] %v3107
                %v3109 = vld [vmem:[%s3081 + $0x68] sm:$0xff]
                %3110 = vst [vmem:[%s3082 + $0x68] sm:$0xff] %v3109
                %v3111 = vld [vmem:[%s3081 + $0x70] sm:$0xff]
                %3112 = vst [vmem:[%s3082 + $0x70] sm:$0xff] %v3111
                %v3113 = vld [vmem:[%s3081 + $0x78] sm:$0xff]
                %3114 = vst [vmem:[%s3082 + $0x78] sm:$0xff] %v3113
                %v3115 = vld [vmem:[%s3081 + $0x80] sm:$0xff]
                %3116 = vst [vmem:[%s3082 + $0x80] sm:$0xff] %v3115
                %v3117 = vld [vmem:[%s3081 + $0x88] sm:$0xff]
                %3118 = vst [vmem:[%s3082 + $0x88] sm:$0xff] %v3117
                %v3119 = vld [vmem:[%s3081 + $0x90] sm:$0xff]
                %3120 = vst [vmem:[%s3082 + $0x90] sm:$0xff] %v3119
                %v3121 = vld [vmem:[%s3081 + $0x98] sm:$0xff]
                %3122 = vst [vmem:[%s3082 + $0x98] sm:$0xff] %v3121
                %v3123 = vld [vmem:[%s3081 + $0xa0] sm:$0xff]
                %3124 = vst [vmem:[%s3082 + $0xa0] sm:$0xff] %v3123
                %v3125 = vld [vmem:[%s3081 + $0xa8] sm:$0xff]
                %3126 = vst [vmem:[%s3082 + $0xa8] sm:$0xff] %v3125
                %v3127 = vld [vmem:[%s3081 + $0xb0] sm:$0xff]
                %3128 = vst [vmem:[%s3082 + $0xb0] sm:$0xff] %v3127
                %v3129 = vld [vmem:[%s3081 + $0xb8] sm:$0xff]
                %3130 = vst [vmem:[%s3082 + $0xb8] sm:$0xff] %v3129
                %v3131 = vld [vmem:[%s3081 + $0xc0] sm:$0xff]
                %3132 = vst [vmem:[%s3082 + $0xc0] sm:$0xff] %v3131
                %v3133 = vld [vmem:[%s3081 + $0xc8] sm:$0xff]
                %3134 = vst [vmem:[%s3082 + $0xc8] sm:$0xff] %v3133
                %v3135 = vld [vmem:[%s3081 + $0xd0] sm:$0xff]
                %3136 = vst [vmem:[%s3082 + $0xd0] sm:$0xff] %v3135
                %v3137 = vld [vmem:[%s3081 + $0xd8] sm:$0xff]
                %3138 = vst [vmem:[%s3082 + $0xd8] sm:$0xff] %v3137
                %v3139 = vld [vmem:[%s3081 + $0xe0] sm:$0xff]
                %3140 = vst [vmem:[%s3082 + $0xe0] sm:$0xff] %v3139
                %v3141 = vld [vmem:[%s3081 + $0xe8] sm:$0xff]
                %3142 = vst [vmem:[%s3082 + $0xe8] sm:$0xff] %v3141
                %v3143 = vld [vmem:[%s3081 + $0xf0] sm:$0xff]
                %3144 = vst [vmem:[%s3082 + $0xf0] sm:$0xff] %v3143
                %v3145 = vld [vmem:[%s3081 + $0xf8] sm:$0xff]
                %3146 = vst [vmem:[%s3082 + $0xf8] sm:$0xff] %v3145
                %s3147 = sadd.s32 1, %s3080
                %p3148 = scmp.ge.s32.totalorder %s3147, %s3073
                %s3149 = scalar_select %p3148, 0, %s3147
                %s3150 = smul.u32 %s3149, 256
                %s3151 = smul.u32 %s3149, 256
                %s3152 = scalar_lea.vmem %s3053, %s3150 [#allocation2]
                %s3153 = scalar_lea.vmem %s3064, %s3151
              $region77: #{net_forward.1} parent=71 // loop_footer
                %s3077 = sadd.s32 %s3075, 1
              $region78: #{net_forward.1} parent=71 // loop_footer_branch
                %3074 = sbr.rel target = $region74
              $region79: #{net_forward.1} parent=71 // loop_exit
                _
              %s3154 = sshrl.u32 %s3060, 5
              %s3155 = sand.u32 %s3060, 31
              %s3156 = smul.u32 %s3154, 32
              %s3157 = smul.u32 8, %s3156
              %s3158 = scalar_lea.vmem %s3053, %s3157 [#allocation2]
              %s3159 = smul.u32 8, %s3156
              %s3160 = scalar_lea.vmem %s3064, %s3159
              // While loop
              $region80: #{net_forward.1} parent=71 // loop_pre_header
                _
              $region81: #{net_forward.1} parent=71 // loop_header
                %s3162 = sphi 0, %s3164
                %p3163 = scmp.ge.s32.totalorder %s3162, %s3155
                %s3167 = sphi 0, %s3174
                %s3168 = sphi %s3158, %s3177
                %s3169 = sphi %s3160, %s3178
              $region82: #{net_forward.1} parent=71 // loop_header_branch
                %3166 = sbr.rel (%p3163) target = $region86
              $region83: #{net_forward.1} parent=71 // loop_body
                %v3170 = vld [vmem:[%s3168] sm:$0xff]
                %3171 = vst [vmem:[%s3169] sm:$0xff] %v3170
                %s3172 = sadd.s32 1, %s3167
                %p3173 = scmp.ge.s32.totalorder %s3172, %s3155
                %s3174 = scalar_select %p3173, 0, %s3172
                %s3175 = smul.u32 %s3174, 8
                %s3176 = smul.u32 %s3174, 8
                %s3177 = scalar_lea.vmem %s3158, %s3175 [#allocation2]
                %s3178 = scalar_lea.vmem %s3160, %s3176
              $region84: #{net_forward.1} parent=71 // loop_footer
                %s3164 = sadd.s32 %s3162, 1
              $region85: #{net_forward.1} parent=71 // loop_footer_branch
                %3161 = sbr.rel target = $region81
              $region86: #{net_forward.1} parent=71 // loop_exit
                _
            $region72: #{net_forward.1} parent=63 // pred_fallthru
              _
          $region64: #{net_forward.1} parent=59 // pred_fallthru
            _
          %3289 = vnop
        $region60: #{net_forward.1} parent=55 // pred_fallthru
          _
      $region56: #{net_forward.1} parent=5 // pred_fallthru
        _
      %p3290 = scmp.le.s32.totalorder 2, %s15
      // Predicated region
      $region109: #{net_forward.1} parent=5 // pred_check
        %p3291 = pneg %p3290
      $region110: #{net_forward.1} parent=5 // pred_check_branch
        %3293 = sbr.rel (%p3291) target = $region112
      $region111: #{net_forward.1} parent=5 // pred_region
        %s3294 = ssub.s32 %s15, 2
        // Predicated region
        $region113: #{net_forward.1} parent=111 // pred_check
          %p3295 = pneg %p238
        $region114: #{net_forward.1} parent=111 // pred_check_branch
          %3297 = sbr.rel (%p3295) target = $region116
        $region115: #{net_forward.1} parent=111 // pred_region
          %s3298 = sand.u32 %s223, 1
          %s3299 = sand.u32 %s223, 1
          %s3300 = smul.addr %s3299, 256
          %s3301 = scalar_lea.vmem [#allocation2], %s3300
        $region116: #{net_forward.1} parent=111 // pred_fallthru
          _
      $region112: #{net_forward.1} parent=5 // pred_fallthru
        _
    $region6: #{net_forward.1} parent=1 // loop_footer
      %s19 = sadd.s32 1, %s15
    $region7: #{net_forward.1} parent=1 // loop_footer_branch
      %14 = sbr.rel target = $region3
    $region8: #{net_forward.1} parent=1 // loop_exit
      _

</llo_original>
